<compile_context>
chip_gen: v7x
topology: tpu7x:2x2x1
jax: 0.10.0
libtpu: 0.0.40
codegen_flags: <defaults>
</compile_context>

<pallas_src>
import functools

import jax
import jax.numpy as jnp
from jax.experimental import pallas as pl
from jax.experimental.pallas import tpu as pltpu

LAMBDA_GLOBAL = 0.5


# ---------------------------------------------------------------------------
# Kernels
# ---------------------------------------------------------------------------
def drugncf_kernel_split(sizes, x_ref,
                         w_big_ref, b_big_ref,                    # [w_w1 | w_lr | w_cf]
                         w_w2_ref, b_w2_ref,                      # mlp_wide L2
                         w_c1_ref, b_c1_ref, w_c2_ref, b_c2_ref,  # mlp_cf
                         w_out_ref,                               # linear_out (bias folded)
                         out_ref):
    """Unfused stage-2/3 matmuls -- best for 128x128-MXU parts (v2..v5e)."""
    Dw, N, K = sizes
    x = x_ref[...]                                               # (TB, F) f32

    # one fused matmul for all three x-sourced linears
    y = (jnp.dot(x, w_big_ref[...], preferred_element_type=jnp.float32)
         + b_big_ref[...])                                       # (TB, Dw + N + 2K)
    h_pre   = y[:, :Dw]                                          # mlp_wide L1 pre-act
    wide_lr = y[:, Dw:Dw + N]                                    # FeaturesLinear (+ b_out folded)
    x_emb   = y[:, Dw + N:Dw + N + 2 * K]                        # cf_embedding
    i_emb   = y[:, Dw + N + K:Dw + N + 2 * K]                    # item half

    # wide part: MLP(F -> Dw -> K) + Sigmoid
    h = jnp.maximum(h_pre, 0.0)
    wide = jax.nn.sigmoid(
        jnp.dot(h, w_w2_ref[...], preferred_element_type=jnp.float32) + b_w2_ref[...])

    # NCF part: Linear(2K->Dc) -> ReLU -> Linear(Dc->N) -> Sigmoid
    hc = jnp.maximum(
        jnp.dot(x_emb, w_c1_ref[...], preferred_element_type=jnp.float32) + b_c1_ref[...],
        0.0)
    ncf = jax.nn.sigmoid(
        jnp.dot(hc, w_c2_ref[...], preferred_element_type=jnp.float32) + b_c2_ref[...])

    # combine: wp = sigmoid(wide * i_emb) @ W_out + (wide_lr incl. b_lr + b_out)
    wp = jax.nn.sigmoid(wide * i_emb)
    wp = jnp.dot(wp, w_out_ref[...], preferred_element_type=jnp.float32) + wide_lr
    out = LAMBDA_GLOBAL * wp + (1.0 - LAMBDA_GLOBAL) * ncf
    out_ref[...] = jax.nn.sigmoid(out)


def drugncf_kernel_fused(sizes, x_ref,
                         w_big_ref, b_big_ref,                    # [w_w1 | w_lr | w_cf]
                         w_s2_ref, b_s2_ref,                      # blkdiag(w_w2, w_c1)
                         w_s3_ref, b_s3_ref,                      # blkdiag(w_c2, w_out)
                         out_ref):
    """Block-diagonal fused stage-2/3 matmuls -- fills 256x256 MXUs (v6e/v7x)."""
    Dw, N, K, Dc = sizes
    x = x_ref[...]

    y = (jnp.dot(x, w_big_ref[...], preferred_element_type=jnp.float32)
         + b_big_ref[...])                                       # (TB, Dw + N + 2K)
    h_pre   = y[:, :Dw]
    wide_lr = y[:, Dw:Dw + N]
    x_emb   = y[:, Dw + N:Dw + N + 2 * K]
    i_emb   = y[:, Dw + N + K:Dw + N + 2 * K]

    # stage 2: one (Dw+2K)-contraction, (K+Dc)-wide matmul
    lhs2 = jnp.concatenate([jnp.maximum(h_pre, 0.0), x_emb], axis=1)   # (TB, Dw+2K)
    y2 = (jnp.dot(lhs2, w_s2_ref[...], preferred_element_type=jnp.float32)
          + b_s2_ref[...])                                             # (TB, K+Dc)
    wide = jax.nn.sigmoid(y2[:, :K])
    hc = jnp.maximum(y2[:, K:K + Dc], 0.0)

    # stage 3: one (Dc+K)-contraction, 2N-wide matmul
    lhs3 = jnp.concatenate([hc, jax.nn.sigmoid(wide * i_emb)], axis=1)  # (TB, Dc+K)
    y3 = (jnp.dot(lhs3, w_s3_ref[...], preferred_element_type=jnp.float32)
          + b_s3_ref[...])                                              # (TB, 2N)
    ncf = jax.nn.sigmoid(y3[:, :N])
    wp = y3[:, N:2 * N] + wide_lr
    out = LAMBDA_GLOBAL * wp + (1.0 - LAMBDA_GLOBAL) * ncf
    out_ref[...] = jax.nn.sigmoid(out)


# ---------------------------------------------------------------------------
# Host-side helpers
# ---------------------------------------------------------------------------
_BUFFERED = getattr(pl, "Buffered", None)


def _const_spec(shape):
    """Grid-invariant (resident) operand: single-buffer it when supported."""
    nd = len(shape)
    idx = lambda i: (0,) * nd
    if _BUFFERED is not None:
        try:
            return pl.BlockSpec(shape, idx, pipeline_mode=_BUFFERED(1))
        except TypeError:            # older jax without pipeline_mode kwarg
            pass
    return pl.BlockSpec(shape, idx)


def _pick_tile_b(B):
    """Single grid step for small batches; 256-row tiles for production batches."""
    Bp8 = -(-B // 8) * 8
    if Bp8 <= 512:
        return Bp8                   # grid=(1,): no per-step overhead, weights DMA'd once
    return 256                       # many steps: weight fetch amortized, >=2 steps/core on v7x


def _vmem_cap_bytes():
    """Generation-safe ceiling: never request more than ~70% of physical VMEM."""
    try:
        return int(0.7 * pltpu.get_tpu_info().vmem_capacity_bytes)
    except Exception:
        return 44 * 1024 * 1024      # safe on 64 MiB (v7x) and 128 MiB (v5e/v6e) parts


def _use_wide_mxu_fusion():
    """True on 256x256-MXU generations (v6e/v7x); False on 128x128 parts."""
    try:
        kind = jax.devices()[0].device_kind.lower()
    except Exception:
        return False
    for tag in ("v2", "v3", "v4", "v5"):     # 128x128-MXU generations
        if tag in kind:
            return False
    return True


def drugncf_forward(x, params, *, embed_k, num_items, tile_b=None, fuse_mxu=None):
    """Runs the fused DrugNCF forward. Returns flattened (B*num_items,) vector."""
    B, F = x.shape
    Dw = params["w_w1"].shape[1]
    Dc = params["w_c1"].shape[1]
    N = num_items
    K = embed_k

    if tile_b is None:
        tile_b = _pick_tile_b(B)
    tile_b = max(8, (int(tile_b) // 8) * 8)
    Bp = -(-B // tile_b) * tile_b
    if Bp != B:
        x = jnp.pad(x, ((0, Bp - B), (0, 0)))

    # Host-side fusion of the three x-sourced matmuls into one wide weight.
    # b_out is folded into the FeaturesLinear bias (wide_lr is added to the
    # linear_out output anyway), so the kernel never touches b_out.
    w_big = jnp.concatenate([params["w_w1"], params["w_lr"], params["w_cf"]], axis=1)
    b_big = jnp.concatenate(
        [params["b_w1"], params["b_lr"] + params["b_out"], params["b_cf"]], axis=1)
    Wbig = Dw + N + 2 * K

    if fuse_mxu is None:
        fuse_mxu = _use_wide_mxu_fusion()
    # Fused path needs 128-lane-aligned slice boundaries inside the kernel.
    fuse_mxu = bool(fuse_mxu) and all(d % 128 == 0 for d in (Dw, K, Dc, N))

    f32 = jnp.float32
    if fuse_mxu:
        # stage 2: block-diag([w_w2, w_c1]) : (Dw + 2K, K + Dc)
        w_s2 = jnp.zeros((Dw + 2 * K, K + Dc), f32)
        w_s2 = w_s2.at[:Dw, :K].set(params["w_w2"])
        w_s2 = w_s2.at[Dw:, K:].set(params["w_c1"])
        b_s2 = jnp.concatenate([params["b_w2"], params["b_c1"]], axis=1)
        # stage 3: block-diag([w_c2, w_out]) : (Dc + K, 2N).  b_out already folded.
        w_s3 = jnp.zeros((Dc + K, 2 * N), f32)
        w_s3 = w_s3.at[:Dc, :N].set(params["w_c2"])
        w_s3 = w_s3.at[Dc:, N:].set(params["w_out"])
        b_s3 = jnp.concatenate([params["b_c2"], jnp.zeros((1, N), f32)], axis=1)

        operands = (x, w_big, b_big, w_s2, b_s2, w_s3, b_s3)
        const_shapes = [(F, Wbig), (1, Wbig),
                        (Dw + 2 * K, K + Dc), (1, K + Dc),
                        (Dc + K, 2 * N), (1, 2 * N)]
        kernel = functools.partial(drugncf_kernel_fused, (Dw, N, K, Dc))
    else:
        operands = (x, w_big, b_big,
                    params["w_w2"], params["b_w2"],
                    params["w_c1"], params["b_c1"],
                    params["w_c2"], params["b_c2"],
                    params["w_out"])
        const_shapes = [(F, Wbig), (1, Wbig),
                        (Dw, K), (1, K),
                        (2 * K, Dc), (1, Dc),
                        (Dc, N), (1, N),
                        (K, N)]
        kernel = functools.partial(drugncf_kernel_split, (Dw, N, K))

    in_specs = [pl.BlockSpec((tile_b, F), lambda i: (i, 0))]
    in_specs += [_const_spec(s) for s in const_shapes]
    out_spec = pl.BlockSpec((tile_b, N), lambda i: (i, 0))

    # Rough f32 VMEM estimate: resident weights (single-buffered) +
    # double-buffered streamed tiles + live intermediates.
    weight_elems = sum(a * b for a, b in const_shapes)
    est = 4 * (weight_elems
               + 2 * tile_b * (F + N)
               + tile_b * (Wbig + 2 * (K + Dc) + 3 * N))
    vmem_limit = int(min(2 * est, _vmem_cap_bytes())) if est > (12 << 20) else None

    out2d = pl.pallas_call(
        kernel,
        out_shape=jax.ShapeDtypeStruct((Bp, N), jnp.float32),
        grid=(Bp // tile_b,),
        in_specs=in_specs,
        out_specs=out_spec,
        compiler_params=pltpu.CompilerParams(
            dimension_semantics=("parallel",),
            vmem_limit_bytes=vmem_limit),
    )(*operands)
    return out2d[:B].reshape(-1)


# ---------------------------------------------------------------------------
# Plain-JAX reference (unfused weights) + param init
# ---------------------------------------------------------------------------
def drugncf_reference(x, params, *, embed_k):
    h = jnp.maximum(x @ params["w_w1"] + params["b_w1"], 0.0)
    wide = jax.nn.sigmoid(h @ params["w_w2"] + params["b_w2"])
    wide_lr = x @ params["w_lr"] + params["b_lr"]
    x_emb = x @ params["w_cf"] + params["b_cf"]
    i_emb = x_emb[:, embed_k:]
    hc = jnp.maximum(x_emb @ params["w_c1"] + params["b_c1"], 0.0)
    ncf = jax.nn.sigmoid(hc @ params["w_c2"] + params["b_c2"])
    wp = jax.nn.sigmoid(wide * i_emb) @ params["w_out"] + params["b_out"]
    wp = wp + wide_lr
    out = LAMBDA_GLOBAL * wp + (1.0 - LAMBDA_GLOBAL) * ncf
    return jax.nn.sigmoid(out).reshape(-1)


def init_params(key, *, field_dims, embed_k, mlp_dims_wide, mlp_dims_cf, num_items):
    F = sum(field_dims)
    K = embed_k
    N = num_items
    Dw = mlp_dims_wide[0]
    Dc = mlp_dims_cf[0]
    shapes = {
        "w_w1": (F, Dw),    "b_w1": (1, Dw),
        "w_w2": (Dw, K),    "b_w2": (1, K),
        "w_lr": (F, N),     "b_lr": (1, N),
        "w_cf": (F, 2 * K), "b_cf": (1, 2 * K),
        "w_c1": (2 * K, Dc), "b_c1": (1, Dc),
        "w_c2": (Dc, N),    "b_c2": (1, N),
        "w_out": (K, N),    "b_out": (1, N),
    }
    params = {}
    keys = jax.random.split(key, len(shapes))
    for k_rng, (name, shp) in zip(keys, sorted(shapes.items())):
        fan_in = shp[0] if name.startswith("w") else shp[1]
        scale = 1.0 / jnp.sqrt(jnp.float32(fan_in))
        params[name] = (scale * jax.random.normal(k_rng, shp)).astype(jnp.float32)
    return params


if __name__ == "__main__":
    # Lane-aligned sizes consistent with the module's constructor.
    field_dims = (128, 128)      # sum(field_dims) = 256 drug-feature dim
    embed_k = 128                # embed_dim
    mlp_dims_wide = (128,)
    mlp_dims_cf = (128,)         # num_layers_cf > 0 -> NCF branch of forward()
    num_items = 256              # nADR
    batch = 256                  # number of drugs; single grid step at this size

    key = jax.random.PRNGKey(0)
    k_x, k_p = jax.random.split(key)
    # Binary drug feature vectors (multi-hot), cast to float as in NCF().
    x = (jax.random.uniform(k_x, (batch, sum(field_dims))) < 0.2).astype(jnp.float32)
    params = init_params(k_p, field_dims=field_dims, embed_k=embed_k,
                         mlp_dims_wide=mlp_dims_wide, mlp_dims_cf=mlp_dims_cf,
                         num_items=num_items)

    out = drugncf_forward(x, params, embed_k=embed_k, num_items=num_items)
    out = jax.block_until_ready(out)

    ref = drugncf_reference(x, params, embed_k=embed_k)
    assert out.shape == (batch * num_items,)
    assert jnp.allclose(out, ref, atol=1e-5, rtol=1e-5), "mismatch vs JAX reference"
    print("KERNEL_OK")
</pallas_src>

<mosaic_0001>
module attributes {stable_mosaic.version = 11 : i64} {
  func.func @drugncf_kernel_fused(%arg0: i32, %arg1: memref<256x256xf32, #tpu.memory_space<vmem>>, %arg2: memref<256x640xf32, #tpu.memory_space<vmem>>, %arg3: memref<1x640xf32, #tpu.memory_space<vmem>>, %arg4: memref<384x256xf32, #tpu.memory_space<vmem>>, %arg5: memref<1x256xf32, #tpu.memory_space<vmem>>, %arg6: memref<256x512xf32, #tpu.memory_space<vmem>>, %arg7: memref<1x512xf32, #tpu.memory_space<vmem>>, %arg8: memref<256x256xf32, #tpu.memory_space<vmem>>) attributes {dimension_semantics = [#tpu.dimension_semantics<parallel>], iteration_bounds = array<i64: 1>, scalar_prefetch = 0 : i64, scratch_operands = 0 : i64, tpu.core_type = #tpu.core_type<tc>, window_params = [{transform_indices = @transform_0, window_bounds = array<i64: 256, 256>}, {pipeline_mode = #tpu.pipeline_mode<synchronous>, transform_indices = @transform_1, window_bounds = array<i64: 256, 640>}, {pipeline_mode = #tpu.pipeline_mode<synchronous>, transform_indices = @transform_2, window_bounds = array<i64: 1, 640>}, {pipeline_mode = #tpu.pipeline_mode<synchronous>, transform_indices = @transform_3, window_bounds = array<i64: 384, 256>}, {pipeline_mode = #tpu.pipeline_mode<synchronous>, transform_indices = @transform_4, window_bounds = array<i64: 1, 256>}, {pipeline_mode = #tpu.pipeline_mode<synchronous>, transform_indices = @transform_5, window_bounds = array<i64: 256, 512>}, {pipeline_mode = #tpu.pipeline_mode<synchronous>, transform_indices = @transform_6, window_bounds = array<i64: 1, 512>}, {transform_indices = @transform_7, window_bounds = array<i64: 256, 256>}]} {
    %c0 = arith.constant 0 : index
    %c0_0 = arith.constant 0 : index
    %0 = vector.load %arg1[%c0, %c0_0] : memref<256x256xf32, #tpu.memory_space<vmem>>, vector<256x256xf32>
    %c0_1 = arith.constant 0 : index
    %c0_2 = arith.constant 0 : index
    %1 = vector.load %arg2[%c0_1, %c0_2] : memref<256x640xf32, #tpu.memory_space<vmem>>, vector<256x640xf32>
    %cst = arith.constant dense<0.000000e+00> : vector<256x640xf32>
    %2 = tpu.matmul %0, %1, %cst {dimension_numbers = #tpu.dot_dimension_numbers<[1], [0], [0], [1], [0, 0, 1, 1], [], []>} : vector<256x256xf32>, vector<256x640xf32>, vector<256x640xf32> -> vector<256x640xf32>
    %c0_3 = arith.constant 0 : index
    %c0_4 = arith.constant 0 : index
    %3 = vector.load %arg3[%c0_3, %c0_4] : memref<1x640xf32, #tpu.memory_space<vmem>>, vector<1x640xf32>
    %4 = vector.broadcast %3 : vector<1x640xf32> to vector<256x640xf32>
    %5 = arith.addf %2, %4 : vector<256x640xf32>
    %6 = vector.extract_strided_slice %5 {offsets = [0, 0], sizes = [256, 128], strides = [1, 1]} : vector<256x640xf32> to vector<256x128xf32>
    %7 = vector.extract_strided_slice %5 {offsets = [0, 128], sizes = [256, 256], strides = [1, 1]} : vector<256x640xf32> to vector<256x256xf32>
    %8 = vector.extract_strided_slice %5 {offsets = [0, 384], sizes = [256, 256], strides = [1, 1]} : vector<256x640xf32> to vector<256x256xf32>
    %9 = vector.extract_strided_slice %5 {offsets = [0, 512], sizes = [256, 128], strides = [1, 1]} : vector<256x640xf32> to vector<256x128xf32>
    %cst_5 = arith.constant 0.000000e+00 : f32
    %10 = vector.broadcast %cst_5 : f32 to vector<256x128xf32>
    %11 = arith.maximumf %6, %10 : vector<256x128xf32>
    %12 = tpu.concatenate %11, %8 in 1 : vector<256x128xf32>, vector<256x256xf32> -> vector<256x384xf32>
    %c0_6 = arith.constant 0 : index
    %c0_7 = arith.constant 0 : index
    %13 = vector.load %arg4[%c0_6, %c0_7] : memref<384x256xf32, #tpu.memory_space<vmem>>, vector<384x256xf32>
    %cst_8 = arith.constant dense<0.000000e+00> : vector<256x256xf32>
    %14 = tpu.matmul %12, %13, %cst_8 {dimension_numbers = #tpu.dot_dimension_numbers<[1], [0], [0], [1], [0, 0, 1, 1], [], []>} : vector<256x384xf32>, vector<384x256xf32>, vector<256x256xf32> -> vector<256x256xf32>
    %c0_9 = arith.constant 0 : index
    %c0_10 = arith.constant 0 : index
    %15 = vector.load %arg5[%c0_9, %c0_10] : memref<1x256xf32, #tpu.memory_space<vmem>>, vector<1x256xf32>
    %16 = vector.broadcast %15 : vector<1x256xf32> to vector<256x256xf32>
    %17 = arith.addf %14, %16 : vector<256x256xf32>
    %18 = vector.extract_strided_slice %17 {offsets = [0, 0], sizes = [256, 128], strides = [1, 1]} : vector<256x256xf32> to vector<256x128xf32>
    %19 = arith.negf %18 : vector<256x128xf32>
    %20 = math.exp %19 : vector<256x128xf32>
    %cst_11 = arith.constant 1.000000e+00 : f32
    %21 = vector.broadcast %cst_11 : f32 to vector<256x128xf32>
    %22 = arith.addf %21, %20 : vector<256x128xf32>
    %23 = arith.divf %21, %22 : vector<256x128xf32>
    %24 = vector.extract_strided_slice %17 {offsets = [0, 128], sizes = [256, 128], strides = [1, 1]} : vector<256x256xf32> to vector<256x128xf32>
    %cst_12 = arith.constant 0.000000e+00 : f32
    %25 = vector.broadcast %cst_12 : f32 to vector<256x128xf32>
    %26 = arith.maximumf %24, %25 : vector<256x128xf32>
    %27 = arith.mulf %23, %9 : vector<256x128xf32>
    %28 = arith.negf %27 : vector<256x128xf32>
    %29 = math.exp %28 : vector<256x128xf32>
    %cst_13 = arith.constant 1.000000e+00 : f32
    %30 = vector.broadcast %cst_13 : f32 to vector<256x128xf32>
    %31 = arith.addf %30, %29 : vector<256x128xf32>
    %32 = arith.divf %30, %31 : vector<256x128xf32>
    %33 = tpu.concatenate %26, %32 in 1 : vector<256x128xf32>, vector<256x128xf32> -> vector<256x256xf32>
    %c0_14 = arith.constant 0 : index
    %c0_15 = arith.constant 0 : index
    %34 = vector.load %arg6[%c0_14, %c0_15] : memref<256x512xf32, #tpu.memory_space<vmem>>, vector<256x512xf32>
    %cst_16 = arith.constant dense<0.000000e+00> : vector<256x512xf32>
    %35 = tpu.matmul %33, %34, %cst_16 {dimension_numbers = #tpu.dot_dimension_numbers<[1], [0], [0], [1], [0, 0, 1, 1], [], []>} : vector<256x256xf32>, vector<256x512xf32>, vector<256x512xf32> -> vector<256x512xf32>
    %c0_17 = arith.constant 0 : index
    %c0_18 = arith.constant 0 : index
    %36 = vector.load %arg7[%c0_17, %c0_18] : memref<1x512xf32, #tpu.memory_space<vmem>>, vector<1x512xf32>
    %37 = vector.broadcast %36 : vector<1x512xf32> to vector<256x512xf32>
    %38 = arith.addf %35, %37 : vector<256x512xf32>
    %39 = vector.extract_strided_slice %38 {offsets = [0, 0], sizes = [256, 256], strides = [1, 1]} : vector<256x512xf32> to vector<256x256xf32>
    %40 = arith.negf %39 : vector<256x256xf32>
    %41 = math.exp %40 : vector<256x256xf32>
    %cst_19 = arith.constant 1.000000e+00 : f32
    %42 = vector.broadcast %cst_19 : f32 to vector<256x256xf32>
    %43 = arith.addf %42, %41 : vector<256x256xf32>
    %44 = arith.divf %42, %43 : vector<256x256xf32>
    %45 = vector.extract_strided_slice %38 {offsets = [0, 256], sizes = [256, 256], strides = [1, 1]} : vector<256x512xf32> to vector<256x256xf32>
    %46 = arith.addf %45, %7 : vector<256x256xf32>
    %cst_20 = arith.constant 5.000000e-01 : f32
    %47 = vector.broadcast %cst_20 : f32 to vector<256x256xf32>
    %48 = arith.mulf %47, %46 : vector<256x256xf32>
    %cst_21 = arith.constant 5.000000e-01 : f32
    %49 = vector.broadcast %cst_21 : f32 to vector<256x256xf32>
    %50 = arith.mulf %49, %44 : vector<256x256xf32>
    %51 = arith.addf %48, %50 : vector<256x256xf32>
    %52 = arith.negf %51 : vector<256x256xf32>
    %53 = math.exp %52 : vector<256x256xf32>
    %cst_22 = arith.constant 1.000000e+00 : f32
    %54 = vector.broadcast %cst_22 : f32 to vector<256x256xf32>
    %55 = arith.addf %54, %53 : vector<256x256xf32>
    %56 = arith.divf %54, %55 : vector<256x256xf32>
    %c0_23 = arith.constant 0 : index
    %c0_24 = arith.constant 0 : index
    %57 = vector.load %arg8[%c0_23, %c0_24] : memref<256x256xf32, #tpu.memory_space<vmem>>, vector<256x256xf32>
    tpu.vector_store %arg8[%c0_23, %c0_24], %56 {strides = array<i32>} : memref<256x256xf32, #tpu.memory_space<vmem>>, vector<256x256xf32>,
    return
  }
  func.func @transform_0(%arg0: i32) -> (i32, i32) {
    %c0_i32 = arith.constant 0 : i32
    %c0_i32_0 = arith.constant 0 : i32
    return %arg0, %c0_i32 : i32, i32
  }
  func.func @transform_1(%arg0: i32) -> (i32, i32) {
    %c0_i32 = arith.constant 0 : i32
    %c0_i32_0 = arith.constant 0 : i32
    %c0_i32_1 = arith.constant 0 : i32
    return %c0_i32, %c0_i32_0 : i32, i32
  }
  func.func @transform_2(%arg0: i32) -> (i32, i32) {
    %c0_i32 = arith.constant 0 : i32
    %c0_i32_0 = arith.constant 0 : i32
    %c0_i32_1 = arith.constant 0 : i32
    return %c0_i32, %c0_i32_0 : i32, i32
  }
  func.func @transform_3(%arg0: i32) -> (i32, i32) {
    %c0_i32 = arith.constant 0 : i32
    %c0_i32_0 = arith.constant 0 : i32
    %c0_i32_1 = arith.constant 0 : i32
    return %c0_i32, %c0_i32_0 : i32, i32
  }
  func.func @transform_4(%arg0: i32) -> (i32, i32) {
    %c0_i32 = arith.constant 0 : i32
    %c0_i32_0 = arith.constant 0 : i32
    %c0_i32_1 = arith.constant 0 : i32
    return %c0_i32, %c0_i32_0 : i32, i32
  }
  func.func @transform_5(%arg0: i32) -> (i32, i32) {
    %c0_i32 = arith.constant 0 : i32
    %c0_i32_0 = arith.constant 0 : i32
    %c0_i32_1 = arith.constant 0 : i32
    return %c0_i32, %c0_i32_0 : i32, i32
  }
  func.func @transform_6(%arg0: i32) -> (i32, i32) {
    %c0_i32 = arith.constant 0 : i32
    %c0_i32_0 = arith.constant 0 : i32
    %c0_i32_1 = arith.constant 0 : i32
    return %c0_i32, %c0_i32_0 : i32, i32
  }
  func.func @transform_7(%arg0: i32) -> (i32, i32) {
    %c0_i32 = arith.constant 0 : i32
    %c0_i32_0 = arith.constant 0 : i32
    return %arg0, %c0_i32 : i32, i32
  }
}

</mosaic_0001>

<llo_original>
// kernel: tpu_custom_call.1
$region0: #{tpu_custom_call.1}
  #allocation0 [shape = 'u32[]', space=smem, size = 0x4, offset = 0x4, fixed_abs, tag = 'smem constant byte address 0x4 - core index']
  #allocation1 [shape = 'u32[144,128]{1,0:T(1,128)}', space=vmem, size = 0x12000, scoped, tag = 'internal scratch']
  %s0 = inlined_call_operand.hbm [shape: f32[256,256], index: 0, kind: input, shape index: {}]
  %s1 = inlined_call_operand.hbm [shape: f32[256,640], index: 1, kind: input, shape index: {}]
  %s2 = inlined_call_operand.vmem [shape: f32[1,640], index: 2, kind: input, shape index: {}]
  %s3 = inlined_call_operand.hbm [shape: f32[384,256], index: 3, kind: input, shape index: {}]
  %s4 = inlined_call_operand.vmem [shape: f32[1,256], index: 4, kind: input, shape index: {}]
  %s5 = inlined_call_operand.hbm [shape: f32[256,512], index: 5, kind: input, shape index: {}]
  %s6 = inlined_call_operand.vmem [shape: f32[1,512], index: 6, kind: input, shape index: {}]
  %s7 = inlined_call_operand.hbm [shape: f32[256,256], index: 7, kind: output, shape index: {}]
  %s8 = sld [smem:[#allocation0]]
  $region54: #{tpu_custom_call.1} parent=0
    _
  %s10 = ssub.s32 1, %s8
  %s11 = scalar_select 0, %s10, %s8
  $region1: #{tpu_custom_call.1} parent=0
    #allocation2 [shape = 'u8[262144]{0}', space=vmem, size = 0x40000, scoped, tag = 'input window, operand 0, single buffered']
    #allocation3 [shape = 's32[1]{0}', space=sflag, size = 0x4, scoped, tag = 'scoped memory for tpu_custom_call.1']
    #allocation4 [shape = 's32[1]{0}', space=sflag, size = 0x4, scoped, tag = 'scoped memory for tpu_custom_call.1']
    #allocation5 [shape = 'u8[655360]{0}', space=vmem, size = 0xa0000, scoped, tag = 'input window, operand 1, single buffered']
    #allocation6 [shape = 's32[1]{0}', space=sflag, size = 0x4, scoped, tag = 'scoped memory for tpu_custom_call.1']
    #allocation7 [shape = 'u8[393216]{0}', space=vmem, size = 0x60000, scoped, tag = 'input window, operand 3, single buffered']
    #allocation8 [shape = 'u8[524288]{0}', space=vmem, size = 0x80000, scoped, tag = 'input window, operand 5, single buffered']
    #allocation9 [shape = 's32[1]{0}', space=sflag, size = 0x4, scoped, tag = 'scoped memory for tpu_custom_call.1']
    #allocation10 [shape = 'u8[262144]{0}', space=vmem, size = 0x40000, scoped, tag = 'output window, operand 0, single buffered']
    %12 = vsyncpa [#allocation3], 0
    %13 = vsyncpa [#allocation6], 0
    %14 = vsyncpa [#allocation9], 0
    %15 = vsyncpa [#allocation4], 0
    // Predicated region
    $region2: #{tpu_custom_call.1} parent=1 // pred_check
      _
    $region3: #{tpu_custom_call.1} parent=1 // pred_check_branch
      %17 = sbr.rel (0) target = $region5
    $region4: #{tpu_custom_call.1} parent=1 // pred_region
      %s19 = ssub.s32 8192, 8192
      %20 = vsyncadd [#allocation3], %s19
      %s21 = sshll.u32 [#allocation2], 4
      %s22 = int_to_ptr.vmem [resolvable:$true] %s21
      %27 = dma.hbm_to_vmem [thread:$0]  %s0, 8192, %s22, [#allocation3], 256, 256, 16
    $region5: #{tpu_custom_call.1} parent=1 // pred_fallthru
      _
    // Predicated region
    $region6: #{tpu_custom_call.1} parent=1 // pred_check
      _
    $region7: #{tpu_custom_call.1} parent=1 // pred_check_branch
      %29 = sbr.rel (0) target = $region9
    $region8: #{tpu_custom_call.1} parent=1 // pred_region
      %s31 = ssub.s32 20480, 20480
      %32 = vsyncadd [#allocation6], %s31
      %s33 = sshll.u32 [#allocation5], 4
      %s34 = int_to_ptr.vmem [resolvable:$true] %s33
      %39 = dma.hbm_to_vmem [thread:$0]  %s1, 20480, %s34, [#allocation6], 640, 640, 40
    $region9: #{tpu_custom_call.1} parent=1 // pred_fallthru
      _
    // Predicated region
    $region10: #{tpu_custom_call.1} parent=1 // pred_check
      _
    $region11: #{tpu_custom_call.1} parent=1 // pred_check_branch
      %41 = sbr.rel (0) target = $region13
    $region12: #{tpu_custom_call.1} parent=1 // pred_region
      _
    $region13: #{tpu_custom_call.1} parent=1 // pred_fallthru
      _
    // Predicated region
    $region14: #{tpu_custom_call.1} parent=1 // pred_check
      _
    $region15: #{tpu_custom_call.1} parent=1 // pred_check_branch
      %43 = sbr.rel (0) target = $region17
    $region16: #{tpu_custom_call.1} parent=1 // pred_region
      %s45 = ssub.s32 12288, 12288
      %46 = vsyncadd [#allocation6], %s45
      %s47 = sshll.u32 [#allocation7], 4
      %s48 = int_to_ptr.vmem [resolvable:$true] %s47
      %53 = dma.hbm_to_vmem [thread:$0]  %s3, 12288, %s48, [#allocation6], 256, 256, 16
    $region17: #{tpu_custom_call.1} parent=1 // pred_fallthru
      _
    // Predicated region
    $region18: #{tpu_custom_call.1} parent=1 // pred_check
      _
    $region19: #{tpu_custom_call.1} parent=1 // pred_check_branch
      %55 = sbr.rel (0) target = $region21
    $region20: #{tpu_custom_call.1} parent=1 // pred_region
      _
    $region21: #{tpu_custom_call.1} parent=1 // pred_fallthru
      _
    // Predicated region
    $region22: #{tpu_custom_call.1} parent=1 // pred_check
      _
    $region23: #{tpu_custom_call.1} parent=1 // pred_check_branch
      %57 = sbr.rel (0) target = $region25
    $region24: #{tpu_custom_call.1} parent=1 // pred_region
      %s59 = ssub.s32 16384, 16384
      %60 = vsyncadd [#allocation9], %s59
      %s61 = sshll.u32 [#allocation8], 4
      %s62 = int_to_ptr.vmem [resolvable:$true] %s61
      %67 = dma.hbm_to_vmem [thread:$0]  %s5, 16384, %s62, [#allocation9], 512, 512, 32
    $region25: #{tpu_custom_call.1} parent=1 // pred_fallthru
      _
    // Predicated region
    $region26: #{tpu_custom_call.1} parent=1 // pred_check
      _
    $region27: #{tpu_custom_call.1} parent=1 // pred_check_branch
      %69 = sbr.rel (0) target = $region29
    $region28: #{tpu_custom_call.1} parent=1 // pred_region
      _
    $region29: #{tpu_custom_call.1} parent=1 // pred_fallthru
      _
    // Predicated region
    $region30: #{tpu_custom_call.1} parent=1 // pred_check
      _
    $region31: #{tpu_custom_call.1} parent=1 // pred_check_branch
      %71 = sbr.rel (0) target = $region33
    $region32: #{tpu_custom_call.1} parent=1 // pred_region
      %72 = dma.done [#allocation3], 8192
    $region33: #{tpu_custom_call.1} parent=1 // pred_fallthru
      _
    // Predicated region
    $region34: #{tpu_custom_call.1} parent=1 // pred_check
      _
    $region35: #{tpu_custom_call.1} parent=1 // pred_check_branch
      %74 = sbr.rel (0) target = $region37
    $region36: #{tpu_custom_call.1} parent=1 // pred_region
      %75 = dma.done [#allocation6], 20480
    $region37: #{tpu_custom_call.1} parent=1 // pred_fallthru
      _
    // Predicated region
    $region38: #{tpu_custom_call.1} parent=1 // pred_check
      _
    $region39: #{tpu_custom_call.1} parent=1 // pred_check_branch
      %77 = sbr.rel (0) target = $region41
    $region40: #{tpu_custom_call.1} parent=1 // pred_region
      %78 = dma.done [#allocation6], 12288
    $region41: #{tpu_custom_call.1} parent=1 // pred_fallthru
      _
    // Predicated region
    $region42: #{tpu_custom_call.1} parent=1 // pred_check
      _
    $region43: #{tpu_custom_call.1} parent=1 // pred_check_branch
      %80 = sbr.rel (0) target = $region45
    $region44: #{tpu_custom_call.1} parent=1 // pred_region
      %81 = dma.done [#allocation9], 16384
    $region45: #{tpu_custom_call.1} parent=1 // pred_fallthru
      _
    %v82 = vld [vmem:[#allocation2] sm:$0xff]
    %v83 = vld [vmem:[#allocation2 + $0x8] sm:$0xff]
    %v84 = vld [vmem:[#allocation2 + $0x10] sm:$0xff]
    %v85 = vld [vmem:[#allocation2 + $0x18] sm:$0xff]
    %v86 = vld [vmem:[#allocation2 + $0x20] sm:$0xff]
    %v87 = vld [vmem:[#allocation2 + $0x28] sm:$0xff]
    %v88 = vld [vmem:[#allocation2 + $0x30] sm:$0xff]
    %v89 = vld [vmem:[#allocation2 + $0x38] sm:$0xff]
    %v90 = vld [vmem:[#allocation2 + $0x40] sm:$0xff]
    %v91 = vld [vmem:[#allocation2 + $0x48] sm:$0xff]
    %v92 = vld [vmem:[#allocation2 + $0x50] sm:$0xff]
    %v93 = vld [vmem:[#allocation2 + $0x58] sm:$0xff]
    %v94 = vld [vmem:[#allocation2 + $0x60] sm:$0xff]
    %v95 = vld [vmem:[#allocation2 + $0x68] sm:$0xff]
    %v96 = vld [vmem:[#allocation2 + $0x70] sm:$0xff]
    %v97 = vld [vmem:[#allocation2 + $0x78] sm:$0xff]
    %v98 = vld [vmem:[#allocation2 + $0x80] sm:$0xff]
    %v99 = vld [vmem:[#allocation2 + $0x88] sm:$0xff]
    %v100 = vld [vmem:[#allocation2 + $0x90] sm:$0xff]
    %v101 = vld [vmem:[#allocation2 + $0x98] sm:$0xff]
    %v102 = vld [vmem:[#allocation2 + $0xa0] sm:$0xff]
    %v103 = vld [vmem:[#allocation2 + $0xa8] sm:$0xff]
    %v104 = vld [vmem:[#allocation2 + $0xb0] sm:$0xff]
    %v105 = vld [vmem:[#allocation2 + $0xb8] sm:$0xff]
    %v106 = vld [vmem:[#allocation2 + $0xc0] sm:$0xff]
    %v107 = vld [vmem:[#allocation2 + $0xc8] sm:$0xff]
    %v108 = vld [vmem:[#allocation2 + $0xd0] sm:$0xff]
    %v109 = vld [vmem:[#allocation2 + $0xd8] sm:$0xff]
    %v110 = vld [vmem:[#allocation2 + $0xe0] sm:$0xff]
    %v111 = vld [vmem:[#allocation2 + $0xe8] sm:$0xff]
    %v112 = vld [vmem:[#allocation2 + $0xf0] sm:$0xff]
    %v113 = vld [vmem:[#allocation2 + $0xf8] sm:$0xff]
    %v114 = vld [vmem:[#allocation2 + $0x100] sm:$0xff]
    %v115 = vld [vmem:[#allocation2 + $0x108] sm:$0xff]
    %v116 = vld [vmem:[#allocation2 + $0x110] sm:$0xff]
    %v117 = vld [vmem:[#allocation2 + $0x118] sm:$0xff]
    %v118 = vld [vmem:[#allocation2 + $0x120] sm:$0xff]
    %v119 = vld [vmem:[#allocation2 + $0x128] sm:$0xff]
    %v120 = vld [vmem:[#allocation2 + $0x130] sm:$0xff]
    %v121 = vld [vmem:[#allocation2 + $0x138] sm:$0xff]
    %v122 = vld [vmem:[#allocation2 + $0x140] sm:$0xff]
    %v123 = vld [vmem:[#allocation2 + $0x148] sm:$0xff]
    %v124 = vld [vmem:[#allocation2 + $0x150] sm:$0xff]
    %v125 = vld [vmem:[#allocation2 + $0x158] sm:$0xff]
    %v126 = vld [vmem:[#allocation2 + $0x160] sm:$0xff]
    %v127 = vld [vmem:[#allocation2 + $0x168] sm:$0xff]
    %v128 = vld [vmem:[#allocation2 + $0x170] sm:$0xff]
    %v129 = vld [vmem:[#allocation2 + $0x178] sm:$0xff]
    %v130 = vld [vmem:[#allocation2 + $0x180] sm:$0xff]
    %v131 = vld [vmem:[#allocation2 + $0x188] sm:$0xff]
    %v132 = vld [vmem:[#allocation2 + $0x190] sm:$0xff]
    %v133 = vld [vmem:[#allocation2 + $0x198] sm:$0xff]
    %v134 = vld [vmem:[#allocation2 + $0x1a0] sm:$0xff]
    %v135 = vld [vmem:[#allocation2 + $0x1a8] sm:$0xff]
    %v136 = vld [vmem:[#allocation2 + $0x1b0] sm:$0xff]
    %v137 = vld [vmem:[#allocation2 + $0x1b8] sm:$0xff]
    %v138 = vld [vmem:[#allocation2 + $0x1c0] sm:$0xff]
    %v139 = vld [vmem:[#allocation2 + $0x1c8] sm:$0xff]
    %v140 = vld [vmem:[#allocation2 + $0x1d0] sm:$0xff]
    %v141 = vld [vmem:[#allocation2 + $0x1d8] sm:$0xff]
    %v142 = vld [vmem:[#allocation2 + $0x1e0] sm:$0xff]
    %v143 = vld [vmem:[#allocation2 + $0x1e8] sm:$0xff]
    %v144 = vld [vmem:[#allocation2 + $0x1f0] sm:$0xff]
    %v145 = vld [vmem:[#allocation2 + $0x1f8] sm:$0xff]
    %v146 = vld [vmem:[#allocation5] sm:$0xff]
    %v147 = vld [vmem:[#allocation5 + $0x8] sm:$0xff]
    %v148 = vld [vmem:[#allocation5 + $0x10] sm:$0xff]
    %v149 = vld [vmem:[#allocation5 + $0x18] sm:$0xff]
    %v150 = vld [vmem:[#allocation5 + $0x20] sm:$0xff]
    %v151 = vld [vmem:[#allocation5 + $0x28] sm:$0xff]
    %v152 = vld [vmem:[#allocation5 + $0x30] sm:$0xff]
    %v153 = vld [vmem:[#allocation5 + $0x38] sm:$0xff]
    %v154 = vld [vmem:[#allocation5 + $0x40] sm:$0xff]
    %v155 = vld [vmem:[#allocation5 + $0x48] sm:$0xff]
    %v156 = vld [vmem:[#allocation5 + $0x50] sm:$0xff]
    %v157 = vld [vmem:[#allocation5 + $0x58] sm:$0xff]
    %v158 = vld [vmem:[#allocation5 + $0x60] sm:$0xff]
    %v159 = vld [vmem:[#allocation5 + $0x68] sm:$0xff]
    %v160 = vld [vmem:[#allocation5 + $0x70] sm:$0xff]
    %v161 = vld [vmem:[#allocation5 + $0x78] sm:$0xff]
    %v162 = vld [vmem:[#allocation5 + $0x80] sm:$0xff]
    %v163 = vld [vmem:[#allocation5 + $0x88] sm:$0xff]
    %v164 = vld [vmem:[#allocation5 + $0x90] sm:$0xff]
    %v165 = vld [vmem:[#allocation5 + $0x98] sm:$0xff]
    %v166 = vld [vmem:[#allocation5 + $0xa0] sm:$0xff]
    %v167 = vld [vmem:[#allocation5 + $0xa8] sm:$0xff]
    %v168 = vld [vmem:[#allocation5 + $0xb0] sm:$0xff]
    %v169 = vld [vmem:[#allocation5 + $0xb8] sm:$0xff]
    %v170 = vld [vmem:[#allocation5 + $0xc0] sm:$0xff]
    %v171 = vld [vmem:[#allocation5 + $0xc8] sm:$0xff]
    %v172 = vld [vmem:[#allocation5 + $0xd0] sm:$0xff]
    %v173 = vld [vmem:[#allocation5 + $0xd8] sm:$0xff]
    %v174 = vld [vmem:[#allocation5 + $0xe0] sm:$0xff]
    %v175 = vld [vmem:[#allocation5 + $0xe8] sm:$0xff]
    %v176 = vld [vmem:[#allocation5 + $0xf0] sm:$0xff]
    %v177 = vld [vmem:[#allocation5 + $0xf8] sm:$0xff]
    %v178 = vld [vmem:[#allocation5 + $0x100] sm:$0xff]
    %v179 = vld [vmem:[#allocation5 + $0x108] sm:$0xff]
    %v180 = vld [vmem:[#allocation5 + $0x110] sm:$0xff]
    %v181 = vld [vmem:[#allocation5 + $0x118] sm:$0xff]
    %v182 = vld [vmem:[#allocation5 + $0x120] sm:$0xff]
    %v183 = vld [vmem:[#allocation5 + $0x128] sm:$0xff]
    %v184 = vld [vmem:[#allocation5 + $0x130] sm:$0xff]
    %v185 = vld [vmem:[#allocation5 + $0x138] sm:$0xff]
    %v186 = vld [vmem:[#allocation5 + $0x140] sm:$0xff]
    %v187 = vld [vmem:[#allocation5 + $0x148] sm:$0xff]
    %v188 = vld [vmem:[#allocation5 + $0x150] sm:$0xff]
    %v189 = vld [vmem:[#allocation5 + $0x158] sm:$0xff]
    %v190 = vld [vmem:[#allocation5 + $0x160] sm:$0xff]
    %v191 = vld [vmem:[#allocation5 + $0x168] sm:$0xff]
    %v192 = vld [vmem:[#allocation5 + $0x170] sm:$0xff]
    %v193 = vld [vmem:[#allocation5 + $0x178] sm:$0xff]
    %v194 = vld [vmem:[#allocation5 + $0x180] sm:$0xff]
    %v195 = vld [vmem:[#allocation5 + $0x188] sm:$0xff]
    %v196 = vld [vmem:[#allocation5 + $0x190] sm:$0xff]
    %v197 = vld [vmem:[#allocation5 + $0x198] sm:$0xff]
    %v198 = vld [vmem:[#allocation5 + $0x1a0] sm:$0xff]
    %v199 = vld [vmem:[#allocation5 + $0x1a8] sm:$0xff]
    %v200 = vld [vmem:[#allocation5 + $0x1b0] sm:$0xff]
    %v201 = vld [vmem:[#allocation5 + $0x1b8] sm:$0xff]
    %v202 = vld [vmem:[#allocation5 + $0x1c0] sm:$0xff]
    %v203 = vld [vmem:[#allocation5 + $0x1c8] sm:$0xff]
    %v204 = vld [vmem:[#allocation5 + $0x1d0] sm:$0xff]
    %v205 = vld [vmem:[#allocation5 + $0x1d8] sm:$0xff]
    %v206 = vld [vmem:[#allocation5 + $0x1e0] sm:$0xff]
    %v207 = vld [vmem:[#allocation5 + $0x1e8] sm:$0xff]
    %v208 = vld [vmem:[#allocation5 + $0x1f0] sm:$0xff]
    %v209 = vld [vmem:[#allocation5 + $0x1f8] sm:$0xff]
    %v210 = vld [vmem:[#allocation5 + $0x200] sm:$0xff]
    %v211 = vld [vmem:[#allocation5 + $0x208] sm:$0xff]
    %v212 = vld [vmem:[#allocation5 + $0x210] sm:$0xff]
    %v213 = vld [vmem:[#allocation5 + $0x218] sm:$0xff]
    %v214 = vld [vmem:[#allocation5 + $0x220] sm:$0xff]
    %v215 = vld [vmem:[#allocation5 + $0x228] sm:$0xff]
    %v216 = vld [vmem:[#allocation5 + $0x230] sm:$0xff]
    %v217 = vld [vmem:[#allocation5 + $0x238] sm:$0xff]
    %v218 = vld [vmem:[#allocation5 + $0x240] sm:$0xff]
    %v219 = vld [vmem:[#allocation5 + $0x248] sm:$0xff]
    %v220 = vld [vmem:[#allocation5 + $0x250] sm:$0xff]
    %v221 = vld [vmem:[#allocation5 + $0x258] sm:$0xff]
    %v222 = vld [vmem:[#allocation5 + $0x260] sm:$0xff]
    %v223 = vld [vmem:[#allocation5 + $0x268] sm:$0xff]
    %v224 = vld [vmem:[#allocation5 + $0x270] sm:$0xff]
    %v225 = vld [vmem:[#allocation5 + $0x278] sm:$0xff]
    %v226 = vld [vmem:[#allocation5 + $0x280] sm:$0xff]
    %v227 = vld [vmem:[#allocation5 + $0x288] sm:$0xff]
    %v228 = vld [vmem:[#allocation5 + $0x290] sm:$0xff]
    %v229 = vld [vmem:[#allocation5 + $0x298] sm:$0xff]
    %v230 = vld [vmem:[#allocation5 + $0x2a0] sm:$0xff]
    %v231 = vld [vmem:[#allocation5 + $0x2a8] sm:$0xff]
    %v232 = vld [vmem:[#allocation5 + $0x2b0] sm:$0xff]
    %v233 = vld [vmem:[#allocation5 + $0x2b8] sm:$0xff]
    %v234 = vld [vmem:[#allocation5 + $0x2c0] sm:$0xff]
    %v235 = vld [vmem:[#allocation5 + $0x2c8] sm:$0xff]
    %v236 = vld [vmem:[#allocation5 + $0x2d0] sm:$0xff]
    %v237 = vld [vmem:[#allocation5 + $0x2d8] sm:$0xff]
    %v238 = vld [vmem:[#allocation5 + $0x2e0] sm:$0xff]
    %v239 = vld [vmem:[#allocation5 + $0x2e8] sm:$0xff]
    %v240 = vld [vmem:[#allocation5 + $0x2f0] sm:$0xff]
    %v241 = vld [vmem:[#allocation5 + $0x2f8] sm:$0xff]
    %v242 = vld [vmem:[#allocation5 + $0x300] sm:$0xff]
    %v243 = vld [vmem:[#allocation5 + $0x308] sm:$0xff]
    %v244 = vld [vmem:[#allocation5 + $0x310] sm:$0xff]
    %v245 = vld [vmem:[#allocation5 + $0x318] sm:$0xff]
    %v246 = vld [vmem:[#allocation5 + $0x320] sm:$0xff]
    %v247 = vld [vmem:[#allocation5 + $0x328] sm:$0xff]
    %v248 = vld [vmem:[#allocation5 + $0x330] sm:$0xff]
    %v249 = vld [vmem:[#allocation5 + $0x338] sm:$0xff]
    %v250 = vld [vmem:[#allocation5 + $0x340] sm:$0xff]
    %v251 = vld [vmem:[#allocation5 + $0x348] sm:$0xff]
    %v252 = vld [vmem:[#allocation5 + $0x350] sm:$0xff]
    %v253 = vld [vmem:[#allocation5 + $0x358] sm:$0xff]
    %v254 = vld [vmem:[#allocation5 + $0x360] sm:$0xff]
    %v255 = vld [vmem:[#allocation5 + $0x368] sm:$0xff]
    %v256 = vld [vmem:[#allocation5 + $0x370] sm:$0xff]
    %v257 = vld [vmem:[#allocation5 + $0x378] sm:$0xff]
    %v258 = vld [vmem:[#allocation5 + $0x380] sm:$0xff]
    %v259 = vld [vmem:[#allocation5 + $0x388] sm:$0xff]
    %v260 = vld [vmem:[#allocation5 + $0x390] sm:$0xff]
    %v261 = vld [vmem:[#allocation5 + $0x398] sm:$0xff]
    %v262 = vld [vmem:[#allocation5 + $0x3a0] sm:$0xff]
    %v263 = vld [vmem:[#allocation5 + $0x3a8] sm:$0xff]
    %v264 = vld [vmem:[#allocation5 + $0x3b0] sm:$0xff]
    %v265 = vld [vmem:[#allocation5 + $0x3b8] sm:$0xff]
    %v266 = vld [vmem:[#allocation5 + $0x3c0] sm:$0xff]
    %v267 = vld [vmem:[#allocation5 + $0x3c8] sm:$0xff]
    %v268 = vld [vmem:[#allocation5 + $0x3d0] sm:$0xff]
    %v269 = vld [vmem:[#allocation5 + $0x3d8] sm:$0xff]
    %v270 = vld [vmem:[#allocation5 + $0x3e0] sm:$0xff]
    %v271 = vld [vmem:[#allocation5 + $0x3e8] sm:$0xff]
    %v272 = vld [vmem:[#allocation5 + $0x3f0] sm:$0xff]
    %v273 = vld [vmem:[#allocation5 + $0x3f8] sm:$0xff]
    %v274 = vld [vmem:[#allocation5 + $0x400] sm:$0xff]
    %v275 = vld [vmem:[#allocation5 + $0x408] sm:$0xff]
    %v276 = vld [vmem:[#allocation5 + $0x410] sm:$0xff]
    %v277 = vld [vmem:[#allocation5 + $0x418] sm:$0xff]
    %v278 = vld [vmem:[#allocation5 + $0x420] sm:$0xff]
    %v279 = vld [vmem:[#allocation5 + $0x428] sm:$0xff]
    %v280 = vld [vmem:[#allocation5 + $0x430] sm:$0xff]
    %v281 = vld [vmem:[#allocation5 + $0x438] sm:$0xff]
    %v282 = vld [vmem:[#allocation5 + $0x440] sm:$0xff]
    %v283 = vld [vmem:[#allocation5 + $0x448] sm:$0xff]
    %v284 = vld [vmem:[#allocation5 + $0x450] sm:$0xff]
    %v285 = vld [vmem:[#allocation5 + $0x458] sm:$0xff]
    %v286 = vld [vmem:[#allocation5 + $0x460] sm:$0xff]
    %v287 = vld [vmem:[#allocation5 + $0x468] sm:$0xff]
    %v288 = vld [vmem:[#allocation5 + $0x470] sm:$0xff]
    %v289 = vld [vmem:[#allocation5 + $0x478] sm:$0xff]
    %v290 = vld [vmem:[#allocation5 + $0x480] sm:$0xff]
    %v291 = vld [vmem:[#allocation5 + $0x488] sm:$0xff]
    %v292 = vld [vmem:[#allocation5 + $0x490] sm:$0xff]
    %v293 = vld [vmem:[#allocation5 + $0x498] sm:$0xff]
    %v294 = vld [vmem:[#allocation5 + $0x4a0] sm:$0xff]
    %v295 = vld [vmem:[#allocation5 + $0x4a8] sm:$0xff]
    %v296 = vld [vmem:[#allocation5 + $0x4b0] sm:$0xff]
    %v297 = vld [vmem:[#allocation5 + $0x4b8] sm:$0xff]
    %v298 = vld [vmem:[#allocation5 + $0x4c0] sm:$0xff]
    %v299 = vld [vmem:[#allocation5 + $0x4c8] sm:$0xff]
    %v300 = vld [vmem:[#allocation5 + $0x4d0] sm:$0xff]
    %v301 = vld [vmem:[#allocation5 + $0x4d8] sm:$0xff]
    %v302 = vld [vmem:[#allocation5 + $0x4e0] sm:$0xff]
    %v303 = vld [vmem:[#allocation5 + $0x4e8] sm:$0xff]
    %v304 = vld [vmem:[#allocation5 + $0x4f0] sm:$0xff]
    %v305 = vld [vmem:[#allocation5 + $0x4f8] sm:$0xff]
    %v306 = vld [vmem:[%s2] sm:$0x1f]
    %v308 = vlaneseq
    %v309 = vshrl.u32 %v308, 7
    %v310 = vsub.s32 0, %v309
    %v311 = vrot.slane %v306, %v310
    %v312 = vlaneseq
    %v313 = vshrl.u32 %v312, 7
    %v314 = vsub.s32 1, %v313
    %v315 = vrot.slane %v306, %v314
    %v316 = vlaneseq
    %v317 = vshrl.u32 %v316, 7
    %v318 = vsub.s32 2, %v317
    %v319 = vrot.slane %v306, %v318
    %v320 = vlaneseq
    %v321 = vshrl.u32 %v320, 7
    %v322 = vsub.s32 3, %v321
    %v323 = vrot.slane %v306, %v322
    %v324 = vlaneseq
    %v325 = vshrl.u32 %v324, 7
    %v326 = vsub.s32 4, %v325
    %v327 = vrot.slane %v306, %v326
    %333 = vmatprep.subr.mxu0 %v147
    %334 = vmatpush1.msra.mxu0 %v146
    %335 = vmatprep.subr.mxu0 %v152
    %336 = vmatpush1.msra.mxu0 %v151
    %337 = vmatprep.subr.mxu0 %v157
    %338 = vmatpush1.msra.mxu0 %v156
    %339 = vmatprep.subr.mxu0 %v162
    %340 = vmatpush1.msra.mxu0 %v161
    %341 = vmatprep.subr.mxu0 %v167
    %342 = vmatpush1.msra.mxu0 %v166
    %343 = vmatprep.subr.mxu0 %v172
    %344 = vmatpush1.msra.mxu0 %v171
    %345 = vmatprep.subr.mxu0 %v177
    %346 = vmatpush1.msra.mxu0 %v176
    %347 = vmatprep.subr.mxu0 %v182
    %348 = vmatpush1.msra.mxu0 %v181
    %349 = vmatprep.subr.mxu0 %v187
    %350 = vmatpush1.msra.mxu0 %v186
    %351 = vmatprep.subr.mxu0 %v192
    %352 = vmatpush1.msra.mxu0 %v191
    %353 = vmatprep.subr.mxu0 %v197
    %354 = vmatpush1.msra.mxu0 %v196
    %355 = vmatprep.subr.mxu0 %v202
    %356 = vmatpush1.msra.mxu0 %v201
    %357 = vmatprep.subr.mxu0 %v207
    %358 = vmatpush1.msra.mxu0 %v206
    %359 = vmatprep.subr.mxu0 %v212
    %360 = vmatpush1.msra.mxu0 %v211
    %361 = vmatprep.subr.mxu0 %v217
    %362 = vmatpush1.msra.mxu0 %v216
    %363 = vmatprep.subr.mxu0 %v222
    %364 = vmatpush1.msra.mxu0 %v221
    %365 = vmatprep.subr.mxu0 %v227
    %366 = vmatpush1.msra.mxu0 %v226
    %367 = vmatprep.subr.mxu0 %v232
    %368 = vmatpush1.msra.mxu0 %v231
    %369 = vmatprep.subr.mxu0 %v237
    %370 = vmatpush1.msra.mxu0 %v236
    %371 = vmatprep.subr.mxu0 %v242
    %372 = vmatpush1.msra.mxu0 %v241
    %373 = vmatprep.subr.mxu0 %v247
    %374 = vmatpush1.msra.mxu0 %v246
    %375 = vmatprep.subr.mxu0 %v252
    %376 = vmatpush1.msra.mxu0 %v251
    %377 = vmatprep.subr.mxu0 %v257
    %378 = vmatpush1.msra.mxu0 %v256
    %379 = vmatprep.subr.mxu0 %v262
    %380 = vmatpush1.msra.mxu0 %v261
    %381 = vmatprep.subr.mxu0 %v267
    %382 = vmatpush1.msra.mxu0 %v266
    %383 = vmatprep.subr.mxu0 %v272
    %384 = vmatpush1.msra.mxu0 %v271
    %385 = vmatprep.subr.mxu0 %v277
    %386 = vmatpush1.msra.mxu0 %v276
    %387 = vmatprep.subr.mxu0 %v282
    %388 = vmatpush1.msra.mxu0 %v281
    %389 = vmatprep.subr.mxu0 %v287
    %390 = vmatpush1.msra.mxu0 %v286
    %391 = vmatprep.subr.mxu0 %v292
    %392 = vmatpush1.msra.mxu0 %v291
    %393 = vmatprep.subr.mxu0 %v297
    %394 = vmatpush1.msra.mxu0 %v296
    %395 = vmatprep.subr.mxu0 %v302
    %396 = vmatpush1.msra.mxu0 %v301
    %397 = vmatprep.mubr.f32.mxu0 %v83
    %398 = vmatmul.mubr.f32.gmra.mrb[0].mxu0 %v82
    %v399 = vpop.f32.mrb[0].mxu0
    %v400 = vadd.f32 %v311, %v399
    %v401 = vpop.f32.mrb[0].mxu0
    %v402 = vadd.f32 %v315, %v401
    %403 = vmatprep.mubr.f32.mxu0 %v85
    %404 = vmatmul.mubr.f32.gmra.mrb[0].mxu0 %v84
    %v405 = vpop.f32.mrb[0].mxu0
    %v406 = vadd.f32 %v311, %v405
    %v407 = vpop.f32.mrb[0].mxu0
    %v408 = vadd.f32 %v315, %v407
    %409 = vmatprep.mubr.f32.mxu0 %v87
    %410 = vmatmul.mubr.f32.gmra.mrb[0].mxu0 %v86
    %v411 = vpop.f32.mrb[0].mxu0
    %v412 = vadd.f32 %v311, %v411
    %v413 = vpop.f32.mrb[0].mxu0
    %v414 = vadd.f32 %v315, %v413
    %415 = vmatprep.mubr.f32.mxu0 %v89
    %416 = vmatmul.mubr.f32.gmra.mrb[0].mxu0 %v88
    %v417 = vpop.f32.mrb[0].mxu0
    %v418 = vadd.f32 %v311, %v417
    %v419 = vpop.f32.mrb[0].mxu0
    %v420 = vadd.f32 %v315, %v419
    %421 = vmatprep.mubr.f32.mxu0 %v91
    %422 = vmatmul.mubr.f32.gmra.mrb[0].mxu0 %v90
    %v423 = vpop.f32.mrb[0].mxu0
    %v424 = vadd.f32 %v311, %v423
    %v425 = vpop.f32.mrb[0].mxu0
    %v426 = vadd.f32 %v315, %v425
    %427 = vmatprep.mubr.f32.mxu0 %v93
    %428 = vmatmul.mubr.f32.gmra.mrb[0].mxu0 %v92
    %v429 = vpop.f32.mrb[0].mxu0
    %v430 = vadd.f32 %v311, %v429
    %v431 = vpop.f32.mrb[0].mxu0
    %v432 = vadd.f32 %v315, %v431
    %433 = vmatprep.mubr.f32.mxu0 %v95
    %434 = vmatmul.mubr.f32.gmra.mrb[0].mxu0 %v94
    %v435 = vpop.f32.mrb[0].mxu0
    %v436 = vadd.f32 %v311, %v435
    %v437 = vpop.f32.mrb[0].mxu0
    %v438 = vadd.f32 %v315, %v437
    %439 = vmatprep.mubr.f32.mxu0 %v97
    %440 = vmatmul.mubr.f32.gmra.mrb[0].mxu0 %v96
    %v441 = vpop.f32.mrb[0].mxu0
    %v442 = vadd.f32 %v311, %v441
    %v443 = vpop.f32.mrb[0].mxu0
    %v444 = vadd.f32 %v315, %v443
    %445 = vmatprep.mubr.f32.mxu0 %v99
    %446 = vmatmul.mubr.f32.gmra.mrb[0].mxu0 %v98
    %v447 = vpop.f32.mrb[0].mxu0
    %v448 = vadd.f32 %v311, %v447
    %v449 = vpop.f32.mrb[0].mxu0
    %v450 = vadd.f32 %v315, %v449
    %451 = vmatprep.mubr.f32.mxu0 %v101
    %452 = vmatmul.mubr.f32.gmra.mrb[0].mxu0 %v100
    %v453 = vpop.f32.mrb[0].mxu0
    %v454 = vadd.f32 %v311, %v453
    %v455 = vpop.f32.mrb[0].mxu0
    %v456 = vadd.f32 %v315, %v455
    %457 = vmatprep.mubr.f32.mxu0 %v103
    %458 = vmatmul.mubr.f32.gmra.mrb[0].mxu0 %v102
    %v459 = vpop.f32.mrb[0].mxu0
    %v460 = vadd.f32 %v311, %v459
    %v461 = vpop.f32.mrb[0].mxu0
    %v462 = vadd.f32 %v315, %v461
    %463 = vmatprep.mubr.f32.mxu0 %v105
    %464 = vmatmul.mubr.f32.gmra.mrb[0].mxu0 %v104
    %v465 = vpop.f32.mrb[0].mxu0
    %v466 = vadd.f32 %v311, %v465
    %v467 = vpop.f32.mrb[0].mxu0
    %v468 = vadd.f32 %v315, %v467
    %469 = vmatprep.mubr.f32.mxu0 %v107
    %470 = vmatmul.mubr.f32.gmra.mrb[0].mxu0 %v106
    %v471 = vpop.f32.mrb[0].mxu0
    %v472 = vadd.f32 %v311, %v471
    %v473 = vpop.f32.mrb[0].mxu0
    %v474 = vadd.f32 %v315, %v473
    %475 = vmatprep.mubr.f32.mxu0 %v109
    %476 = vmatmul.mubr.f32.gmra.mrb[0].mxu0 %v108
    %v477 = vpop.f32.mrb[0].mxu0
    %v478 = vadd.f32 %v311, %v477
    %v479 = vpop.f32.mrb[0].mxu0
    %v480 = vadd.f32 %v315, %v479
    %481 = vmatprep.mubr.f32.mxu0 %v111
    %482 = vmatmul.mubr.f32.gmra.mrb[0].mxu0 %v110
    %v483 = vpop.f32.mrb[0].mxu0
    %v484 = vadd.f32 %v311, %v483
    %v485 = vpop.f32.mrb[0].mxu0
    %v486 = vadd.f32 %v315, %v485
    %487 = vmatprep.mubr.f32.mxu0 %v113
    %488 = vmatmul.mubr.f32.gmra.mrb[0].mxu0 %v112
    %v489 = vpop.f32.mrb[0].mxu0
    %v490 = vadd.f32 %v311, %v489
    %v491 = vpop.f32.mrb[0].mxu0
    %v492 = vadd.f32 %v315, %v491
    %493 = vmatprep.mubr.f32.mxu0 %v115
    %494 = vmatmul.mubr.f32.gmra.mrb[0].mxu0 %v114
    %v495 = vpop.f32.mrb[0].mxu0
    %v496 = vadd.f32 %v311, %v495
    %v497 = vpop.f32.mrb[0].mxu0
    %v498 = vadd.f32 %v315, %v497
    %499 = vmatprep.mubr.f32.mxu0 %v117
    %500 = vmatmul.mubr.f32.gmra.mrb[0].mxu0 %v116
    %v501 = vpop.f32.mrb[0].mxu0
    %v502 = vadd.f32 %v311, %v501
    %v503 = vpop.f32.mrb[0].mxu0
    %v504 = vadd.f32 %v315, %v503
    %505 = vmatprep.mubr.f32.mxu0 %v119
    %506 = vmatmul.mubr.f32.gmra.mrb[0].mxu0 %v118
    %v507 = vpop.f32.mrb[0].mxu0
    %v508 = vadd.f32 %v311, %v507
    %v509 = vpop.f32.mrb[0].mxu0
    %v510 = vadd.f32 %v315, %v509
    %511 = vmatprep.mubr.f32.mxu0 %v121
    %512 = vmatmul.mubr.f32.gmra.mrb[0].mxu0 %v120
    %v513 = vpop.f32.mrb[0].mxu0
    %v514 = vadd.f32 %v311, %v513
    %v515 = vpop.f32.mrb[0].mxu0
    %v516 = vadd.f32 %v315, %v515
    %517 = vmatprep.mubr.f32.mxu0 %v123
    %518 = vmatmul.mubr.f32.gmra.mrb[0].mxu0 %v122
    %v519 = vpop.f32.mrb[0].mxu0
    %v520 = vadd.f32 %v311, %v519
    %v521 = vpop.f32.mrb[0].mxu0
    %v522 = vadd.f32 %v315, %v521
    %523 = vmatprep.mubr.f32.mxu0 %v125
    %524 = vmatmul.mubr.f32.gmra.mrb[0].mxu0 %v124
    %v525 = vpop.f32.mrb[0].mxu0
    %v526 = vadd.f32 %v311, %v525
    %v527 = vpop.f32.mrb[0].mxu0
    %v528 = vadd.f32 %v315, %v527
    %529 = vmatprep.mubr.f32.mxu0 %v127
    %530 = vmatmul.mubr.f32.gmra.mrb[0].mxu0 %v126
    %v531 = vpop.f32.mrb[0].mxu0
    %v532 = vadd.f32 %v311, %v531
    %v533 = vpop.f32.mrb[0].mxu0
    %v534 = vadd.f32 %v315, %v533
    %535 = vmatprep.mubr.f32.mxu0 %v129
    %536 = vmatmul.mubr.f32.gmra.mrb[0].mxu0 %v128
    %v537 = vpop.f32.mrb[0].mxu0
    %v538 = vadd.f32 %v311, %v537
    %v539 = vpop.f32.mrb[0].mxu0
    %v540 = vadd.f32 %v315, %v539
    %541 = vmatprep.mubr.f32.mxu0 %v131
    %542 = vmatmul.mubr.f32.gmra.mrb[0].mxu0 %v130
    %v543 = vpop.f32.mrb[0].mxu0
    %v544 = vadd.f32 %v311, %v543
    %v545 = vpop.f32.mrb[0].mxu0
    %v546 = vadd.f32 %v315, %v545
    %547 = vmatprep.mubr.f32.mxu0 %v133
    %548 = vmatmul.mubr.f32.gmra.mrb[0].mxu0 %v132
    %v549 = vpop.f32.mrb[0].mxu0
    %v550 = vadd.f32 %v311, %v549
    %v551 = vpop.f32.mrb[0].mxu0
    %v552 = vadd.f32 %v315, %v551
    %553 = vmatprep.mubr.f32.mxu0 %v135
    %554 = vmatmul.mubr.f32.gmra.mrb[0].mxu0 %v134
    %v555 = vpop.f32.mrb[0].mxu0
    %v556 = vadd.f32 %v311, %v555
    %v557 = vpop.f32.mrb[0].mxu0
    %v558 = vadd.f32 %v315, %v557
    %559 = vmatprep.mubr.f32.mxu0 %v137
    %560 = vmatmul.mubr.f32.gmra.mrb[0].mxu0 %v136
    %v561 = vpop.f32.mrb[0].mxu0
    %v562 = vadd.f32 %v311, %v561
    %v563 = vpop.f32.mrb[0].mxu0
    %v564 = vadd.f32 %v315, %v563
    %565 = vmatprep.mubr.f32.mxu0 %v139
    %566 = vmatmul.mubr.f32.gmra.mrb[0].mxu0 %v138
    %v567 = vpop.f32.mrb[0].mxu0
    %v568 = vadd.f32 %v311, %v567
    %v569 = vpop.f32.mrb[0].mxu0
    %v570 = vadd.f32 %v315, %v569
    %571 = vmatprep.mubr.f32.mxu0 %v141
    %572 = vmatmul.mubr.f32.gmra.mrb[0].mxu0 %v140
    %v573 = vpop.f32.mrb[0].mxu0
    %v574 = vadd.f32 %v311, %v573
    %v575 = vpop.f32.mrb[0].mxu0
    %v576 = vadd.f32 %v315, %v575
    %577 = vmatprep.mubr.f32.mxu0 %v143
    %578 = vmatmul.mubr.f32.gmra.mrb[0].mxu0 %v142
    %v579 = vpop.f32.mrb[0].mxu0
    %v580 = vadd.f32 %v311, %v579
    %v581 = vpop.f32.mrb[0].mxu0
    %v582 = vadd.f32 %v315, %v581
    %583 = vmatprep.mubr.f32.mxu0 %v145
    %584 = vmatmul.mubr.f32.gmra.mrb[0].mxu0 %v144
    %v585 = vpop.f32.mrb[0].mxu0
    %v586 = vadd.f32 %v311, %v585
    %v587 = vpop.f32.mrb[0].mxu0
    %v588 = vadd.f32 %v315, %v587
    %589 = vdwg.mxu0
    %590 = vmatprep.subr.mxu0 %v149
    %591 = vmatpush1.msra.mxu0 %v148
    %592 = vmatprep.subr.mxu0 %v154
    %593 = vmatpush1.msra.mxu0 %v153
    %594 = vmatprep.subr.mxu0 %v159
    %595 = vmatpush1.msra.mxu0 %v158
    %596 = vmatprep.subr.mxu0 %v164
    %597 = vmatpush1.msra.mxu0 %v163
    %598 = vmatprep.subr.mxu0 %v169
    %599 = vmatpush1.msra.mxu0 %v168
    %600 = vmatprep.subr.mxu0 %v174
    %601 = vmatpush1.msra.mxu0 %v173
    %602 = vmatprep.subr.mxu0 %v179
    %603 = vmatpush1.msra.mxu0 %v178
    %604 = vmatprep.subr.mxu0 %v184
    %605 = vmatpush1.msra.mxu0 %v183
    %606 = vmatprep.subr.mxu0 %v189
    %607 = vmatpush1.msra.mxu0 %v188
    %608 = vmatprep.subr.mxu0 %v194
    %609 = vmatpush1.msra.mxu0 %v193
    %610 = vmatprep.subr.mxu0 %v199
    %611 = vmatpush1.msra.mxu0 %v198
    %612 = vmatprep.subr.mxu0 %v204
    %613 = vmatpush1.msra.mxu0 %v203
    %614 = vmatprep.subr.mxu0 %v209
    %615 = vmatpush1.msra.mxu0 %v208
    %616 = vmatprep.subr.mxu0 %v214
    %617 = vmatpush1.msra.mxu0 %v213
    %618 = vmatprep.subr.mxu0 %v219
    %619 = vmatpush1.msra.mxu0 %v218
    %620 = vmatprep.subr.mxu0 %v224
    %621 = vmatpush1.msra.mxu0 %v223
    %622 = vmatprep.subr.mxu0 %v229
    %623 = vmatpush1.msra.mxu0 %v228
    %624 = vmatprep.subr.mxu0 %v234
    %625 = vmatpush1.msra.mxu0 %v233
    %626 = vmatprep.subr.mxu0 %v239
    %627 = vmatpush1.msra.mxu0 %v238
    %628 = vmatprep.subr.mxu0 %v244
    %629 = vmatpush1.msra.mxu0 %v243
    %630 = vmatprep.subr.mxu0 %v249
    %631 = vmatpush1.msra.mxu0 %v248
    %632 = vmatprep.subr.mxu0 %v254
    %633 = vmatpush1.msra.mxu0 %v253
    %634 = vmatprep.subr.mxu0 %v259
    %635 = vmatpush1.msra.mxu0 %v258
    %636 = vmatprep.subr.mxu0 %v264
    %637 = vmatpush1.msra.mxu0 %v263
    %638 = vmatprep.subr.mxu0 %v269
    %639 = vmatpush1.msra.mxu0 %v268
    %640 = vmatprep.subr.mxu0 %v274
    %641 = vmatpush1.msra.mxu0 %v273
    %642 = vmatprep.subr.mxu0 %v279
    %643 = vmatpush1.msra.mxu0 %v278
    %644 = vmatprep.subr.mxu0 %v284
    %645 = vmatpush1.msra.mxu0 %v283
    %646 = vmatprep.subr.mxu0 %v289
    %647 = vmatpush1.msra.mxu0 %v288
    %648 = vmatprep.subr.mxu0 %v294
    %649 = vmatpush1.msra.mxu0 %v293
    %650 = vmatprep.subr.mxu0 %v299
    %651 = vmatpush1.msra.mxu0 %v298
    %652 = vmatprep.subr.mxu0 %v304
    %653 = vmatpush1.msra.mxu0 %v303
    %654 = vmatprep.mubr.f32.mxu0 %v83
    %655 = vmatmul.mubr.f32.gmra.mrb[0].mxu0 %v82
    %v656 = vpop.f32.mrb[0].mxu0
    %v657 = vadd.f32 %v319, %v656
    %v658 = vpop.f32.mrb[0].mxu0
    %v659 = vadd.f32 %v323, %v658
    %660 = vmatprep.mubr.f32.mxu0 %v85
    %661 = vmatmul.mubr.f32.gmra.mrb[0].mxu0 %v84
    %v662 = vpop.f32.mrb[0].mxu0
    %v663 = vadd.f32 %v319, %v662
    %v664 = vpop.f32.mrb[0].mxu0
    %v665 = vadd.f32 %v323, %v664
    %666 = vmatprep.mubr.f32.mxu0 %v87
    %667 = vmatmul.mubr.f32.gmra.mrb[0].mxu0 %v86
    %v668 = vpop.f32.mrb[0].mxu0
    %v669 = vadd.f32 %v319, %v668
    %v670 = vpop.f32.mrb[0].mxu0
    %v671 = vadd.f32 %v323, %v670
    %672 = vmatprep.mubr.f32.mxu0 %v89
    %673 = vmatmul.mubr.f32.gmra.mrb[0].mxu0 %v88
    %v674 = vpop.f32.mrb[0].mxu0
    %v675 = vadd.f32 %v319, %v674
    %v676 = vpop.f32.mrb[0].mxu0
    %v677 = vadd.f32 %v323, %v676
    %678 = vmatprep.mubr.f32.mxu0 %v91
    %679 = vmatmul.mubr.f32.gmra.mrb[0].mxu0 %v90
    %v680 = vpop.f32.mrb[0].mxu0
    %v681 = vadd.f32 %v319, %v680
    %v682 = vpop.f32.mrb[0].mxu0
    %v683 = vadd.f32 %v323, %v682
    %684 = vmatprep.mubr.f32.mxu0 %v93
    %685 = vmatmul.mubr.f32.gmra.mrb[0].mxu0 %v92
    %v686 = vpop.f32.mrb[0].mxu0
    %v687 = vadd.f32 %v319, %v686
    %v688 = vpop.f32.mrb[0].mxu0
    %v689 = vadd.f32 %v323, %v688
    %690 = vmatprep.mubr.f32.mxu0 %v95
    %691 = vmatmul.mubr.f32.gmra.mrb[0].mxu0 %v94
    %v692 = vpop.f32.mrb[0].mxu0
    %v693 = vadd.f32 %v319, %v692
    %v694 = vpop.f32.mrb[0].mxu0
    %v695 = vadd.f32 %v323, %v694
    %696 = vmatprep.mubr.f32.mxu0 %v97
    %697 = vmatmul.mubr.f32.gmra.mrb[0].mxu0 %v96
    %v698 = vpop.f32.mrb[0].mxu0
    %v699 = vadd.f32 %v319, %v698
    %v700 = vpop.f32.mrb[0].mxu0
    %v701 = vadd.f32 %v323, %v700
    %702 = vmatprep.mubr.f32.mxu0 %v99
    %703 = vmatmul.mubr.f32.gmra.mrb[0].mxu0 %v98
    %v704 = vpop.f32.mrb[0].mxu0
    %v705 = vadd.f32 %v319, %v704
    %v706 = vpop.f32.mrb[0].mxu0
    %v707 = vadd.f32 %v323, %v706
    %708 = vmatprep.mubr.f32.mxu0 %v101
    %709 = vmatmul.mubr.f32.gmra.mrb[0].mxu0 %v100
    %v710 = vpop.f32.mrb[0].mxu0
    %v711 = vadd.f32 %v319, %v710
    %v712 = vpop.f32.mrb[0].mxu0
    %v713 = vadd.f32 %v323, %v712
    %714 = vmatprep.mubr.f32.mxu0 %v103
    %715 = vmatmul.mubr.f32.gmra.mrb[0].mxu0 %v102
    %v716 = vpop.f32.mrb[0].mxu0
    %v717 = vadd.f32 %v319, %v716
    %v718 = vpop.f32.mrb[0].mxu0
    %v719 = vadd.f32 %v323, %v718
    %720 = vmatprep.mubr.f32.mxu0 %v105
    %721 = vmatmul.mubr.f32.gmra.mrb[0].mxu0 %v104
    %v722 = vpop.f32.mrb[0].mxu0
    %v723 = vadd.f32 %v319, %v722
    %v724 = vpop.f32.mrb[0].mxu0
    %v725 = vadd.f32 %v323, %v724
    %726 = vmatprep.mubr.f32.mxu0 %v107
    %727 = vmatmul.mubr.f32.gmra.mrb[0].mxu0 %v106
    %v728 = vpop.f32.mrb[0].mxu0
    %v729 = vadd.f32 %v319, %v728
    %v730 = vpop.f32.mrb[0].mxu0
    %v731 = vadd.f32 %v323, %v730
    %732 = vmatprep.mubr.f32.mxu0 %v109
    %733 = vmatmul.mubr.f32.gmra.mrb[0].mxu0 %v108
    %v734 = vpop.f32.mrb[0].mxu0
    %v735 = vadd.f32 %v319, %v734
    %v736 = vpop.f32.mrb[0].mxu0
    %v737 = vadd.f32 %v323, %v736
    %738 = vmatprep.mubr.f32.mxu0 %v111
    %739 = vmatmul.mubr.f32.gmra.mrb[0].mxu0 %v110
    %v740 = vpop.f32.mrb[0].mxu0
    %v741 = vadd.f32 %v319, %v740
    %v742 = vpop.f32.mrb[0].mxu0
    %v743 = vadd.f32 %v323, %v742
    %744 = vmatprep.mubr.f32.mxu0 %v113
    %745 = vmatmul.mubr.f32.gmra.mrb[0].mxu0 %v112
    %v746 = vpop.f32.mrb[0].mxu0
    %v747 = vadd.f32 %v319, %v746
    %v748 = vpop.f32.mrb[0].mxu0
    %v749 = vadd.f32 %v323, %v748
    %750 = vmatprep.mubr.f32.mxu0 %v115
    %751 = vmatmul.mubr.f32.gmra.mrb[0].mxu0 %v114
    %v752 = vpop.f32.mrb[0].mxu0
    %v753 = vadd.f32 %v319, %v752
    %v754 = vpop.f32.mrb[0].mxu0
    %v755 = vadd.f32 %v323, %v754
    %756 = vmatprep.mubr.f32.mxu0 %v117
    %757 = vmatmul.mubr.f32.gmra.mrb[0].mxu0 %v116
    %v758 = vpop.f32.mrb[0].mxu0
    %v759 = vadd.f32 %v319, %v758
    %v760 = vpop.f32.mrb[0].mxu0
    %v761 = vadd.f32 %v323, %v760
    %762 = vmatprep.mubr.f32.mxu0 %v119
    %763 = vmatmul.mubr.f32.gmra.mrb[0].mxu0 %v118
    %v764 = vpop.f32.mrb[0].mxu0
    %v765 = vadd.f32 %v319, %v764
    %v766 = vpop.f32.mrb[0].mxu0
    %v767 = vadd.f32 %v323, %v766
    %768 = vmatprep.mubr.f32.mxu0 %v121
    %769 = vmatmul.mubr.f32.gmra.mrb[0].mxu0 %v120
    %v770 = vpop.f32.mrb[0].mxu0
    %v771 = vadd.f32 %v319, %v770
    %v772 = vpop.f32.mrb[0].mxu0
    %v773 = vadd.f32 %v323, %v772
    %774 = vmatprep.mubr.f32.mxu0 %v123
    %775 = vmatmul.mubr.f32.gmra.mrb[0].mxu0 %v122
    %v776 = vpop.f32.mrb[0].mxu0
    %v777 = vadd.f32 %v319, %v776
    %v778 = vpop.f32.mrb[0].mxu0
    %v779 = vadd.f32 %v323, %v778
    %780 = vmatprep.mubr.f32.mxu0 %v125
    %781 = vmatmul.mubr.f32.gmra.mrb[0].mxu0 %v124
    %v782 = vpop.f32.mrb[0].mxu0
    %v783 = vadd.f32 %v319, %v782
    %v784 = vpop.f32.mrb[0].mxu0
    %v785 = vadd.f32 %v323, %v784
    %786 = vmatprep.mubr.f32.mxu0 %v127
    %787 = vmatmul.mubr.f32.gmra.mrb[0].mxu0 %v126
    %v788 = vpop.f32.mrb[0].mxu0
    %v789 = vadd.f32 %v319, %v788
    %v790 = vpop.f32.mrb[0].mxu0
    %v791 = vadd.f32 %v323, %v790
    %792 = vmatprep.mubr.f32.mxu0 %v129
    %793 = vmatmul.mubr.f32.gmra.mrb[0].mxu0 %v128
    %v794 = vpop.f32.mrb[0].mxu0
    %v795 = vadd.f32 %v319, %v794
    %v796 = vpop.f32.mrb[0].mxu0
    %v797 = vadd.f32 %v323, %v796
    %798 = vmatprep.mubr.f32.mxu0 %v131
    %799 = vmatmul.mubr.f32.gmra.mrb[0].mxu0 %v130
    %v800 = vpop.f32.mrb[0].mxu0
    %v801 = vadd.f32 %v319, %v800
    %v802 = vpop.f32.mrb[0].mxu0
    %v803 = vadd.f32 %v323, %v802
    %804 = vmatprep.mubr.f32.mxu0 %v133
    %805 = vmatmul.mubr.f32.gmra.mrb[0].mxu0 %v132
    %v806 = vpop.f32.mrb[0].mxu0
    %v807 = vadd.f32 %v319, %v806
    %v808 = vpop.f32.mrb[0].mxu0
    %v809 = vadd.f32 %v323, %v808
    %810 = vmatprep.mubr.f32.mxu0 %v135
    %811 = vmatmul.mubr.f32.gmra.mrb[0].mxu0 %v134
    %v812 = vpop.f32.mrb[0].mxu0
    %v813 = vadd.f32 %v319, %v812
    %v814 = vpop.f32.mrb[0].mxu0
    %v815 = vadd.f32 %v323, %v814
    %816 = vmatprep.mubr.f32.mxu0 %v137
    %817 = vmatmul.mubr.f32.gmra.mrb[0].mxu0 %v136
    %v818 = vpop.f32.mrb[0].mxu0
    %v819 = vadd.f32 %v319, %v818
    %v820 = vpop.f32.mrb[0].mxu0
    %v821 = vadd.f32 %v323, %v820
    %822 = vmatprep.mubr.f32.mxu0 %v139
    %823 = vmatmul.mubr.f32.gmra.mrb[0].mxu0 %v138
    %v824 = vpop.f32.mrb[0].mxu0
    %v825 = vadd.f32 %v319, %v824
    %v826 = vpop.f32.mrb[0].mxu0
    %v827 = vadd.f32 %v323, %v826
    %828 = vmatprep.mubr.f32.mxu0 %v141
    %829 = vmatmul.mubr.f32.gmra.mrb[0].mxu0 %v140
    %v830 = vpop.f32.mrb[0].mxu0
    %v831 = vadd.f32 %v319, %v830
    %v832 = vpop.f32.mrb[0].mxu0
    %v833 = vadd.f32 %v323, %v832
    %834 = vmatprep.mubr.f32.mxu0 %v143
    %835 = vmatmul.mubr.f32.gmra.mrb[0].mxu0 %v142
    %v836 = vpop.f32.mrb[0].mxu0
    %v837 = vadd.f32 %v319, %v836
    %v838 = vpop.f32.mrb[0].mxu0
    %v839 = vadd.f32 %v323, %v838
    %840 = vmatprep.mubr.f32.mxu0 %v145
    %841 = vmatmul.mubr.f32.gmra.mrb[0].mxu0 %v144
    %v842 = vpop.f32.mrb[0].mxu0
    %v843 = vadd.f32 %v319, %v842
    %v844 = vpop.f32.mrb[0].mxu0
    %v845 = vadd.f32 %v323, %v844
    %846 = vdwg.mxu0
    %847 = vmatprep.subr.mxu0 0.0
    %848 = vmatpush1.msra.mxu0 %v150
    %849 = vmatprep.subr.mxu0 0.0
    %850 = vmatpush1.msra.mxu0 %v155
    %851 = vmatprep.subr.mxu0 0.0
    %852 = vmatpush1.msra.mxu0 %v160
    %853 = vmatprep.subr.mxu0 0.0
    %854 = vmatpush1.msra.mxu0 %v165
    %855 = vmatprep.subr.mxu0 0.0
    %856 = vmatpush1.msra.mxu0 %v170
    %857 = vmatprep.subr.mxu0 0.0
    %858 = vmatpush1.msra.mxu0 %v175
    %859 = vmatprep.subr.mxu0 0.0
    %860 = vmatpush1.msra.mxu0 %v180
    %861 = vmatprep.subr.mxu0 0.0
    %862 = vmatpush1.msra.mxu0 %v185
    %863 = vmatprep.subr.mxu0 0.0
    %864 = vmatpush1.msra.mxu0 %v190
    %865 = vmatprep.subr.mxu0 0.0
    %866 = vmatpush1.msra.mxu0 %v195
    %867 = vmatprep.subr.mxu0 0.0
    %868 = vmatpush1.msra.mxu0 %v200
    %869 = vmatprep.subr.mxu0 0.0
    %870 = vmatpush1.msra.mxu0 %v205
    %871 = vmatprep.subr.mxu0 0.0
    %872 = vmatpush1.msra.mxu0 %v210
    %873 = vmatprep.subr.mxu0 0.0
    %874 = vmatpush1.msra.mxu0 %v215
    %875 = vmatprep.subr.mxu0 0.0
    %876 = vmatpush1.msra.mxu0 %v220
    %877 = vmatprep.subr.mxu0 0.0
    %878 = vmatpush1.msra.mxu0 %v225
    %879 = vmatprep.subr.mxu0 0.0
    %880 = vmatpush1.msra.mxu0 %v230
    %881 = vmatprep.subr.mxu0 0.0
    %882 = vmatpush1.msra.mxu0 %v235
    %883 = vmatprep.subr.mxu0 0.0
    %884 = vmatpush1.msra.mxu0 %v240
    %885 = vmatprep.subr.mxu0 0.0
    %886 = vmatpush1.msra.mxu0 %v245
    %887 = vmatprep.subr.mxu0 0.0
    %888 = vmatpush1.msra.mxu0 %v250
    %889 = vmatprep.subr.mxu0 0.0
    %890 = vmatpush1.msra.mxu0 %v255
    %891 = vmatprep.subr.mxu0 0.0
    %892 = vmatpush1.msra.mxu0 %v260
    %893 = vmatprep.subr.mxu0 0.0
    %894 = vmatpush1.msra.mxu0 %v265
    %895 = vmatprep.subr.mxu0 0.0
    %896 = vmatpush1.msra.mxu0 %v270
    %897 = vmatprep.subr.mxu0 0.0
    %898 = vmatpush1.msra.mxu0 %v275
    %899 = vmatprep.subr.mxu0 0.0
    %900 = vmatpush1.msra.mxu0 %v280
    %901 = vmatprep.subr.mxu0 0.0
    %902 = vmatpush1.msra.mxu0 %v285
    %903 = vmatprep.subr.mxu0 0.0
    %904 = vmatpush1.msra.mxu0 %v290
    %905 = vmatprep.subr.mxu0 0.0
    %906 = vmatpush1.msra.mxu0 %v295
    %907 = vmatprep.subr.mxu0 0.0
    %908 = vmatpush1.msra.mxu0 %v300
    %909 = vmatprep.subr.mxu0 0.0
    %910 = vmatpush1.msra.mxu0 %v305
    %911 = vmatprep.mubr.f32.mxu0 %v83
    %912 = vmatmul.mubr.f32.gmra.mrb[0].mxu0 %v82
    %v913 = vpop.f32.mrb[0].mxu0
    %v914 = vadd.f32 %v327, %v913
    %v915 = vpop.f32.mrb[0].mxu0
    %916 = vmatprep.mubr.f32.mxu0 %v85
    %917 = vmatmul.mubr.f32.gmra.mrb[0].mxu0 %v84
    %v918 = vpop.f32.mrb[0].mxu0
    %v919 = vadd.f32 %v327, %v918
    %v920 = vpop.f32.mrb[0].mxu0
    %921 = vmatprep.mubr.f32.mxu0 %v87
    %922 = vmatmul.mubr.f32.gmra.mrb[0].mxu0 %v86
    %v923 = vpop.f32.mrb[0].mxu0
    %v924 = vadd.f32 %v327, %v923
    %v925 = vpop.f32.mrb[0].mxu0
    %926 = vmatprep.mubr.f32.mxu0 %v89
    %927 = vmatmul.mubr.f32.gmra.mrb[0].mxu0 %v88
    %v928 = vpop.f32.mrb[0].mxu0
    %v929 = vadd.f32 %v327, %v928
    %v930 = vpop.f32.mrb[0].mxu0
    %931 = vmatprep.mubr.f32.mxu0 %v91
    %932 = vmatmul.mubr.f32.gmra.mrb[0].mxu0 %v90
    %v933 = vpop.f32.mrb[0].mxu0
    %v934 = vadd.f32 %v327, %v933
    %v935 = vpop.f32.mrb[0].mxu0
    %936 = vmatprep.mubr.f32.mxu0 %v93
    %937 = vmatmul.mubr.f32.gmra.mrb[0].mxu0 %v92
    %v938 = vpop.f32.mrb[0].mxu0
    %v939 = vadd.f32 %v327, %v938
    %v940 = vpop.f32.mrb[0].mxu0
    %941 = vmatprep.mubr.f32.mxu0 %v95
    %942 = vmatmul.mubr.f32.gmra.mrb[0].mxu0 %v94
    %v943 = vpop.f32.mrb[0].mxu0
    %v944 = vadd.f32 %v327, %v943
    %v945 = vpop.f32.mrb[0].mxu0
    %946 = vmatprep.mubr.f32.mxu0 %v97
    %947 = vmatmul.mubr.f32.gmra.mrb[0].mxu0 %v96
    %v948 = vpop.f32.mrb[0].mxu0
    %v949 = vadd.f32 %v327, %v948
    %v950 = vpop.f32.mrb[0].mxu0
    %951 = vmatprep.mubr.f32.mxu0 %v99
    %952 = vmatmul.mubr.f32.gmra.mrb[0].mxu0 %v98
    %v953 = vpop.f32.mrb[0].mxu0
    %v954 = vadd.f32 %v327, %v953
    %v955 = vpop.f32.mrb[0].mxu0
    %956 = vmatprep.mubr.f32.mxu0 %v101
    %957 = vmatmul.mubr.f32.gmra.mrb[0].mxu0 %v100
    %v958 = vpop.f32.mrb[0].mxu0
    %v959 = vadd.f32 %v327, %v958
    %v960 = vpop.f32.mrb[0].mxu0
    %961 = vmatprep.mubr.f32.mxu0 %v103
    %962 = vmatmul.mubr.f32.gmra.mrb[0].mxu0 %v102
    %v963 = vpop.f32.mrb[0].mxu0
    %v964 = vadd.f32 %v327, %v963
    %v965 = vpop.f32.mrb[0].mxu0
    %966 = vmatprep.mubr.f32.mxu0 %v105
    %967 = vmatmul.mubr.f32.gmra.mrb[0].mxu0 %v104
    %v968 = vpop.f32.mrb[0].mxu0
    %v969 = vadd.f32 %v327, %v968
    %v970 = vpop.f32.mrb[0].mxu0
    %971 = vmatprep.mubr.f32.mxu0 %v107
    %972 = vmatmul.mubr.f32.gmra.mrb[0].mxu0 %v106
    %v973 = vpop.f32.mrb[0].mxu0
    %v974 = vadd.f32 %v327, %v973
    %v975 = vpop.f32.mrb[0].mxu0
    %976 = vmatprep.mubr.f32.mxu0 %v109
    %977 = vmatmul.mubr.f32.gmra.mrb[0].mxu0 %v108
    %v978 = vpop.f32.mrb[0].mxu0
    %v979 = vadd.f32 %v327, %v978
    %v980 = vpop.f32.mrb[0].mxu0
    %981 = vmatprep.mubr.f32.mxu0 %v111
    %982 = vmatmul.mubr.f32.gmra.mrb[0].mxu0 %v110
    %v983 = vpop.f32.mrb[0].mxu0
    %v984 = vadd.f32 %v327, %v983
    %v985 = vpop.f32.mrb[0].mxu0
    %986 = vmatprep.mubr.f32.mxu0 %v113
    %987 = vmatmul.mubr.f32.gmra.mrb[0].mxu0 %v112
    %v988 = vpop.f32.mrb[0].mxu0
    %v989 = vadd.f32 %v327, %v988
    %v990 = vpop.f32.mrb[0].mxu0
    %991 = vmatprep.mubr.f32.mxu0 %v115
    %992 = vmatmul.mubr.f32.gmra.mrb[0].mxu0 %v114
    %v993 = vpop.f32.mrb[0].mxu0
    %v994 = vadd.f32 %v327, %v993
    %v995 = vpop.f32.mrb[0].mxu0
    %996 = vmatprep.mubr.f32.mxu0 %v117
    %997 = vmatmul.mubr.f32.gmra.mrb[0].mxu0 %v116
    %v998 = vpop.f32.mrb[0].mxu0
    %v999 = vadd.f32 %v327, %v998
    %v1000 = vpop.f32.mrb[0].mxu0
    %1001 = vmatprep.mubr.f32.mxu0 %v119
    %1002 = vmatmul.mubr.f32.gmra.mrb[0].mxu0 %v118
    %v1003 = vpop.f32.mrb[0].mxu0
    %v1004 = vadd.f32 %v327, %v1003
    %v1005 = vpop.f32.mrb[0].mxu0
    %1006 = vmatprep.mubr.f32.mxu0 %v121
    %1007 = vmatmul.mubr.f32.gmra.mrb[0].mxu0 %v120
    %v1008 = vpop.f32.mrb[0].mxu0
    %v1009 = vadd.f32 %v327, %v1008
    %v1010 = vpop.f32.mrb[0].mxu0
    %1011 = vmatprep.mubr.f32.mxu0 %v123
    %1012 = vmatmul.mubr.f32.gmra.mrb[0].mxu0 %v122
    %v1013 = vpop.f32.mrb[0].mxu0
    %v1014 = vadd.f32 %v327, %v1013
    %v1015 = vpop.f32.mrb[0].mxu0
    %1016 = vmatprep.mubr.f32.mxu0 %v125
    %1017 = vmatmul.mubr.f32.gmra.mrb[0].mxu0 %v124
    %v1018 = vpop.f32.mrb[0].mxu0
    %v1019 = vadd.f32 %v327, %v1018
    %v1020 = vpop.f32.mrb[0].mxu0
    %1021 = vmatprep.mubr.f32.mxu0 %v127
    %1022 = vmatmul.mubr.f32.gmra.mrb[0].mxu0 %v126
    %v1023 = vpop.f32.mrb[0].mxu0
    %v1024 = vadd.f32 %v327, %v1023
    %v1025 = vpop.f32.mrb[0].mxu0
    %1026 = vmatprep.mubr.f32.mxu0 %v129
    %1027 = vmatmul.mubr.f32.gmra.mrb[0].mxu0 %v128
    %v1028 = vpop.f32.mrb[0].mxu0
    %v1029 = vadd.f32 %v327, %v1028
    %v1030 = vpop.f32.mrb[0].mxu0
    %1031 = vmatprep.mubr.f32.mxu0 %v131
    %1032 = vmatmul.mubr.f32.gmra.mrb[0].mxu0 %v130
    %v1033 = vpop.f32.mrb[0].mxu0
    %v1034 = vadd.f32 %v327, %v1033
    %v1035 = vpop.f32.mrb[0].mxu0
    %1036 = vmatprep.mubr.f32.mxu0 %v133
    %1037 = vmatmul.mubr.f32.gmra.mrb[0].mxu0 %v132
    %v1038 = vpop.f32.mrb[0].mxu0
    %v1039 = vadd.f32 %v327, %v1038
    %v1040 = vpop.f32.mrb[0].mxu0
    %1041 = vmatprep.mubr.f32.mxu0 %v135
    %1042 = vmatmul.mubr.f32.gmra.mrb[0].mxu0 %v134
    %v1043 = vpop.f32.mrb[0].mxu0
    %v1044 = vadd.f32 %v327, %v1043
    %v1045 = vpop.f32.mrb[0].mxu0
    %1046 = vmatprep.mubr.f32.mxu0 %v137
    %1047 = vmatmul.mubr.f32.gmra.mrb[0].mxu0 %v136
    %v1048 = vpop.f32.mrb[0].mxu0
    %v1049 = vadd.f32 %v327, %v1048
    %v1050 = vpop.f32.mrb[0].mxu0
    %1051 = vmatprep.mubr.f32.mxu0 %v139
    %1052 = vmatmul.mubr.f32.gmra.mrb[0].mxu0 %v138
    %v1053 = vpop.f32.mrb[0].mxu0
    %v1054 = vadd.f32 %v327, %v1053
    %v1055 = vpop.f32.mrb[0].mxu0
    %1056 = vmatprep.mubr.f32.mxu0 %v141
    %1057 = vmatmul.mubr.f32.gmra.mrb[0].mxu0 %v140
    %v1058 = vpop.f32.mrb[0].mxu0
    %v1059 = vadd.f32 %v327, %v1058
    %v1060 = vpop.f32.mrb[0].mxu0
    %1061 = vmatprep.mubr.f32.mxu0 %v143
    %1062 = vmatmul.mubr.f32.gmra.mrb[0].mxu0 %v142
    %v1063 = vpop.f32.mrb[0].mxu0
    %v1064 = vadd.f32 %v327, %v1063
    %v1065 = vpop.f32.mrb[0].mxu0
    %1066 = vmatprep.mubr.f32.mxu0 %v145
    %1067 = vmatmul.mubr.f32.gmra.mrb[0].mxu0 %v144
    %v1068 = vpop.f32.mrb[0].mxu0
    %v1069 = vadd.f32 %v327, %v1068
    %v1070 = vpop.f32.mrb[0].mxu0
    %1071 = vdwg.mxu0
    %v1072 = vmax.f32 %v400, 0.0
    %v1073 = vmax.f32 %v406, 0.0
    %v1074 = vmax.f32 %v412, 0.0
    %v1075 = vmax.f32 %v418, 0.0
    %v1076 = vmax.f32 %v424, 0.0
    %v1077 = vmax.f32 %v430, 0.0
    %v1078 = vmax.f32 %v436, 0.0
    %v1079 = vmax.f32 %v442, 0.0
    %v1080 = vmax.f32 %v448, 0.0
    %v1081 = vmax.f32 %v454, 0.0
    %v1082 = vmax.f32 %v460, 0.0
    %v1083 = vmax.f32 %v466, 0.0
    %v1084 = vmax.f32 %v472, 0.0
    %v1085 = vmax.f32 %v478, 0.0
    %v1086 = vmax.f32 %v484, 0.0
    %v1087 = vmax.f32 %v490, 0.0
    %v1088 = vmax.f32 %v496, 0.0
    %v1089 = vmax.f32 %v502, 0.0
    %v1090 = vmax.f32 %v508, 0.0
    %v1091 = vmax.f32 %v514, 0.0
    %v1092 = vmax.f32 %v520, 0.0
    %v1093 = vmax.f32 %v526, 0.0
    %v1094 = vmax.f32 %v532, 0.0
    %v1095 = vmax.f32 %v538, 0.0
    %v1096 = vmax.f32 %v544, 0.0
    %v1097 = vmax.f32 %v550, 0.0
    %v1098 = vmax.f32 %v556, 0.0
    %v1099 = vmax.f32 %v562, 0.0
    %v1100 = vmax.f32 %v568, 0.0
    %v1101 = vmax.f32 %v574, 0.0
    %v1102 = vmax.f32 %v580, 0.0
    %v1103 = vmax.f32 %v586, 0.0
    %v1104 = vld [vmem:[#allocation7] sm:$0xff]
    %v1105 = vld [vmem:[#allocation7 + $0x8] sm:$0xff]
    %v1106 = vld [vmem:[#allocation7 + $0x10] sm:$0xff]
    %v1107 = vld [vmem:[#allocation7 + $0x18] sm:$0xff]
    %v1108 = vld [vmem:[#allocation7 + $0x20] sm:$0xff]
    %v1109 = vld [vmem:[#allocation7 + $0x28] sm:$0xff]
    %v1110 = vld [vmem:[#allocation7 + $0x30] sm:$0xff]
    %v1111 = vld [vmem:[#allocation7 + $0x38] sm:$0xff]
    %v1112 = vld [vmem:[#allocation7 + $0x40] sm:$0xff]
    %v1113 = vld [vmem:[#allocation7 + $0x48] sm:$0xff]
    %v1114 = vld [vmem:[#allocation7 + $0x50] sm:$0xff]
    %v1115 = vld [vmem:[#allocation7 + $0x58] sm:$0xff]
    %v1116 = vld [vmem:[#allocation7 + $0x60] sm:$0xff]
    %v1117 = vld [vmem:[#allocation7 + $0x68] sm:$0xff]
    %v1118 = vld [vmem:[#allocation7 + $0x70] sm:$0xff]
    %v1119 = vld [vmem:[#allocation7 + $0x78] sm:$0xff]
    %v1120 = vld [vmem:[#allocation7 + $0x80] sm:$0xff]
    %v1121 = vld [vmem:[#allocation7 + $0x88] sm:$0xff]
    %v1122 = vld [vmem:[#allocation7 + $0x90] sm:$0xff]
    %v1123 = vld [vmem:[#allocation7 + $0x98] sm:$0xff]
    %v1124 = vld [vmem:[#allocation7 + $0xa0] sm:$0xff]
    %v1125 = vld [vmem:[#allocation7 + $0xa8] sm:$0xff]
    %v1126 = vld [vmem:[#allocation7 + $0xb0] sm:$0xff]
    %v1127 = vld [vmem:[#allocation7 + $0xb8] sm:$0xff]
    %v1128 = vld [vmem:[#allocation7 + $0xc0] sm:$0xff]
    %v1129 = vld [vmem:[#allocation7 + $0xc8] sm:$0xff]
    %v1130 = vld [vmem:[#allocation7 + $0xd0] sm:$0xff]
    %v1131 = vld [vmem:[#allocation7 + $0xd8] sm:$0xff]
    %v1132 = vld [vmem:[#allocation7 + $0xe0] sm:$0xff]
    %v1133 = vld [vmem:[#allocation7 + $0xe8] sm:$0xff]
    %v1134 = vld [vmem:[#allocation7 + $0xf0] sm:$0xff]
    %v1135 = vld [vmem:[#allocation7 + $0xf8] sm:$0xff]
    %v1136 = vld [vmem:[#allocation7 + $0x100] sm:$0xff]
    %v1137 = vld [vmem:[#allocation7 + $0x108] sm:$0xff]
    %v1138 = vld [vmem:[#allocation7 + $0x110] sm:$0xff]
    %v1139 = vld [vmem:[#allocation7 + $0x118] sm:$0xff]
    %v1140 = vld [vmem:[#allocation7 + $0x120] sm:$0xff]
    %v1141 = vld [vmem:[#allocation7 + $0x128] sm:$0xff]
    %v1142 = vld [vmem:[#allocation7 + $0x130] sm:$0xff]
    %v1143 = vld [vmem:[#allocation7 + $0x138] sm:$0xff]
    %v1144 = vld [vmem:[#allocation7 + $0x140] sm:$0xff]
    %v1145 = vld [vmem:[#allocation7 + $0x148] sm:$0xff]
    %v1146 = vld [vmem:[#allocation7 + $0x150] sm:$0xff]
    %v1147 = vld [vmem:[#allocation7 + $0x158] sm:$0xff]
    %v1148 = vld [vmem:[#allocation7 + $0x160] sm:$0xff]
    %v1149 = vld [vmem:[#allocation7 + $0x168] sm:$0xff]
    %v1150 = vld [vmem:[#allocation7 + $0x170] sm:$0xff]
    %v1151 = vld [vmem:[#allocation7 + $0x178] sm:$0xff]
    %v1152 = vld [vmem:[#allocation7 + $0x180] sm:$0xff]
    %v1153 = vld [vmem:[#allocation7 + $0x188] sm:$0xff]
    %v1154 = vld [vmem:[#allocation7 + $0x190] sm:$0xff]
    %v1155 = vld [vmem:[#allocation7 + $0x198] sm:$0xff]
    %v1156 = vld [vmem:[#allocation7 + $0x1a0] sm:$0xff]
    %v1157 = vld [vmem:[#allocation7 + $0x1a8] sm:$0xff]
    %v1158 = vld [vmem:[#allocation7 + $0x1b0] sm:$0xff]
    %v1159 = vld [vmem:[#allocation7 + $0x1b8] sm:$0xff]
    %v1160 = vld [vmem:[#allocation7 + $0x1c0] sm:$0xff]
    %v1161 = vld [vmem:[#allocation7 + $0x1c8] sm:$0xff]
    %v1162 = vld [vmem:[#allocation7 + $0x1d0] sm:$0xff]
    %v1163 = vld [vmem:[#allocation7 + $0x1d8] sm:$0xff]
    %v1164 = vld [vmem:[#allocation7 + $0x1e0] sm:$0xff]
    %v1165 = vld [vmem:[#allocation7 + $0x1e8] sm:$0xff]
    %v1166 = vld [vmem:[#allocation7 + $0x1f0] sm:$0xff]
    %v1167 = vld [vmem:[#allocation7 + $0x1f8] sm:$0xff]
    %v1168 = vld [vmem:[#allocation7 + $0x200] sm:$0xff]
    %v1169 = vld [vmem:[#allocation7 + $0x208] sm:$0xff]
    %v1170 = vld [vmem:[#allocation7 + $0x210] sm:$0xff]
    %v1171 = vld [vmem:[#allocation7 + $0x218] sm:$0xff]
    %v1172 = vld [vmem:[#allocation7 + $0x220] sm:$0xff]
    %v1173 = vld [vmem:[#allocation7 + $0x228] sm:$0xff]
    %v1174 = vld [vmem:[#allocation7 + $0x230] sm:$0xff]
    %v1175 = vld [vmem:[#allocation7 + $0x238] sm:$0xff]
    %v1176 = vld [vmem:[#allocation7 + $0x240] sm:$0xff]
    %v1177 = vld [vmem:[#allocation7 + $0x248] sm:$0xff]
    %v1178 = vld [vmem:[#allocation7 + $0x250] sm:$0xff]
    %v1179 = vld [vmem:[#allocation7 + $0x258] sm:$0xff]
    %v1180 = vld [vmem:[#allocation7 + $0x260] sm:$0xff]
    %v1181 = vld [vmem:[#allocation7 + $0x268] sm:$0xff]
    %v1182 = vld [vmem:[#allocation7 + $0x270] sm:$0xff]
    %v1183 = vld [vmem:[#allocation7 + $0x278] sm:$0xff]
    %v1184 = vld [vmem:[#allocation7 + $0x280] sm:$0xff]
    %v1185 = vld [vmem:[#allocation7 + $0x288] sm:$0xff]
    %v1186 = vld [vmem:[#allocation7 + $0x290] sm:$0xff]
    %v1187 = vld [vmem:[#allocation7 + $0x298] sm:$0xff]
    %v1188 = vld [vmem:[#allocation7 + $0x2a0] sm:$0xff]
    %v1189 = vld [vmem:[#allocation7 + $0x2a8] sm:$0xff]
    %v1190 = vld [vmem:[#allocation7 + $0x2b0] sm:$0xff]
    %v1191 = vld [vmem:[#allocation7 + $0x2b8] sm:$0xff]
    %v1192 = vld [vmem:[#allocation7 + $0x2c0] sm:$0xff]
    %v1193 = vld [vmem:[#allocation7 + $0x2c8] sm:$0xff]
    %v1194 = vld [vmem:[#allocation7 + $0x2d0] sm:$0xff]
    %v1195 = vld [vmem:[#allocation7 + $0x2d8] sm:$0xff]
    %v1196 = vld [vmem:[#allocation7 + $0x2e0] sm:$0xff]
    %v1197 = vld [vmem:[#allocation7 + $0x2e8] sm:$0xff]
    %v1198 = vld [vmem:[#allocation7 + $0x2f0] sm:$0xff]
    %v1199 = vld [vmem:[#allocation7 + $0x2f8] sm:$0xff]
    %v1200 = vld [vmem:[%s4] sm:$0x3]
    %v1202 = vlaneseq
    %v1203 = vshrl.u32 %v1202, 7
    %v1204 = vsub.s32 0, %v1203
    %v1205 = vrot.slane %v1200, %v1204
    %v1206 = vlaneseq
    %v1207 = vshrl.u32 %v1206, 7
    %v1208 = vsub.s32 1, %v1207
    %v1209 = vrot.slane %v1200, %v1208
    %1212 = vmatprep.subr.mxu0 %v1105
    %1213 = vmatpush1.msra.mxu0 %v1104
    %1214 = vmatprep.subr.mxu0 %v1107
    %1215 = vmatpush1.msra.mxu0 %v1106
    %1216 = vmatprep.subr.mxu0 %v1109
    %1217 = vmatpush1.msra.mxu0 %v1108
    %1218 = vmatprep.subr.mxu0 %v1111
    %1219 = vmatpush1.msra.mxu0 %v1110
    %1220 = vmatprep.subr.mxu0 %v1113
    %1221 = vmatpush1.msra.mxu0 %v1112
    %1222 = vmatprep.subr.mxu0 %v1115
    %1223 = vmatpush1.msra.mxu0 %v1114
    %1224 = vmatprep.subr.mxu0 %v1117
    %1225 = vmatpush1.msra.mxu0 %v1116
    %1226 = vmatprep.subr.mxu0 %v1119
    %1227 = vmatpush1.msra.mxu0 %v1118
    %1228 = vmatprep.subr.mxu0 %v1121
    %1229 = vmatpush1.msra.mxu0 %v1120
    %1230 = vmatprep.subr.mxu0 %v1123
    %1231 = vmatpush1.msra.mxu0 %v1122
    %1232 = vmatprep.subr.mxu0 %v1125
    %1233 = vmatpush1.msra.mxu0 %v1124
    %1234 = vmatprep.subr.mxu0 %v1127
    %1235 = vmatpush1.msra.mxu0 %v1126
    %1236 = vmatprep.subr.mxu0 %v1129
    %1237 = vmatpush1.msra.mxu0 %v1128
    %1238 = vmatprep.subr.mxu0 %v1131
    %1239 = vmatpush1.msra.mxu0 %v1130
    %1240 = vmatprep.subr.mxu0 %v1133
    %1241 = vmatpush1.msra.mxu0 %v1132
    %1242 = vmatprep.subr.mxu0 %v1135
    %1243 = vmatpush1.msra.mxu0 %v1134
    %1244 = vmatprep.subr.mxu0 %v1137
    %1245 = vmatpush1.msra.mxu0 %v1136
    %1246 = vmatprep.subr.mxu0 %v1139
    %1247 = vmatpush1.msra.mxu0 %v1138
    %1248 = vmatprep.subr.mxu0 %v1141
    %1249 = vmatpush1.msra.mxu0 %v1140
    %1250 = vmatprep.subr.mxu0 %v1143
    %1251 = vmatpush1.msra.mxu0 %v1142
    %1252 = vmatprep.subr.mxu0 %v1145
    %1253 = vmatpush1.msra.mxu0 %v1144
    %1254 = vmatprep.subr.mxu0 %v1147
    %1255 = vmatpush1.msra.mxu0 %v1146
    %1256 = vmatprep.subr.mxu0 %v1149
    %1257 = vmatpush1.msra.mxu0 %v1148
    %1258 = vmatprep.subr.mxu0 %v1151
    %1259 = vmatpush1.msra.mxu0 %v1150
    %1260 = vmatprep.subr.mxu0 %v1153
    %1261 = vmatpush1.msra.mxu0 %v1152
    %1262 = vmatprep.subr.mxu0 %v1155
    %1263 = vmatpush1.msra.mxu0 %v1154
    %1264 = vmatprep.subr.mxu0 %v1157
    %1265 = vmatpush1.msra.mxu0 %v1156
    %1266 = vmatprep.subr.mxu0 %v1159
    %1267 = vmatpush1.msra.mxu0 %v1158
    %1268 = vmatprep.subr.mxu0 %v1161
    %1269 = vmatpush1.msra.mxu0 %v1160
    %1270 = vmatprep.subr.mxu0 %v1163
    %1271 = vmatpush1.msra.mxu0 %v1162
    %1272 = vmatprep.subr.mxu0 %v1165
    %1273 = vmatpush1.msra.mxu0 %v1164
    %1274 = vmatprep.subr.mxu0 %v1167
    %1275 = vmatpush1.msra.mxu0 %v1166
    %1276 = vmatprep.mubr.f32.mxu0 %v659
    %1277 = vmatmul.mubr.f32.gmra.mrb[0].mxu0 %v1072
    %v1278 = vpop.f32.mrb[0].mxu0
    %v1279 = vadd.f32 %v1205, %v1278
    %v1280 = vpop.f32.mrb[0].mxu0
    %v1281 = vadd.f32 %v1209, %v1280
    %1282 = vmatprep.mubr.f32.mxu0 %v665
    %1283 = vmatmul.mubr.f32.gmra.mrb[0].mxu0 %v1073
    %v1284 = vpop.f32.mrb[0].mxu0
    %v1285 = vadd.f32 %v1205, %v1284
    %v1286 = vpop.f32.mrb[0].mxu0
    %v1287 = vadd.f32 %v1209, %v1286
    %1288 = vmatprep.mubr.f32.mxu0 %v671
    %1289 = vmatmul.mubr.f32.gmra.mrb[0].mxu0 %v1074
    %v1290 = vpop.f32.mrb[0].mxu0
    %v1291 = vadd.f32 %v1205, %v1290
    %v1292 = vpop.f32.mrb[0].mxu0
    %v1293 = vadd.f32 %v1209, %v1292
    %1294 = vmatprep.mubr.f32.mxu0 %v677
    %1295 = vmatmul.mubr.f32.gmra.mrb[0].mxu0 %v1075
    %v1296 = vpop.f32.mrb[0].mxu0
    %v1297 = vadd.f32 %v1205, %v1296
    %v1298 = vpop.f32.mrb[0].mxu0
    %v1299 = vadd.f32 %v1209, %v1298
    %1300 = vmatprep.mubr.f32.mxu0 %v683
    %1301 = vmatmul.mubr.f32.gmra.mrb[0].mxu0 %v1076
    %v1302 = vpop.f32.mrb[0].mxu0
    %v1303 = vadd.f32 %v1205, %v1302
    %v1304 = vpop.f32.mrb[0].mxu0
    %v1305 = vadd.f32 %v1209, %v1304
    %1306 = vmatprep.mubr.f32.mxu0 %v689
    %1307 = vmatmul.mubr.f32.gmra.mrb[0].mxu0 %v1077
    %v1308 = vpop.f32.mrb[0].mxu0
    %v1309 = vadd.f32 %v1205, %v1308
    %v1310 = vpop.f32.mrb[0].mxu0
    %v1311 = vadd.f32 %v1209, %v1310
    %1312 = vmatprep.mubr.f32.mxu0 %v695
    %1313 = vmatmul.mubr.f32.gmra.mrb[0].mxu0 %v1078
    %v1314 = vpop.f32.mrb[0].mxu0
    %v1315 = vadd.f32 %v1205, %v1314
    %v1316 = vpop.f32.mrb[0].mxu0
    %v1317 = vadd.f32 %v1209, %v1316
    %1318 = vmatprep.mubr.f32.mxu0 %v701
    %1319 = vmatmul.mubr.f32.gmra.mrb[0].mxu0 %v1079
    %v1320 = vpop.f32.mrb[0].mxu0
    %v1321 = vadd.f32 %v1205, %v1320
    %v1322 = vpop.f32.mrb[0].mxu0
    %v1323 = vadd.f32 %v1209, %v1322
    %1324 = vmatprep.mubr.f32.mxu0 %v707
    %1325 = vmatmul.mubr.f32.gmra.mrb[0].mxu0 %v1080
    %v1326 = vpop.f32.mrb[0].mxu0
    %v1327 = vadd.f32 %v1205, %v1326
    %v1328 = vpop.f32.mrb[0].mxu0
    %v1329 = vadd.f32 %v1209, %v1328
    %1330 = vmatprep.mubr.f32.mxu0 %v713
    %1331 = vmatmul.mubr.f32.gmra.mrb[0].mxu0 %v1081
    %v1332 = vpop.f32.mrb[0].mxu0
    %v1333 = vadd.f32 %v1205, %v1332
    %v1334 = vpop.f32.mrb[0].mxu0
    %v1335 = vadd.f32 %v1209, %v1334
    %1336 = vmatprep.mubr.f32.mxu0 %v719
    %1337 = vmatmul.mubr.f32.gmra.mrb[0].mxu0 %v1082
    %v1338 = vpop.f32.mrb[0].mxu0
    %v1339 = vadd.f32 %v1205, %v1338
    %v1340 = vpop.f32.mrb[0].mxu0
    %v1341 = vadd.f32 %v1209, %v1340
    %1342 = vmatprep.mubr.f32.mxu0 %v725
    %1343 = vmatmul.mubr.f32.gmra.mrb[0].mxu0 %v1083
    %v1344 = vpop.f32.mrb[0].mxu0
    %v1345 = vadd.f32 %v1205, %v1344
    %v1346 = vpop.f32.mrb[0].mxu0
    %v1347 = vadd.f32 %v1209, %v1346
    %1348 = vmatprep.mubr.f32.mxu0 %v731
    %1349 = vmatmul.mubr.f32.gmra.mrb[0].mxu0 %v1084
    %v1350 = vpop.f32.mrb[0].mxu0
    %v1351 = vadd.f32 %v1205, %v1350
    %v1352 = vpop.f32.mrb[0].mxu0
    %v1353 = vadd.f32 %v1209, %v1352
    %1354 = vmatprep.mubr.f32.mxu0 %v737
    %1355 = vmatmul.mubr.f32.gmra.mrb[0].mxu0 %v1085
    %v1356 = vpop.f32.mrb[0].mxu0
    %v1357 = vadd.f32 %v1205, %v1356
    %v1358 = vpop.f32.mrb[0].mxu0
    %v1359 = vadd.f32 %v1209, %v1358
    %1360 = vmatprep.mubr.f32.mxu0 %v743
    %1361 = vmatmul.mubr.f32.gmra.mrb[0].mxu0 %v1086
    %v1362 = vpop.f32.mrb[0].mxu0
    %v1363 = vadd.f32 %v1205, %v1362
    %v1364 = vpop.f32.mrb[0].mxu0
    %v1365 = vadd.f32 %v1209, %v1364
    %1366 = vmatprep.mubr.f32.mxu0 %v749
    %1367 = vmatmul.mubr.f32.gmra.mrb[0].mxu0 %v1087
    %v1368 = vpop.f32.mrb[0].mxu0
    %v1369 = vadd.f32 %v1205, %v1368
    %v1370 = vpop.f32.mrb[0].mxu0
    %v1371 = vadd.f32 %v1209, %v1370
    %1372 = vmatprep.mubr.f32.mxu0 %v755
    %1373 = vmatmul.mubr.f32.gmra.mrb[0].mxu0 %v1088
    %v1374 = vpop.f32.mrb[0].mxu0
    %v1375 = vadd.f32 %v1205, %v1374
    %v1376 = vpop.f32.mrb[0].mxu0
    %v1377 = vadd.f32 %v1209, %v1376
    %1378 = vmatprep.mubr.f32.mxu0 %v761
    %1379 = vmatmul.mubr.f32.gmra.mrb[0].mxu0 %v1089
    %v1380 = vpop.f32.mrb[0].mxu0
    %v1381 = vadd.f32 %v1205, %v1380
    %v1382 = vpop.f32.mrb[0].mxu0
    %v1383 = vadd.f32 %v1209, %v1382
    %1384 = vmatprep.mubr.f32.mxu0 %v767
    %1385 = vmatmul.mubr.f32.gmra.mrb[0].mxu0 %v1090
    %v1386 = vpop.f32.mrb[0].mxu0
    %v1387 = vadd.f32 %v1205, %v1386
    %v1388 = vpop.f32.mrb[0].mxu0
    %v1389 = vadd.f32 %v1209, %v1388
    %1390 = vmatprep.mubr.f32.mxu0 %v773
    %1391 = vmatmul.mubr.f32.gmra.mrb[0].mxu0 %v1091
    %v1392 = vpop.f32.mrb[0].mxu0
    %v1393 = vadd.f32 %v1205, %v1392
    %v1394 = vpop.f32.mrb[0].mxu0
    %v1395 = vadd.f32 %v1209, %v1394
    %1396 = vmatprep.mubr.f32.mxu0 %v779
    %1397 = vmatmul.mubr.f32.gmra.mrb[0].mxu0 %v1092
    %v1398 = vpop.f32.mrb[0].mxu0
    %v1399 = vadd.f32 %v1205, %v1398
    %v1400 = vpop.f32.mrb[0].mxu0
    %v1401 = vadd.f32 %v1209, %v1400
    %1402 = vmatprep.mubr.f32.mxu0 %v785
    %1403 = vmatmul.mubr.f32.gmra.mrb[0].mxu0 %v1093
    %v1404 = vpop.f32.mrb[0].mxu0
    %v1405 = vadd.f32 %v1205, %v1404
    %v1406 = vpop.f32.mrb[0].mxu0
    %v1407 = vadd.f32 %v1209, %v1406
    %1408 = vmatprep.mubr.f32.mxu0 %v791
    %1409 = vmatmul.mubr.f32.gmra.mrb[0].mxu0 %v1094
    %v1410 = vpop.f32.mrb[0].mxu0
    %v1411 = vadd.f32 %v1205, %v1410
    %v1412 = vpop.f32.mrb[0].mxu0
    %v1413 = vadd.f32 %v1209, %v1412
    %1414 = vmatprep.mubr.f32.mxu0 %v797
    %1415 = vmatmul.mubr.f32.gmra.mrb[0].mxu0 %v1095
    %v1416 = vpop.f32.mrb[0].mxu0
    %v1417 = vadd.f32 %v1205, %v1416
    %v1418 = vpop.f32.mrb[0].mxu0
    %v1419 = vadd.f32 %v1209, %v1418
    %1420 = vmatprep.mubr.f32.mxu0 %v803
    %1421 = vmatmul.mubr.f32.gmra.mrb[0].mxu0 %v1096
    %v1422 = vpop.f32.mrb[0].mxu0
    %v1423 = vadd.f32 %v1205, %v1422
    %v1424 = vpop.f32.mrb[0].mxu0
    %v1425 = vadd.f32 %v1209, %v1424
    %1426 = vmatprep.mubr.f32.mxu0 %v809
    %1427 = vmatmul.mubr.f32.gmra.mrb[0].mxu0 %v1097
    %v1428 = vpop.f32.mrb[0].mxu0
    %v1429 = vadd.f32 %v1205, %v1428
    %v1430 = vpop.f32.mrb[0].mxu0
    %v1431 = vadd.f32 %v1209, %v1430
    %1432 = vmatprep.mubr.f32.mxu0 %v815
    %1433 = vmatmul.mubr.f32.gmra.mrb[0].mxu0 %v1098
    %v1434 = vpop.f32.mrb[0].mxu0
    %v1435 = vadd.f32 %v1205, %v1434
    %v1436 = vpop.f32.mrb[0].mxu0
    %v1437 = vadd.f32 %v1209, %v1436
    %1438 = vmatprep.mubr.f32.mxu0 %v821
    %1439 = vmatmul.mubr.f32.gmra.mrb[0].mxu0 %v1099
    %v1440 = vpop.f32.mrb[0].mxu0
    %v1441 = vadd.f32 %v1205, %v1440
    %v1442 = vpop.f32.mrb[0].mxu0
    %v1443 = vadd.f32 %v1209, %v1442
    %1444 = vmatprep.mubr.f32.mxu0 %v827
    %1445 = vmatmul.mubr.f32.gmra.mrb[0].mxu0 %v1100
    %v1446 = vpop.f32.mrb[0].mxu0
    %v1447 = vadd.f32 %v1205, %v1446
    %v1448 = vpop.f32.mrb[0].mxu0
    %v1449 = vadd.f32 %v1209, %v1448
    %1450 = vmatprep.mubr.f32.mxu0 %v833
    %1451 = vmatmul.mubr.f32.gmra.mrb[0].mxu0 %v1101
    %v1452 = vpop.f32.mrb[0].mxu0
    %v1453 = vadd.f32 %v1205, %v1452
    %v1454 = vpop.f32.mrb[0].mxu0
    %v1455 = vadd.f32 %v1209, %v1454
    %1456 = vmatprep.mubr.f32.mxu0 %v839
    %1457 = vmatmul.mubr.f32.gmra.mrb[0].mxu0 %v1102
    %v1458 = vpop.f32.mrb[0].mxu0
    %v1459 = vadd.f32 %v1205, %v1458
    %v1460 = vpop.f32.mrb[0].mxu0
    %v1461 = vadd.f32 %v1209, %v1460
    %1462 = vmatprep.mubr.f32.mxu0 %v845
    %1463 = vmatmul.mubr.f32.gmra.mrb[0].mxu0 %v1103
    %v1464 = vpop.f32.mrb[0].mxu0
    %v1465 = vadd.f32 %v1205, %v1464
    %v1466 = vpop.f32.mrb[0].mxu0
    %v1467 = vadd.f32 %v1209, %v1466
    %1468 = vdwg.mxu0
    %1469 = vmatprep.subr.mxu0 %v1169
    %1470 = vmatpush1.msra.mxu0 %v1168
    %1471 = vmatprep.subr.mxu0 %v1171
    %1472 = vmatpush1.msra.mxu0 %v1170
    %1473 = vmatprep.subr.mxu0 %v1173
    %1474 = vmatpush1.msra.mxu0 %v1172
    %1475 = vmatprep.subr.mxu0 %v1175
    %1476 = vmatpush1.msra.mxu0 %v1174
    %1477 = vmatprep.subr.mxu0 %v1177
    %1478 = vmatpush1.msra.mxu0 %v1176
    %1479 = vmatprep.subr.mxu0 %v1179
    %1480 = vmatpush1.msra.mxu0 %v1178
    %1481 = vmatprep.subr.mxu0 %v1181
    %1482 = vmatpush1.msra.mxu0 %v1180
    %1483 = vmatprep.subr.mxu0 %v1183
    %1484 = vmatpush1.msra.mxu0 %v1182
    %1485 = vmatprep.subr.mxu0 %v1185
    %1486 = vmatpush1.msra.mxu0 %v1184
    %1487 = vmatprep.subr.mxu0 %v1187
    %1488 = vmatpush1.msra.mxu0 %v1186
    %1489 = vmatprep.subr.mxu0 %v1189
    %1490 = vmatpush1.msra.mxu0 %v1188
    %1491 = vmatprep.subr.mxu0 %v1191
    %1492 = vmatpush1.msra.mxu0 %v1190
    %1493 = vmatprep.subr.mxu0 %v1193
    %1494 = vmatpush1.msra.mxu0 %v1192
    %1495 = vmatprep.subr.mxu0 %v1195
    %1496 = vmatpush1.msra.mxu0 %v1194
    %1497 = vmatprep.subr.mxu0 %v1197
    %1498 = vmatpush1.msra.mxu0 %v1196
    %1499 = vmatprep.subr.mxu0 %v1199
    %1500 = vmatpush1.msra.mxu0 %v1198
    %1501 = vmatprep.subr.mxu0 0.0
    %1502 = vmatpush1.msra.mxu0 0.0
    %1503 = vmatprep.subr.mxu0 0.0
    %1504 = vmatpush1.msra.mxu0 0.0
    %1505 = vmatprep.subr.mxu0 0.0
    %1506 = vmatpush1.msra.mxu0 0.0
    %1507 = vmatprep.subr.mxu0 0.0
    %1508 = vmatpush1.msra.mxu0 0.0
    %1509 = vmatprep.subr.mxu0 0.0
    %1510 = vmatpush1.msra.mxu0 0.0
    %1511 = vmatprep.subr.mxu0 0.0
    %1512 = vmatpush1.msra.mxu0 0.0
    %1513 = vmatprep.subr.mxu0 0.0
    %1514 = vmatpush1.msra.mxu0 0.0
    %1515 = vmatprep.subr.mxu0 0.0
    %1516 = vmatpush1.msra.mxu0 0.0
    %1517 = vmatprep.subr.mxu0 0.0
    %1518 = vmatpush1.msra.mxu0 0.0
    %1519 = vmatprep.subr.mxu0 0.0
    %1520 = vmatpush1.msra.mxu0 0.0
    %1521 = vmatprep.subr.mxu0 0.0
    %1522 = vmatpush1.msra.mxu0 0.0
    %1523 = vmatprep.subr.mxu0 0.0
    %1524 = vmatpush1.msra.mxu0 0.0
    %1525 = vmatprep.subr.mxu0 0.0
    %1526 = vmatpush1.msra.mxu0 0.0
    %1527 = vmatprep.subr.mxu0 0.0
    %1528 = vmatpush1.msra.mxu0 0.0
    %1529 = vmatprep.subr.mxu0 0.0
    %1530 = vmatpush1.msra.mxu0 0.0
    %1531 = vmatprep.subr.mxu0 0.0
    %1532 = vmatpush1.msra.mxu0 0.0
    %1533 = vmatprep.mubr.f32.mxu0 0.0
    %1534 = vmatmul.mubr.f32.gmra.mrb[0].mxu0 %v914
    %v1535 = vpop.f32.mrb[0].mxu0
    %v1536 = vadd.f32 %v1279, %v1535
    %v1537 = vpop.f32.mrb[0].mxu0
    %v1538 = vadd.f32 %v1281, %v1537
    %1539 = vmatprep.mubr.f32.mxu0 0.0
    %1540 = vmatmul.mubr.f32.gmra.mrb[0].mxu0 %v919
    %v1541 = vpop.f32.mrb[0].mxu0
    %v1542 = vadd.f32 %v1285, %v1541
    %v1543 = vpop.f32.mrb[0].mxu0
    %v1544 = vadd.f32 %v1287, %v1543
    %1545 = vmatprep.mubr.f32.mxu0 0.0
    %1546 = vmatmul.mubr.f32.gmra.mrb[0].mxu0 %v924
    %v1547 = vpop.f32.mrb[0].mxu0
    %v1548 = vadd.f32 %v1291, %v1547
    %v1549 = vpop.f32.mrb[0].mxu0
    %v1550 = vadd.f32 %v1293, %v1549
    %1551 = vmatprep.mubr.f32.mxu0 0.0
    %1552 = vmatmul.mubr.f32.gmra.mrb[0].mxu0 %v929
    %v1553 = vpop.f32.mrb[0].mxu0
    %v1554 = vadd.f32 %v1297, %v1553
    %v1555 = vpop.f32.mrb[0].mxu0
    %v1556 = vadd.f32 %v1299, %v1555
    %1557 = vmatprep.mubr.f32.mxu0 0.0
    %1558 = vmatmul.mubr.f32.gmra.mrb[0].mxu0 %v934
    %v1559 = vpop.f32.mrb[0].mxu0
    %v1560 = vadd.f32 %v1303, %v1559
    %v1561 = vpop.f32.mrb[0].mxu0
    %v1562 = vadd.f32 %v1305, %v1561
    %1563 = vmatprep.mubr.f32.mxu0 0.0
    %1564 = vmatmul.mubr.f32.gmra.mrb[0].mxu0 %v939
    %v1565 = vpop.f32.mrb[0].mxu0
    %v1566 = vadd.f32 %v1309, %v1565
    %v1567 = vpop.f32.mrb[0].mxu0
    %v1568 = vadd.f32 %v1311, %v1567
    %1569 = vmatprep.mubr.f32.mxu0 0.0
    %1570 = vmatmul.mubr.f32.gmra.mrb[0].mxu0 %v944
    %v1571 = vpop.f32.mrb[0].mxu0
    %v1572 = vadd.f32 %v1315, %v1571
    %v1573 = vpop.f32.mrb[0].mxu0
    %v1574 = vadd.f32 %v1317, %v1573
    %1575 = vmatprep.mubr.f32.mxu0 0.0
    %1576 = vmatmul.mubr.f32.gmra.mrb[0].mxu0 %v949
    %v1577 = vpop.f32.mrb[0].mxu0
    %v1578 = vadd.f32 %v1321, %v1577
    %v1579 = vpop.f32.mrb[0].mxu0
    %v1580 = vadd.f32 %v1323, %v1579
    %1581 = vmatprep.mubr.f32.mxu0 0.0
    %1582 = vmatmul.mubr.f32.gmra.mrb[0].mxu0 %v954
    %v1583 = vpop.f32.mrb[0].mxu0
    %v1584 = vadd.f32 %v1327, %v1583
    %v1585 = vpop.f32.mrb[0].mxu0
    %v1586 = vadd.f32 %v1329, %v1585
    %1587 = vmatprep.mubr.f32.mxu0 0.0
    %1588 = vmatmul.mubr.f32.gmra.mrb[0].mxu0 %v959
    %v1589 = vpop.f32.mrb[0].mxu0
    %v1590 = vadd.f32 %v1333, %v1589
    %v1591 = vpop.f32.mrb[0].mxu0
    %v1592 = vadd.f32 %v1335, %v1591
    %1593 = vmatprep.mubr.f32.mxu0 0.0
    %1594 = vmatmul.mubr.f32.gmra.mrb[0].mxu0 %v964
    %v1595 = vpop.f32.mrb[0].mxu0
    %v1596 = vadd.f32 %v1339, %v1595
    %v1597 = vpop.f32.mrb[0].mxu0
    %v1598 = vadd.f32 %v1341, %v1597
    %1599 = vmatprep.mubr.f32.mxu0 0.0
    %1600 = vmatmul.mubr.f32.gmra.mrb[0].mxu0 %v969
    %v1601 = vpop.f32.mrb[0].mxu0
    %v1602 = vadd.f32 %v1345, %v1601
    %v1603 = vpop.f32.mrb[0].mxu0
    %v1604 = vadd.f32 %v1347, %v1603
    %1605 = vmatprep.mubr.f32.mxu0 0.0
    %1606 = vmatmul.mubr.f32.gmra.mrb[0].mxu0 %v974
    %v1607 = vpop.f32.mrb[0].mxu0
    %v1608 = vadd.f32 %v1351, %v1607
    %v1609 = vpop.f32.mrb[0].mxu0
    %v1610 = vadd.f32 %v1353, %v1609
    %1611 = vmatprep.mubr.f32.mxu0 0.0
    %1612 = vmatmul.mubr.f32.gmra.mrb[0].mxu0 %v979
    %v1613 = vpop.f32.mrb[0].mxu0
    %v1614 = vadd.f32 %v1357, %v1613
    %v1615 = vpop.f32.mrb[0].mxu0
    %v1616 = vadd.f32 %v1359, %v1615
    %1617 = vmatprep.mubr.f32.mxu0 0.0
    %1618 = vmatmul.mubr.f32.gmra.mrb[0].mxu0 %v984
    %v1619 = vpop.f32.mrb[0].mxu0
    %v1620 = vadd.f32 %v1363, %v1619
    %v1621 = vpop.f32.mrb[0].mxu0
    %v1622 = vadd.f32 %v1365, %v1621
    %1623 = vmatprep.mubr.f32.mxu0 0.0
    %1624 = vmatmul.mubr.f32.gmra.mrb[0].mxu0 %v989
    %v1625 = vpop.f32.mrb[0].mxu0
    %v1626 = vadd.f32 %v1369, %v1625
    %v1627 = vpop.f32.mrb[0].mxu0
    %v1628 = vadd.f32 %v1371, %v1627
    %1629 = vmatprep.mubr.f32.mxu0 0.0
    %1630 = vmatmul.mubr.f32.gmra.mrb[0].mxu0 %v994
    %v1631 = vpop.f32.mrb[0].mxu0
    %v1632 = vadd.f32 %v1375, %v1631
    %v1633 = vpop.f32.mrb[0].mxu0
    %v1634 = vadd.f32 %v1377, %v1633
    %1635 = vmatprep.mubr.f32.mxu0 0.0
    %1636 = vmatmul.mubr.f32.gmra.mrb[0].mxu0 %v999
    %v1637 = vpop.f32.mrb[0].mxu0
    %v1638 = vadd.f32 %v1381, %v1637
    %v1639 = vpop.f32.mrb[0].mxu0
    %v1640 = vadd.f32 %v1383, %v1639
    %1641 = vmatprep.mubr.f32.mxu0 0.0
    %1642 = vmatmul.mubr.f32.gmra.mrb[0].mxu0 %v1004
    %v1643 = vpop.f32.mrb[0].mxu0
    %v1644 = vadd.f32 %v1387, %v1643
    %v1645 = vpop.f32.mrb[0].mxu0
    %v1646 = vadd.f32 %v1389, %v1645
    %1647 = vmatprep.mubr.f32.mxu0 0.0
    %1648 = vmatmul.mubr.f32.gmra.mrb[0].mxu0 %v1009
    %v1649 = vpop.f32.mrb[0].mxu0
    %v1650 = vadd.f32 %v1393, %v1649
    %v1651 = vpop.f32.mrb[0].mxu0
    %v1652 = vadd.f32 %v1395, %v1651
    %1653 = vmatprep.mubr.f32.mxu0 0.0
    %1654 = vmatmul.mubr.f32.gmra.mrb[0].mxu0 %v1014
    %v1655 = vpop.f32.mrb[0].mxu0
    %v1656 = vadd.f32 %v1399, %v1655
    %v1657 = vpop.f32.mrb[0].mxu0
    %v1658 = vadd.f32 %v1401, %v1657
    %1659 = vmatprep.mubr.f32.mxu0 0.0
    %1660 = vmatmul.mubr.f32.gmra.mrb[0].mxu0 %v1019
    %v1661 = vpop.f32.mrb[0].mxu0
    %v1662 = vadd.f32 %v1405, %v1661
    %v1663 = vpop.f32.mrb[0].mxu0
    %v1664 = vadd.f32 %v1407, %v1663
    %1665 = vmatprep.mubr.f32.mxu0 0.0
    %1666 = vmatmul.mubr.f32.gmra.mrb[0].mxu0 %v1024
    %v1667 = vpop.f32.mrb[0].mxu0
    %v1668 = vadd.f32 %v1411, %v1667
    %v1669 = vpop.f32.mrb[0].mxu0
    %v1670 = vadd.f32 %v1413, %v1669
    %1671 = vmatprep.mubr.f32.mxu0 0.0
    %1672 = vmatmul.mubr.f32.gmra.mrb[0].mxu0 %v1029
    %v1673 = vpop.f32.mrb[0].mxu0
    %v1674 = vadd.f32 %v1417, %v1673
    %v1675 = vpop.f32.mrb[0].mxu0
    %v1676 = vadd.f32 %v1419, %v1675
    %1677 = vmatprep.mubr.f32.mxu0 0.0
    %1678 = vmatmul.mubr.f32.gmra.mrb[0].mxu0 %v1034
    %v1679 = vpop.f32.mrb[0].mxu0
    %v1680 = vadd.f32 %v1423, %v1679
    %v1681 = vpop.f32.mrb[0].mxu0
    %v1682 = vadd.f32 %v1425, %v1681
    %1683 = vmatprep.mubr.f32.mxu0 0.0
    %1684 = vmatmul.mubr.f32.gmra.mrb[0].mxu0 %v1039
    %v1685 = vpop.f32.mrb[0].mxu0
    %v1686 = vadd.f32 %v1429, %v1685
    %v1687 = vpop.f32.mrb[0].mxu0
    %v1688 = vadd.f32 %v1431, %v1687
    %1689 = vmatprep.mubr.f32.mxu0 0.0
    %1690 = vmatmul.mubr.f32.gmra.mrb[0].mxu0 %v1044
    %v1691 = vpop.f32.mrb[0].mxu0
    %v1692 = vadd.f32 %v1435, %v1691
    %v1693 = vpop.f32.mrb[0].mxu0
    %v1694 = vadd.f32 %v1437, %v1693
    %1695 = vmatprep.mubr.f32.mxu0 0.0
    %1696 = vmatmul.mubr.f32.gmra.mrb[0].mxu0 %v1049
    %v1697 = vpop.f32.mrb[0].mxu0
    %v1698 = vadd.f32 %v1441, %v1697
    %v1699 = vpop.f32.mrb[0].mxu0
    %v1700 = vadd.f32 %v1443, %v1699
    %1701 = vmatprep.mubr.f32.mxu0 0.0
    %1702 = vmatmul.mubr.f32.gmra.mrb[0].mxu0 %v1054
    %v1703 = vpop.f32.mrb[0].mxu0
    %v1704 = vadd.f32 %v1447, %v1703
    %v1705 = vpop.f32.mrb[0].mxu0
    %v1706 = vadd.f32 %v1449, %v1705
    %1707 = vmatprep.mubr.f32.mxu0 0.0
    %1708 = vmatmul.mubr.f32.gmra.mrb[0].mxu0 %v1059
    %v1709 = vpop.f32.mrb[0].mxu0
    %v1710 = vadd.f32 %v1453, %v1709
    %v1711 = vpop.f32.mrb[0].mxu0
    %v1712 = vadd.f32 %v1455, %v1711
    %1713 = vmatprep.mubr.f32.mxu0 0.0
    %1714 = vmatmul.mubr.f32.gmra.mrb[0].mxu0 %v1064
    %v1715 = vpop.f32.mrb[0].mxu0
    %v1716 = vadd.f32 %v1459, %v1715
    %v1717 = vpop.f32.mrb[0].mxu0
    %v1718 = vadd.f32 %v1461, %v1717
    %1719 = vmatprep.mubr.f32.mxu0 0.0
    %1720 = vmatmul.mubr.f32.gmra.mrb[0].mxu0 %v1069
    %v1721 = vpop.f32.mrb[0].mxu0
    %v1722 = vadd.f32 %v1465, %v1721
    %v1723 = vpop.f32.mrb[0].mxu0
    %v1724 = vadd.f32 %v1467, %v1723
    %1725 = vdwg.mxu0
    %v1726 = vxor.u32 %v1536, 2147483648
    %v1727 = vxor.u32 %v1542, 2147483648
    %v1728 = vxor.u32 %v1548, 2147483648
    %v1729 = vxor.u32 %v1554, 2147483648
    %v1730 = vxor.u32 %v1560, 2147483648
    %v1731 = vxor.u32 %v1566, 2147483648
    %v1732 = vxor.u32 %v1572, 2147483648
    %v1733 = vxor.u32 %v1578, 2147483648
    %v1734 = vxor.u32 %v1584, 2147483648
    %v1735 = vxor.u32 %v1590, 2147483648
    %v1736 = vxor.u32 %v1596, 2147483648
    %v1737 = vxor.u32 %v1602, 2147483648
    %v1738 = vxor.u32 %v1608, 2147483648
    %v1739 = vxor.u32 %v1614, 2147483648
    %v1740 = vxor.u32 %v1620, 2147483648
    %v1741 = vxor.u32 %v1626, 2147483648
    %v1742 = vxor.u32 %v1632, 2147483648
    %v1743 = vxor.u32 %v1638, 2147483648
    %v1744 = vxor.u32 %v1644, 2147483648
    %v1745 = vxor.u32 %v1650, 2147483648
    %v1746 = vxor.u32 %v1656, 2147483648
    %v1747 = vxor.u32 %v1662, 2147483648
    %v1748 = vxor.u32 %v1668, 2147483648
    %v1749 = vxor.u32 %v1674, 2147483648
    %v1750 = vxor.u32 %v1680, 2147483648
    %v1751 = vxor.u32 %v1686, 2147483648
    %v1752 = vxor.u32 %v1692, 2147483648
    %v1753 = vxor.u32 %v1698, 2147483648
    %v1754 = vxor.u32 %v1704, 2147483648
    %v1755 = vxor.u32 %v1710, 2147483648
    %v1756 = vxor.u32 %v1716, 2147483648
    %v1757 = vxor.u32 %v1722, 2147483648
    %v1758 = vmul.f32 %v1726, 1.442695
    %v1759 = vpow.pop %v1758
    %v1760 = vmul.f32 %v1727, 1.442695
    %v1761 = vpow.pop %v1760
    %v1762 = vmul.f32 %v1728, 1.442695
    %v1763 = vpow.pop %v1762
    %v1764 = vmul.f32 %v1729, 1.442695
    %v1765 = vpow.pop %v1764
    %v1766 = vmul.f32 %v1730, 1.442695
    %v1767 = vpow.pop %v1766
    %v1768 = vmul.f32 %v1731, 1.442695
    %v1769 = vpow.pop %v1768
    %v1770 = vmul.f32 %v1732, 1.442695
    %v1771 = vpow.pop %v1770
    %v1772 = vmul.f32 %v1733, 1.442695
    %v1773 = vpow.pop %v1772
    %v1774 = vmul.f32 %v1734, 1.442695
    %v1775 = vpow.pop %v1774
    %v1776 = vmul.f32 %v1735, 1.442695
    %v1777 = vpow.pop %v1776
    %v1778 = vmul.f32 %v1736, 1.442695
    %v1779 = vpow.pop %v1778
    %v1780 = vmul.f32 %v1737, 1.442695
    %v1781 = vpow.pop %v1780
    %v1782 = vmul.f32 %v1738, 1.442695
    %v1783 = vpow.pop %v1782
    %v1784 = vmul.f32 %v1739, 1.442695
    %v1785 = vpow.pop %v1784
    %v1786 = vmul.f32 %v1740, 1.442695
    %v1787 = vpow.pop %v1786
    %v1788 = vmul.f32 %v1741, 1.442695
    %v1789 = vpow.pop %v1788
    %v1790 = vmul.f32 %v1742, 1.442695
    %v1791 = vpow.pop %v1790
    %v1792 = vmul.f32 %v1743, 1.442695
    %v1793 = vpow.pop %v1792
    %v1794 = vmul.f32 %v1744, 1.442695
    %v1795 = vpow.pop %v1794
    %v1796 = vmul.f32 %v1745, 1.442695
    %v1797 = vpow.pop %v1796
    %v1798 = vmul.f32 %v1746, 1.442695
    %v1799 = vpow.pop %v1798
    %v1800 = vmul.f32 %v1747, 1.442695
    %v1801 = vpow.pop %v1800
    %v1802 = vmul.f32 %v1748, 1.442695
    %v1803 = vpow.pop %v1802
    %v1804 = vmul.f32 %v1749, 1.442695
    %v1805 = vpow.pop %v1804
    %v1806 = vmul.f32 %v1750, 1.442695
    %v1807 = vpow.pop %v1806
    %v1808 = vmul.f32 %v1751, 1.442695
    %v1809 = vpow.pop %v1808
    %v1810 = vmul.f32 %v1752, 1.442695
    %v1811 = vpow.pop %v1810
    %v1812 = vmul.f32 %v1753, 1.442695
    %v1813 = vpow.pop %v1812
    %v1814 = vmul.f32 %v1754, 1.442695
    %v1815 = vpow.pop %v1814
    %v1816 = vmul.f32 %v1755, 1.442695
    %v1817 = vpow.pop %v1816
    %v1818 = vmul.f32 %v1756, 1.442695
    %v1819 = vpow.pop %v1818
    %v1820 = vmul.f32 %v1757, 1.442695
    %v1821 = vpow.pop %v1820
    %v1822 = vadd.f32 %v1759, 1.0
    %v1823 = vadd.f32 %v1761, 1.0
    %v1824 = vadd.f32 %v1763, 1.0
    %v1825 = vadd.f32 %v1765, 1.0
    %v1826 = vadd.f32 %v1767, 1.0
    %v1827 = vadd.f32 %v1769, 1.0
    %v1828 = vadd.f32 %v1771, 1.0
    %v1829 = vadd.f32 %v1773, 1.0
    %v1830 = vadd.f32 %v1775, 1.0
    %v1831 = vadd.f32 %v1777, 1.0
    %v1832 = vadd.f32 %v1779, 1.0
    %v1833 = vadd.f32 %v1781, 1.0
    %v1834 = vadd.f32 %v1783, 1.0
    %v1835 = vadd.f32 %v1785, 1.0
    %v1836 = vadd.f32 %v1787, 1.0
    %v1837 = vadd.f32 %v1789, 1.0
    %v1838 = vadd.f32 %v1791, 1.0
    %v1839 = vadd.f32 %v1793, 1.0
    %v1840 = vadd.f32 %v1795, 1.0
    %v1841 = vadd.f32 %v1797, 1.0
    %v1842 = vadd.f32 %v1799, 1.0
    %v1843 = vadd.f32 %v1801, 1.0
    %v1844 = vadd.f32 %v1803, 1.0
    %v1845 = vadd.f32 %v1805, 1.0
    %v1846 = vadd.f32 %v1807, 1.0
    %v1847 = vadd.f32 %v1809, 1.0
    %v1848 = vadd.f32 %v1811, 1.0
    %v1849 = vadd.f32 %v1813, 1.0
    %v1850 = vadd.f32 %v1815, 1.0
    %v1851 = vadd.f32 %v1817, 1.0
    %v1852 = vadd.f32 %v1819, 1.0
    %v1853 = vadd.f32 %v1821, 1.0
    %v1854 = vrcp.pop %v1822
    %v1855 = vmul.f32 1.0, %v1854
    %v1856 = vrcp.pop %v1823
    %v1857 = vmul.f32 1.0, %v1856
    %v1858 = vrcp.pop %v1824
    %v1859 = vmul.f32 1.0, %v1858
    %v1860 = vrcp.pop %v1825
    %v1861 = vmul.f32 1.0, %v1860
    %v1862 = vrcp.pop %v1826
    %v1863 = vmul.f32 1.0, %v1862
    %v1864 = vrcp.pop %v1827
    %v1865 = vmul.f32 1.0, %v1864
    %v1866 = vrcp.pop %v1828
    %v1867 = vmul.f32 1.0, %v1866
    %v1868 = vrcp.pop %v1829
    %v1869 = vmul.f32 1.0, %v1868
    %v1870 = vrcp.pop %v1830
    %v1871 = vmul.f32 1.0, %v1870
    %v1872 = vrcp.pop %v1831
    %v1873 = vmul.f32 1.0, %v1872
    %v1874 = vrcp.pop %v1832
    %v1875 = vmul.f32 1.0, %v1874
    %v1876 = vrcp.pop %v1833
    %v1877 = vmul.f32 1.0, %v1876
    %v1878 = vrcp.pop %v1834
    %v1879 = vmul.f32 1.0, %v1878
    %v1880 = vrcp.pop %v1835
    %v1881 = vmul.f32 1.0, %v1880
    %v1882 = vrcp.pop %v1836
    %v1883 = vmul.f32 1.0, %v1882
    %v1884 = vrcp.pop %v1837
    %v1885 = vmul.f32 1.0, %v1884
    %v1886 = vrcp.pop %v1838
    %v1887 = vmul.f32 1.0, %v1886
    %v1888 = vrcp.pop %v1839
    %v1889 = vmul.f32 1.0, %v1888
    %v1890 = vrcp.pop %v1840
    %v1891 = vmul.f32 1.0, %v1890
    %v1892 = vrcp.pop %v1841
    %v1893 = vmul.f32 1.0, %v1892
    %v1894 = vrcp.pop %v1842
    %v1895 = vmul.f32 1.0, %v1894
    %v1896 = vrcp.pop %v1843
    %v1897 = vmul.f32 1.0, %v1896
    %v1898 = vrcp.pop %v1844
    %v1899 = vmul.f32 1.0, %v1898
    %v1900 = vrcp.pop %v1845
    %v1901 = vmul.f32 1.0, %v1900
    %v1902 = vrcp.pop %v1846
    %v1903 = vmul.f32 1.0, %v1902
    %v1904 = vrcp.pop %v1847
    %v1905 = vmul.f32 1.0, %v1904
    %v1906 = vrcp.pop %v1848
    %v1907 = vmul.f32 1.0, %v1906
    %v1908 = vrcp.pop %v1849
    %v1909 = vmul.f32 1.0, %v1908
    %v1910 = vrcp.pop %v1850
    %v1911 = vmul.f32 1.0, %v1910
    %v1912 = vrcp.pop %v1851
    %v1913 = vmul.f32 1.0, %v1912
    %v1914 = vrcp.pop %v1852
    %v1915 = vmul.f32 1.0, %v1914
    %v1916 = vrcp.pop %v1853
    %v1917 = vmul.f32 1.0, %v1916
    %v1918 = vmax.f32 %v1538, 0.0
    %v1919 = vmax.f32 %v1544, 0.0
    %v1920 = vmax.f32 %v1550, 0.0
    %v1921 = vmax.f32 %v1556, 0.0
    %v1922 = vmax.f32 %v1562, 0.0
    %v1923 = vmax.f32 %v1568, 0.0
    %v1924 = vmax.f32 %v1574, 0.0
    %v1925 = vmax.f32 %v1580, 0.0
    %v1926 = vmax.f32 %v1586, 0.0
    %v1927 = vmax.f32 %v1592, 0.0
    %v1928 = vmax.f32 %v1598, 0.0
    %v1929 = vmax.f32 %v1604, 0.0
    %v1930 = vmax.f32 %v1610, 0.0
    %v1931 = vmax.f32 %v1616, 0.0
    %v1932 = vmax.f32 %v1622, 0.0
    %v1933 = vmax.f32 %v1628, 0.0
    %v1934 = vmax.f32 %v1634, 0.0
    %v1935 = vmax.f32 %v1640, 0.0
    %v1936 = vmax.f32 %v1646, 0.0
    %v1937 = vmax.f32 %v1652, 0.0
    %v1938 = vmax.f32 %v1658, 0.0
    %v1939 = vmax.f32 %v1664, 0.0
    %v1940 = vmax.f32 %v1670, 0.0
    %v1941 = vmax.f32 %v1676, 0.0
    %v1942 = vmax.f32 %v1682, 0.0
    %v1943 = vmax.f32 %v1688, 0.0
    %v1944 = vmax.f32 %v1694, 0.0
    %v1945 = vmax.f32 %v1700, 0.0
    %v1946 = vmax.f32 %v1706, 0.0
    %v1947 = vmax.f32 %v1712, 0.0
    %v1948 = vmax.f32 %v1718, 0.0
    %v1949 = vmax.f32 %v1724, 0.0
    %v1950 = vmul.f32 %v1855, %v914
    %v1951 = vmul.f32 %v1857, %v919
    %v1952 = vmul.f32 %v1859, %v924
    %v1953 = vmul.f32 %v1861, %v929
    %v1954 = vmul.f32 %v1863, %v934
    %v1955 = vmul.f32 %v1865, %v939
    %v1956 = vmul.f32 %v1867, %v944
    %v1957 = vmul.f32 %v1869, %v949
    %v1958 = vmul.f32 %v1871, %v954
    %v1959 = vmul.f32 %v1873, %v959
    %v1960 = vmul.f32 %v1875, %v964
    %v1961 = vmul.f32 %v1877, %v969
    %v1962 = vmul.f32 %v1879, %v974
    %v1963 = vmul.f32 %v1881, %v979
    %v1964 = vmul.f32 %v1883, %v984
    %v1965 = vmul.f32 %v1885, %v989
    %v1966 = vmul.f32 %v1887, %v994
    %v1967 = vmul.f32 %v1889, %v999
    %v1968 = vmul.f32 %v1891, %v1004
    %v1969 = vmul.f32 %v1893, %v1009
    %v1970 = vmul.f32 %v1895, %v1014
    %v1971 = vmul.f32 %v1897, %v1019
    %v1972 = vmul.f32 %v1899, %v1024
    %v1973 = vmul.f32 %v1901, %v1029
    %v1974 = vmul.f32 %v1903, %v1034
    %v1975 = vmul.f32 %v1905, %v1039
    %v1976 = vmul.f32 %v1907, %v1044
    %v1977 = vmul.f32 %v1909, %v1049
    %v1978 = vmul.f32 %v1911, %v1054
    %v1979 = vmul.f32 %v1913, %v1059
    %v1980 = vmul.f32 %v1915, %v1064
    %v1981 = vmul.f32 %v1917, %v1069
    %v1982 = vxor.u32 %v1950, 2147483648
    %v1983 = vxor.u32 %v1951, 2147483648
    %v1984 = vxor.u32 %v1952, 2147483648
    %v1985 = vxor.u32 %v1953, 2147483648
    %v1986 = vxor.u32 %v1954, 2147483648
    %v1987 = vxor.u32 %v1955, 2147483648
    %v1988 = vxor.u32 %v1956, 2147483648
    %v1989 = vxor.u32 %v1957, 2147483648
    %v1990 = vxor.u32 %v1958, 2147483648
    %v1991 = vxor.u32 %v1959, 2147483648
    %v1992 = vxor.u32 %v1960, 2147483648
    %v1993 = vxor.u32 %v1961, 2147483648
    %v1994 = vxor.u32 %v1962, 2147483648
    %v1995 = vxor.u32 %v1963, 2147483648
    %v1996 = vxor.u32 %v1964, 2147483648
    %v1997 = vxor.u32 %v1965, 2147483648
    %v1998 = vxor.u32 %v1966, 2147483648
    %v1999 = vxor.u32 %v1967, 2147483648
    %v2000 = vxor.u32 %v1968, 2147483648
    %v2001 = vxor.u32 %v1969, 2147483648
    %v2002 = vxor.u32 %v1970, 2147483648
    %v2003 = vxor.u32 %v1971, 2147483648
    %v2004 = vxor.u32 %v1972, 2147483648
    %v2005 = vxor.u32 %v1973, 2147483648
    %v2006 = vxor.u32 %v1974, 2147483648
    %v2007 = vxor.u32 %v1975, 2147483648
    %v2008 = vxor.u32 %v1976, 2147483648
    %v2009 = vxor.u32 %v1977, 2147483648
    %v2010 = vxor.u32 %v1978, 2147483648
    %v2011 = vxor.u32 %v1979, 2147483648
    %v2012 = vxor.u32 %v1980, 2147483648
    %v2013 = vxor.u32 %v1981, 2147483648
    %v2014 = vmul.f32 %v1982, 1.442695
    %v2015 = vpow.pop %v2014
    %v2016 = vmul.f32 %v1983, 1.442695
    %v2017 = vpow.pop %v2016
    %v2018 = vmul.f32 %v1984, 1.442695
    %v2019 = vpow.pop %v2018
    %v2020 = vmul.f32 %v1985, 1.442695
    %v2021 = vpow.pop %v2020
    %v2022 = vmul.f32 %v1986, 1.442695
    %v2023 = vpow.pop %v2022
    %v2024 = vmul.f32 %v1987, 1.442695
    %v2025 = vpow.pop %v2024
    %v2026 = vmul.f32 %v1988, 1.442695
    %v2027 = vpow.pop %v2026
    %v2028 = vmul.f32 %v1989, 1.442695
    %v2029 = vpow.pop %v2028
    %v2030 = vmul.f32 %v1990, 1.442695
    %v2031 = vpow.pop %v2030
    %v2032 = vmul.f32 %v1991, 1.442695
    %v2033 = vpow.pop %v2032
    %v2034 = vmul.f32 %v1992, 1.442695
    %v2035 = vpow.pop %v2034
    %v2036 = vmul.f32 %v1993, 1.442695
    %v2037 = vpow.pop %v2036
    %v2038 = vmul.f32 %v1994, 1.442695
    %v2039 = vpow.pop %v2038
    %v2040 = vmul.f32 %v1995, 1.442695
    %v2041 = vpow.pop %v2040
    %v2042 = vmul.f32 %v1996, 1.442695
    %v2043 = vpow.pop %v2042
    %v2044 = vmul.f32 %v1997, 1.442695
    %v2045 = vpow.pop %v2044
    %v2046 = vmul.f32 %v1998, 1.442695
    %v2047 = vpow.pop %v2046
    %v2048 = vmul.f32 %v1999, 1.442695
    %v2049 = vpow.pop %v2048
    %v2050 = vmul.f32 %v2000, 1.442695
    %v2051 = vpow.pop %v2050
    %v2052 = vmul.f32 %v2001, 1.442695
    %v2053 = vpow.pop %v2052
    %v2054 = vmul.f32 %v2002, 1.442695
    %v2055 = vpow.pop %v2054
    %v2056 = vmul.f32 %v2003, 1.442695
    %v2057 = vpow.pop %v2056
    %v2058 = vmul.f32 %v2004, 1.442695
    %v2059 = vpow.pop %v2058
    %v2060 = vmul.f32 %v2005, 1.442695
    %v2061 = vpow.pop %v2060
    %v2062 = vmul.f32 %v2006, 1.442695
    %v2063 = vpow.pop %v2062
    %v2064 = vmul.f32 %v2007, 1.442695
    %v2065 = vpow.pop %v2064
    %v2066 = vmul.f32 %v2008, 1.442695
    %v2067 = vpow.pop %v2066
    %v2068 = vmul.f32 %v2009, 1.442695
    %v2069 = vpow.pop %v2068
    %v2070 = vmul.f32 %v2010, 1.442695
    %v2071 = vpow.pop %v2070
    %v2072 = vmul.f32 %v2011, 1.442695
    %v2073 = vpow.pop %v2072
    %v2074 = vmul.f32 %v2012, 1.442695
    %v2075 = vpow.pop %v2074
    %v2076 = vmul.f32 %v2013, 1.442695
    %v2077 = vpow.pop %v2076
    %v2078 = vadd.f32 %v2015, 1.0
    %v2079 = vadd.f32 %v2017, 1.0
    %v2080 = vadd.f32 %v2019, 1.0
    %v2081 = vadd.f32 %v2021, 1.0
    %v2082 = vadd.f32 %v2023, 1.0
    %v2083 = vadd.f32 %v2025, 1.0
    %v2084 = vadd.f32 %v2027, 1.0
    %v2085 = vadd.f32 %v2029, 1.0
    %v2086 = vadd.f32 %v2031, 1.0
    %v2087 = vadd.f32 %v2033, 1.0
    %v2088 = vadd.f32 %v2035, 1.0
    %v2089 = vadd.f32 %v2037, 1.0
    %v2090 = vadd.f32 %v2039, 1.0
    %v2091 = vadd.f32 %v2041, 1.0
    %v2092 = vadd.f32 %v2043, 1.0
    %v2093 = vadd.f32 %v2045, 1.0
    %v2094 = vadd.f32 %v2047, 1.0
    %v2095 = vadd.f32 %v2049, 1.0
    %v2096 = vadd.f32 %v2051, 1.0
    %v2097 = vadd.f32 %v2053, 1.0
    %v2098 = vadd.f32 %v2055, 1.0
    %v2099 = vadd.f32 %v2057, 1.0
    %v2100 = vadd.f32 %v2059, 1.0
    %v2101 = vadd.f32 %v2061, 1.0
    %v2102 = vadd.f32 %v2063, 1.0
    %v2103 = vadd.f32 %v2065, 1.0
    %v2104 = vadd.f32 %v2067, 1.0
    %v2105 = vadd.f32 %v2069, 1.0
    %v2106 = vadd.f32 %v2071, 1.0
    %v2107 = vadd.f32 %v2073, 1.0
    %v2108 = vadd.f32 %v2075, 1.0
    %v2109 = vadd.f32 %v2077, 1.0
    %v2110 = vrcp.pop %v2078
    %v2111 = vmul.f32 1.0, %v2110
    %v2112 = vrcp.pop %v2079
    %v2113 = vmul.f32 1.0, %v2112
    %v2114 = vrcp.pop %v2080
    %v2115 = vmul.f32 1.0, %v2114
    %v2116 = vrcp.pop %v2081
    %v2117 = vmul.f32 1.0, %v2116
    %v2118 = vrcp.pop %v2082
    %v2119 = vmul.f32 1.0, %v2118
    %v2120 = vrcp.pop %v2083
    %v2121 = vmul.f32 1.0, %v2120
    %v2122 = vrcp.pop %v2084
    %v2123 = vmul.f32 1.0, %v2122
    %v2124 = vrcp.pop %v2085
    %v2125 = vmul.f32 1.0, %v2124
    %v2126 = vrcp.pop %v2086
    %v2127 = vmul.f32 1.0, %v2126
    %v2128 = vrcp.pop %v2087
    %v2129 = vmul.f32 1.0, %v2128
    %v2130 = vrcp.pop %v2088
    %v2131 = vmul.f32 1.0, %v2130
    %v2132 = vrcp.pop %v2089
    %v2133 = vmul.f32 1.0, %v2132
    %v2134 = vrcp.pop %v2090
    %v2135 = vmul.f32 1.0, %v2134
    %v2136 = vrcp.pop %v2091
    %v2137 = vmul.f32 1.0, %v2136
    %v2138 = vrcp.pop %v2092
    %v2139 = vmul.f32 1.0, %v2138
    %v2140 = vrcp.pop %v2093
    %v2141 = vmul.f32 1.0, %v2140
    %v2142 = vrcp.pop %v2094
    %v2143 = vmul.f32 1.0, %v2142
    %v2144 = vrcp.pop %v2095
    %v2145 = vmul.f32 1.0, %v2144
    %v2146 = vrcp.pop %v2096
    %v2147 = vmul.f32 1.0, %v2146
    %v2148 = vrcp.pop %v2097
    %v2149 = vmul.f32 1.0, %v2148
    %v2150 = vrcp.pop %v2098
    %v2151 = vmul.f32 1.0, %v2150
    %v2152 = vrcp.pop %v2099
    %v2153 = vmul.f32 1.0, %v2152
    %v2154 = vrcp.pop %v2100
    %v2155 = vmul.f32 1.0, %v2154
    %v2156 = vrcp.pop %v2101
    %v2157 = vmul.f32 1.0, %v2156
    %v2158 = vrcp.pop %v2102
    %v2159 = vmul.f32 1.0, %v2158
    %v2160 = vrcp.pop %v2103
    %v2161 = vmul.f32 1.0, %v2160
    %v2162 = vrcp.pop %v2104
    %v2163 = vmul.f32 1.0, %v2162
    %v2164 = vrcp.pop %v2105
    %v2165 = vmul.f32 1.0, %v2164
    %v2166 = vrcp.pop %v2106
    %v2167 = vmul.f32 1.0, %v2166
    %v2168 = vrcp.pop %v2107
    %v2169 = vmul.f32 1.0, %v2168
    %v2170 = vrcp.pop %v2108
    %v2171 = vmul.f32 1.0, %v2170
    %v2172 = vrcp.pop %v2109
    %v2173 = vmul.f32 1.0, %v2172
    %v2174 = vld [vmem:[#allocation8] sm:$0xff]
    %v2175 = vld [vmem:[#allocation8 + $0x8] sm:$0xff]
    %v2176 = vld [vmem:[#allocation8 + $0x10] sm:$0xff]
    %v2177 = vld [vmem:[#allocation8 + $0x18] sm:$0xff]
    %v2178 = vld [vmem:[#allocation8 + $0x20] sm:$0xff]
    %v2179 = vld [vmem:[#allocation8 + $0x28] sm:$0xff]
    %v2180 = vld [vmem:[#allocation8 + $0x30] sm:$0xff]
    %v2181 = vld [vmem:[#allocation8 + $0x38] sm:$0xff]
    %v2182 = vld [vmem:[#allocation8 + $0x40] sm:$0xff]
    %v2183 = vld [vmem:[#allocation8 + $0x48] sm:$0xff]
    %v2184 = vld [vmem:[#allocation8 + $0x50] sm:$0xff]
    %v2185 = vld [vmem:[#allocation8 + $0x58] sm:$0xff]
    %v2186 = vld [vmem:[#allocation8 + $0x60] sm:$0xff]
    %v2187 = vld [vmem:[#allocation8 + $0x68] sm:$0xff]
    %v2188 = vld [vmem:[#allocation8 + $0x70] sm:$0xff]
    %v2189 = vld [vmem:[#allocation8 + $0x78] sm:$0xff]
    %v2190 = vld [vmem:[#allocation8 + $0x80] sm:$0xff]
    %v2191 = vld [vmem:[#allocation8 + $0x88] sm:$0xff]
    %v2192 = vld [vmem:[#allocation8 + $0x90] sm:$0xff]
    %v2193 = vld [vmem:[#allocation8 + $0x98] sm:$0xff]
    %v2194 = vld [vmem:[#allocation8 + $0xa0] sm:$0xff]
    %v2195 = vld [vmem:[#allocation8 + $0xa8] sm:$0xff]
    %v2196 = vld [vmem:[#allocation8 + $0xb0] sm:$0xff]
    %v2197 = vld [vmem:[#allocation8 + $0xb8] sm:$0xff]
    %v2198 = vld [vmem:[#allocation8 + $0xc0] sm:$0xff]
    %v2199 = vld [vmem:[#allocation8 + $0xc8] sm:$0xff]
    %v2200 = vld [vmem:[#allocation8 + $0xd0] sm:$0xff]
    %v2201 = vld [vmem:[#allocation8 + $0xd8] sm:$0xff]
    %v2202 = vld [vmem:[#allocation8 + $0xe0] sm:$0xff]
    %v2203 = vld [vmem:[#allocation8 + $0xe8] sm:$0xff]
    %v2204 = vld [vmem:[#allocation8 + $0xf0] sm:$0xff]
    %v2205 = vld [vmem:[#allocation8 + $0xf8] sm:$0xff]
    %v2206 = vld [vmem:[#allocation8 + $0x100] sm:$0xff]
    %v2207 = vld [vmem:[#allocation8 + $0x108] sm:$0xff]
    %v2208 = vld [vmem:[#allocation8 + $0x110] sm:$0xff]
    %v2209 = vld [vmem:[#allocation8 + $0x118] sm:$0xff]
    %v2210 = vld [vmem:[#allocation8 + $0x120] sm:$0xff]
    %v2211 = vld [vmem:[#allocation8 + $0x128] sm:$0xff]
    %v2212 = vld [vmem:[#allocation8 + $0x130] sm:$0xff]
    %v2213 = vld [vmem:[#allocation8 + $0x138] sm:$0xff]
    %v2214 = vld [vmem:[#allocation8 + $0x140] sm:$0xff]
    %v2215 = vld [vmem:[#allocation8 + $0x148] sm:$0xff]
    %v2216 = vld [vmem:[#allocation8 + $0x150] sm:$0xff]
    %v2217 = vld [vmem:[#allocation8 + $0x158] sm:$0xff]
    %v2218 = vld [vmem:[#allocation8 + $0x160] sm:$0xff]
    %v2219 = vld [vmem:[#allocation8 + $0x168] sm:$0xff]
    %v2220 = vld [vmem:[#allocation8 + $0x170] sm:$0xff]
    %v2221 = vld [vmem:[#allocation8 + $0x178] sm:$0xff]
    %v2222 = vld [vmem:[#allocation8 + $0x180] sm:$0xff]
    %v2223 = vld [vmem:[#allocation8 + $0x188] sm:$0xff]
    %v2224 = vld [vmem:[#allocation8 + $0x190] sm:$0xff]
    %v2225 = vld [vmem:[#allocation8 + $0x198] sm:$0xff]
    %v2226 = vld [vmem:[#allocation8 + $0x1a0] sm:$0xff]
    %v2227 = vld [vmem:[#allocation8 + $0x1a8] sm:$0xff]
    %v2228 = vld [vmem:[#allocation8 + $0x1b0] sm:$0xff]
    %v2229 = vld [vmem:[#allocation8 + $0x1b8] sm:$0xff]
    %v2230 = vld [vmem:[#allocation8 + $0x1c0] sm:$0xff]
    %v2231 = vld [vmem:[#allocation8 + $0x1c8] sm:$0xff]
    %v2232 = vld [vmem:[#allocation8 + $0x1d0] sm:$0xff]
    %v2233 = vld [vmem:[#allocation8 + $0x1d8] sm:$0xff]
    %v2234 = vld [vmem:[#allocation8 + $0x1e0] sm:$0xff]
    %v2235 = vld [vmem:[#allocation8 + $0x1e8] sm:$0xff]
    %v2236 = vld [vmem:[#allocation8 + $0x1f0] sm:$0xff]
    %v2237 = vld [vmem:[#allocation8 + $0x1f8] sm:$0xff]
    %v2238 = vld [vmem:[#allocation8 + $0x200] sm:$0xff]
    %v2239 = vld [vmem:[#allocation8 + $0x208] sm:$0xff]
    %v2240 = vld [vmem:[#allocation8 + $0x210] sm:$0xff]
    %v2241 = vld [vmem:[#allocation8 + $0x218] sm:$0xff]
    %v2242 = vld [vmem:[#allocation8 + $0x220] sm:$0xff]
    %v2243 = vld [vmem:[#allocation8 + $0x228] sm:$0xff]
    %v2244 = vld [vmem:[#allocation8 + $0x230] sm:$0xff]
    %v2245 = vld [vmem:[#allocation8 + $0x238] sm:$0xff]
    %v2246 = vld [vmem:[#allocation8 + $0x240] sm:$0xff]
    %v2247 = vld [vmem:[#allocation8 + $0x248] sm:$0xff]
    %v2248 = vld [vmem:[#allocation8 + $0x250] sm:$0xff]
    %v2249 = vld [vmem:[#allocation8 + $0x258] sm:$0xff]
    %v2250 = vld [vmem:[#allocation8 + $0x260] sm:$0xff]
    %v2251 = vld [vmem:[#allocation8 + $0x268] sm:$0xff]
    %v2252 = vld [vmem:[#allocation8 + $0x270] sm:$0xff]
    %v2253 = vld [vmem:[#allocation8 + $0x278] sm:$0xff]
    %v2254 = vld [vmem:[#allocation8 + $0x280] sm:$0xff]
    %v2255 = vld [vmem:[#allocation8 + $0x288] sm:$0xff]
    %v2256 = vld [vmem:[#allocation8 + $0x290] sm:$0xff]
    %v2257 = vld [vmem:[#allocation8 + $0x298] sm:$0xff]
    %v2258 = vld [vmem:[#allocation8 + $0x2a0] sm:$0xff]
    %v2259 = vld [vmem:[#allocation8 + $0x2a8] sm:$0xff]
    %v2260 = vld [vmem:[#allocation8 + $0x2b0] sm:$0xff]
    %v2261 = vld [vmem:[#allocation8 + $0x2b8] sm:$0xff]
    %v2262 = vld [vmem:[#allocation8 + $0x2c0] sm:$0xff]
    %v2263 = vld [vmem:[#allocation8 + $0x2c8] sm:$0xff]
    %v2264 = vld [vmem:[#allocation8 + $0x2d0] sm:$0xff]
    %v2265 = vld [vmem:[#allocation8 + $0x2d8] sm:$0xff]
    %v2266 = vld [vmem:[#allocation8 + $0x2e0] sm:$0xff]
    %v2267 = vld [vmem:[#allocation8 + $0x2e8] sm:$0xff]
    %v2268 = vld [vmem:[#allocation8 + $0x2f0] sm:$0xff]
    %v2269 = vld [vmem:[#allocation8 + $0x2f8] sm:$0xff]
    %v2270 = vld [vmem:[#allocation8 + $0x300] sm:$0xff]
    %v2271 = vld [vmem:[#allocation8 + $0x308] sm:$0xff]
    %v2272 = vld [vmem:[#allocation8 + $0x310] sm:$0xff]
    %v2273 = vld [vmem:[#allocation8 + $0x318] sm:$0xff]
    %v2274 = vld [vmem:[#allocation8 + $0x320] sm:$0xff]
    %v2275 = vld [vmem:[#allocation8 + $0x328] sm:$0xff]
    %v2276 = vld [vmem:[#allocation8 + $0x330] sm:$0xff]
    %v2277 = vld [vmem:[#allocation8 + $0x338] sm:$0xff]
    %v2278 = vld [vmem:[#allocation8 + $0x340] sm:$0xff]
    %v2279 = vld [vmem:[#allocation8 + $0x348] sm:$0xff]
    %v2280 = vld [vmem:[#allocation8 + $0x350] sm:$0xff]
    %v2281 = vld [vmem:[#allocation8 + $0x358] sm:$0xff]
    %v2282 = vld [vmem:[#allocation8 + $0x360] sm:$0xff]
    %v2283 = vld [vmem:[#allocation8 + $0x368] sm:$0xff]
    %v2284 = vld [vmem:[#allocation8 + $0x370] sm:$0xff]
    %v2285 = vld [vmem:[#allocation8 + $0x378] sm:$0xff]
    %v2286 = vld [vmem:[#allocation8 + $0x380] sm:$0xff]
    %v2287 = vld [vmem:[#allocation8 + $0x388] sm:$0xff]
    %v2288 = vld [vmem:[#allocation8 + $0x390] sm:$0xff]
    %v2289 = vld [vmem:[#allocation8 + $0x398] sm:$0xff]
    %v2290 = vld [vmem:[#allocation8 + $0x3a0] sm:$0xff]
    %v2291 = vld [vmem:[#allocation8 + $0x3a8] sm:$0xff]
    %v2292 = vld [vmem:[#allocation8 + $0x3b0] sm:$0xff]
    %v2293 = vld [vmem:[#allocation8 + $0x3b8] sm:$0xff]
    %v2294 = vld [vmem:[#allocation8 + $0x3c0] sm:$0xff]
    %v2295 = vld [vmem:[#allocation8 + $0x3c8] sm:$0xff]
    %v2296 = vld [vmem:[#allocation8 + $0x3d0] sm:$0xff]
    %v2297 = vld [vmem:[#allocation8 + $0x3d8] sm:$0xff]
    %v2298 = vld [vmem:[#allocation8 + $0x3e0] sm:$0xff]
    %v2299 = vld [vmem:[#allocation8 + $0x3e8] sm:$0xff]
    %v2300 = vld [vmem:[#allocation8 + $0x3f0] sm:$0xff]
    %v2301 = vld [vmem:[#allocation8 + $0x3f8] sm:$0xff]
    %v2302 = vld [vmem:[%s6] sm:$0xf]
    %v2304 = vlaneseq
    %v2305 = vshrl.u32 %v2304, 7
    %v2306 = vsub.s32 0, %v2305
    %v2307 = vrot.slane %v2302, %v2306
    %v2308 = vlaneseq
    %v2309 = vshrl.u32 %v2308, 7
    %v2310 = vsub.s32 1, %v2309
    %v2311 = vrot.slane %v2302, %v2310
    %v2312 = vlaneseq
    %v2313 = vshrl.u32 %v2312, 7
    %v2314 = vsub.s32 2, %v2313
    %v2315 = vrot.slane %v2302, %v2314
    %v2316 = vlaneseq
    %v2317 = vshrl.u32 %v2316, 7
    %v2318 = vsub.s32 3, %v2317
    %v2319 = vrot.slane %v2302, %v2318
    %2324 = vmatprep.subr.mxu0 %v2175
    %2325 = vmatpush1.msra.mxu0 %v2174
    %2326 = vmatprep.subr.mxu0 %v2179
    %2327 = vmatpush1.msra.mxu0 %v2178
    %2328 = vmatprep.subr.mxu0 %v2183
    %2329 = vmatpush1.msra.mxu0 %v2182
    %2330 = vmatprep.subr.mxu0 %v2187
    %2331 = vmatpush1.msra.mxu0 %v2186
    %2332 = vmatprep.subr.mxu0 %v2191
    %2333 = vmatpush1.msra.mxu0 %v2190
    %2334 = vmatprep.subr.mxu0 %v2195
    %2335 = vmatpush1.msra.mxu0 %v2194
    %2336 = vmatprep.subr.mxu0 %v2199
    %2337 = vmatpush1.msra.mxu0 %v2198
    %2338 = vmatprep.subr.mxu0 %v2203
    %2339 = vmatpush1.msra.mxu0 %v2202
    %2340 = vmatprep.subr.mxu0 %v2207
    %2341 = vmatpush1.msra.mxu0 %v2206
    %2342 = vmatprep.subr.mxu0 %v2211
    %2343 = vmatpush1.msra.mxu0 %v2210
    %2344 = vmatprep.subr.mxu0 %v2215
    %2345 = vmatpush1.msra.mxu0 %v2214
    %2346 = vmatprep.subr.mxu0 %v2219
    %2347 = vmatpush1.msra.mxu0 %v2218
    %2348 = vmatprep.subr.mxu0 %v2223
    %2349 = vmatpush1.msra.mxu0 %v2222
    %2350 = vmatprep.subr.mxu0 %v2227
    %2351 = vmatpush1.msra.mxu0 %v2226
    %2352 = vmatprep.subr.mxu0 %v2231
    %2353 = vmatpush1.msra.mxu0 %v2230
    %2354 = vmatprep.subr.mxu0 %v2235
    %2355 = vmatpush1.msra.mxu0 %v2234
    %2356 = vmatprep.subr.mxu0 %v2239
    %2357 = vmatpush1.msra.mxu0 %v2238
    %2358 = vmatprep.subr.mxu0 %v2243
    %2359 = vmatpush1.msra.mxu0 %v2242
    %2360 = vmatprep.subr.mxu0 %v2247
    %2361 = vmatpush1.msra.mxu0 %v2246
    %2362 = vmatprep.subr.mxu0 %v2251
    %2363 = vmatpush1.msra.mxu0 %v2250
    %2364 = vmatprep.subr.mxu0 %v2255
    %2365 = vmatpush1.msra.mxu0 %v2254
    %2366 = vmatprep.subr.mxu0 %v2259
    %2367 = vmatpush1.msra.mxu0 %v2258
    %2368 = vmatprep.subr.mxu0 %v2263
    %2369 = vmatpush1.msra.mxu0 %v2262
    %2370 = vmatprep.subr.mxu0 %v2267
    %2371 = vmatpush1.msra.mxu0 %v2266
    %2372 = vmatprep.subr.mxu0 %v2271
    %2373 = vmatpush1.msra.mxu0 %v2270
    %2374 = vmatprep.subr.mxu0 %v2275
    %2375 = vmatpush1.msra.mxu0 %v2274
    %2376 = vmatprep.subr.mxu0 %v2279
    %2377 = vmatpush1.msra.mxu0 %v2278
    %2378 = vmatprep.subr.mxu0 %v2283
    %2379 = vmatpush1.msra.mxu0 %v2282
    %2380 = vmatprep.subr.mxu0 %v2287
    %2381 = vmatpush1.msra.mxu0 %v2286
    %2382 = vmatprep.subr.mxu0 %v2291
    %2383 = vmatpush1.msra.mxu0 %v2290
    %2384 = vmatprep.subr.mxu0 %v2295
    %2385 = vmatpush1.msra.mxu0 %v2294
    %2386 = vmatprep.subr.mxu0 %v2299
    %2387 = vmatpush1.msra.mxu0 %v2298
    %2388 = vmatprep.mubr.f32.mxu0 %v2111
    %2389 = vmatmul.mubr.f32.gmra.mrb[0].mxu0 %v1918
    %v2390 = vpop.f32.mrb[0].mxu0
    %v2391 = vadd.f32 %v2307, %v2390
    %v2392 = vpop.f32.mrb[0].mxu0
    %v2393 = vadd.f32 %v2311, %v2392
    %2394 = vmatprep.mubr.f32.mxu0 %v2113
    %2395 = vmatmul.mubr.f32.gmra.mrb[0].mxu0 %v1919
    %v2396 = vpop.f32.mrb[0].mxu0
    %v2397 = vadd.f32 %v2307, %v2396
    %v2398 = vpop.f32.mrb[0].mxu0
    %v2399 = vadd.f32 %v2311, %v2398
    %2400 = vmatprep.mubr.f32.mxu0 %v2115
    %2401 = vmatmul.mubr.f32.gmra.mrb[0].mxu0 %v1920
    %v2402 = vpop.f32.mrb[0].mxu0
    %v2403 = vadd.f32 %v2307, %v2402
    %v2404 = vpop.f32.mrb[0].mxu0
    %v2405 = vadd.f32 %v2311, %v2404
    %2406 = vmatprep.mubr.f32.mxu0 %v2117
    %2407 = vmatmul.mubr.f32.gmra.mrb[0].mxu0 %v1921
    %v2408 = vpop.f32.mrb[0].mxu0
    %v2409 = vadd.f32 %v2307, %v2408
    %v2410 = vpop.f32.mrb[0].mxu0
    %v2411 = vadd.f32 %v2311, %v2410
    %2412 = vmatprep.mubr.f32.mxu0 %v2119
    %2413 = vmatmul.mubr.f32.gmra.mrb[0].mxu0 %v1922
    %v2414 = vpop.f32.mrb[0].mxu0
    %v2415 = vadd.f32 %v2307, %v2414
    %v2416 = vpop.f32.mrb[0].mxu0
    %v2417 = vadd.f32 %v2311, %v2416
    %2418 = vmatprep.mubr.f32.mxu0 %v2121
    %2419 = vmatmul.mubr.f32.gmra.mrb[0].mxu0 %v1923
    %v2420 = vpop.f32.mrb[0].mxu0
    %v2421 = vadd.f32 %v2307, %v2420
    %v2422 = vpop.f32.mrb[0].mxu0
    %v2423 = vadd.f32 %v2311, %v2422
    %2424 = vmatprep.mubr.f32.mxu0 %v2123
    %2425 = vmatmul.mubr.f32.gmra.mrb[0].mxu0 %v1924
    %v2426 = vpop.f32.mrb[0].mxu0
    %v2427 = vadd.f32 %v2307, %v2426
    %v2428 = vpop.f32.mrb[0].mxu0
    %v2429 = vadd.f32 %v2311, %v2428
    %2430 = vmatprep.mubr.f32.mxu0 %v2125
    %2431 = vmatmul.mubr.f32.gmra.mrb[0].mxu0 %v1925
    %v2432 = vpop.f32.mrb[0].mxu0
    %v2433 = vadd.f32 %v2307, %v2432
    %v2434 = vpop.f32.mrb[0].mxu0
    %v2435 = vadd.f32 %v2311, %v2434
    %2436 = vmatprep.mubr.f32.mxu0 %v2127
    %2437 = vmatmul.mubr.f32.gmra.mrb[0].mxu0 %v1926
    %v2438 = vpop.f32.mrb[0].mxu0
    %v2439 = vadd.f32 %v2307, %v2438
    %v2440 = vpop.f32.mrb[0].mxu0
    %v2441 = vadd.f32 %v2311, %v2440
    %2442 = vmatprep.mubr.f32.mxu0 %v2129
    %2443 = vmatmul.mubr.f32.gmra.mrb[0].mxu0 %v1927
    %v2444 = vpop.f32.mrb[0].mxu0
    %v2445 = vadd.f32 %v2307, %v2444
    %v2446 = vpop.f32.mrb[0].mxu0
    %v2447 = vadd.f32 %v2311, %v2446
    %2448 = vmatprep.mubr.f32.mxu0 %v2131
    %2449 = vmatmul.mubr.f32.gmra.mrb[0].mxu0 %v1928
    %v2450 = vpop.f32.mrb[0].mxu0
    %v2451 = vadd.f32 %v2307, %v2450
    %v2452 = vpop.f32.mrb[0].mxu0
    %v2453 = vadd.f32 %v2311, %v2452
    %2454 = vmatprep.mubr.f32.mxu0 %v2133
    %2455 = vmatmul.mubr.f32.gmra.mrb[0].mxu0 %v1929
    %v2456 = vpop.f32.mrb[0].mxu0
    %v2457 = vadd.f32 %v2307, %v2456
    %v2458 = vpop.f32.mrb[0].mxu0
    %v2459 = vadd.f32 %v2311, %v2458
    %2460 = vmatprep.mubr.f32.mxu0 %v2135
    %2461 = vmatmul.mubr.f32.gmra.mrb[0].mxu0 %v1930
    %v2462 = vpop.f32.mrb[0].mxu0
    %v2463 = vadd.f32 %v2307, %v2462
    %v2464 = vpop.f32.mrb[0].mxu0
    %v2465 = vadd.f32 %v2311, %v2464
    %2466 = vmatprep.mubr.f32.mxu0 %v2137
    %2467 = vmatmul.mubr.f32.gmra.mrb[0].mxu0 %v1931
    %v2468 = vpop.f32.mrb[0].mxu0
    %v2469 = vadd.f32 %v2307, %v2468
    %v2470 = vpop.f32.mrb[0].mxu0
    %v2471 = vadd.f32 %v2311, %v2470
    %2472 = vmatprep.mubr.f32.mxu0 %v2139
    %2473 = vmatmul.mubr.f32.gmra.mrb[0].mxu0 %v1932
    %v2474 = vpop.f32.mrb[0].mxu0
    %v2475 = vadd.f32 %v2307, %v2474
    %v2476 = vpop.f32.mrb[0].mxu0
    %v2477 = vadd.f32 %v2311, %v2476
    %2478 = vmatprep.mubr.f32.mxu0 %v2141
    %2479 = vmatmul.mubr.f32.gmra.mrb[0].mxu0 %v1933
    %v2480 = vpop.f32.mrb[0].mxu0
    %v2481 = vadd.f32 %v2307, %v2480
    %v2482 = vpop.f32.mrb[0].mxu0
    %v2483 = vadd.f32 %v2311, %v2482
    %2484 = vmatprep.mubr.f32.mxu0 %v2143
    %2485 = vmatmul.mubr.f32.gmra.mrb[0].mxu0 %v1934
    %v2486 = vpop.f32.mrb[0].mxu0
    %v2487 = vadd.f32 %v2307, %v2486
    %v2488 = vpop.f32.mrb[0].mxu0
    %v2489 = vadd.f32 %v2311, %v2488
    %2490 = vmatprep.mubr.f32.mxu0 %v2145
    %2491 = vmatmul.mubr.f32.gmra.mrb[0].mxu0 %v1935
    %v2492 = vpop.f32.mrb[0].mxu0
    %v2493 = vadd.f32 %v2307, %v2492
    %v2494 = vpop.f32.mrb[0].mxu0
    %v2495 = vadd.f32 %v2311, %v2494
    %2496 = vmatprep.mubr.f32.mxu0 %v2147
    %2497 = vmatmul.mubr.f32.gmra.mrb[0].mxu0 %v1936
    %v2498 = vpop.f32.mrb[0].mxu0
    %v2499 = vadd.f32 %v2307, %v2498
    %v2500 = vpop.f32.mrb[0].mxu0
    %v2501 = vadd.f32 %v2311, %v2500
    %2502 = vmatprep.mubr.f32.mxu0 %v2149
    %2503 = vmatmul.mubr.f32.gmra.mrb[0].mxu0 %v1937
    %v2504 = vpop.f32.mrb[0].mxu0
    %v2505 = vadd.f32 %v2307, %v2504
    %v2506 = vpop.f32.mrb[0].mxu0
    %v2507 = vadd.f32 %v2311, %v2506
    %2508 = vmatprep.mubr.f32.mxu0 %v2151
    %2509 = vmatmul.mubr.f32.gmra.mrb[0].mxu0 %v1938
    %v2510 = vpop.f32.mrb[0].mxu0
    %v2511 = vadd.f32 %v2307, %v2510
    %v2512 = vpop.f32.mrb[0].mxu0
    %v2513 = vadd.f32 %v2311, %v2512
    %2514 = vmatprep.mubr.f32.mxu0 %v2153
    %2515 = vmatmul.mubr.f32.gmra.mrb[0].mxu0 %v1939
    %v2516 = vpop.f32.mrb[0].mxu0
    %v2517 = vadd.f32 %v2307, %v2516
    %v2518 = vpop.f32.mrb[0].mxu0
    %v2519 = vadd.f32 %v2311, %v2518
    %2520 = vmatprep.mubr.f32.mxu0 %v2155
    %2521 = vmatmul.mubr.f32.gmra.mrb[0].mxu0 %v1940
    %v2522 = vpop.f32.mrb[0].mxu0
    %v2523 = vadd.f32 %v2307, %v2522
    %v2524 = vpop.f32.mrb[0].mxu0
    %v2525 = vadd.f32 %v2311, %v2524
    %2526 = vmatprep.mubr.f32.mxu0 %v2157
    %2527 = vmatmul.mubr.f32.gmra.mrb[0].mxu0 %v1941
    %v2528 = vpop.f32.mrb[0].mxu0
    %v2529 = vadd.f32 %v2307, %v2528
    %v2530 = vpop.f32.mrb[0].mxu0
    %v2531 = vadd.f32 %v2311, %v2530
    %2532 = vmatprep.mubr.f32.mxu0 %v2159
    %2533 = vmatmul.mubr.f32.gmra.mrb[0].mxu0 %v1942
    %v2534 = vpop.f32.mrb[0].mxu0
    %v2535 = vadd.f32 %v2307, %v2534
    %v2536 = vpop.f32.mrb[0].mxu0
    %v2537 = vadd.f32 %v2311, %v2536
    %2538 = vmatprep.mubr.f32.mxu0 %v2161
    %2539 = vmatmul.mubr.f32.gmra.mrb[0].mxu0 %v1943
    %v2540 = vpop.f32.mrb[0].mxu0
    %v2541 = vadd.f32 %v2307, %v2540
    %v2542 = vpop.f32.mrb[0].mxu0
    %v2543 = vadd.f32 %v2311, %v2542
    %2544 = vmatprep.mubr.f32.mxu0 %v2163
    %2545 = vmatmul.mubr.f32.gmra.mrb[0].mxu0 %v1944
    %v2546 = vpop.f32.mrb[0].mxu0
    %v2547 = vadd.f32 %v2307, %v2546
    %v2548 = vpop.f32.mrb[0].mxu0
    %v2549 = vadd.f32 %v2311, %v2548
    %2550 = vmatprep.mubr.f32.mxu0 %v2165
    %2551 = vmatmul.mubr.f32.gmra.mrb[0].mxu0 %v1945
    %v2552 = vpop.f32.mrb[0].mxu0
    %v2553 = vadd.f32 %v2307, %v2552
    %v2554 = vpop.f32.mrb[0].mxu0
    %v2555 = vadd.f32 %v2311, %v2554
    %2556 = vmatprep.mubr.f32.mxu0 %v2167
    %2557 = vmatmul.mubr.f32.gmra.mrb[0].mxu0 %v1946
    %v2558 = vpop.f32.mrb[0].mxu0
    %v2559 = vadd.f32 %v2307, %v2558
    %v2560 = vpop.f32.mrb[0].mxu0
    %v2561 = vadd.f32 %v2311, %v2560
    %2562 = vmatprep.mubr.f32.mxu0 %v2169
    %2563 = vmatmul.mubr.f32.gmra.mrb[0].mxu0 %v1947
    %v2564 = vpop.f32.mrb[0].mxu0
    %v2565 = vadd.f32 %v2307, %v2564
    %v2566 = vpop.f32.mrb[0].mxu0
    %v2567 = vadd.f32 %v2311, %v2566
    %2568 = vmatprep.mubr.f32.mxu0 %v2171
    %2569 = vmatmul.mubr.f32.gmra.mrb[0].mxu0 %v1948
    %v2570 = vpop.f32.mrb[0].mxu0
    %v2571 = vadd.f32 %v2307, %v2570
    %v2572 = vpop.f32.mrb[0].mxu0
    %v2573 = vadd.f32 %v2311, %v2572
    %2574 = vmatprep.mubr.f32.mxu0 %v2173
    %2575 = vmatmul.mubr.f32.gmra.mrb[0].mxu0 %v1949
    %v2576 = vpop.f32.mrb[0].mxu0
    %v2577 = vadd.f32 %v2307, %v2576
    %v2578 = vpop.f32.mrb[0].mxu0
    %v2579 = vadd.f32 %v2311, %v2578
    %2580 = vdwg.mxu0
    %2581 = vmatprep.subr.mxu0 %v2177
    %2582 = vmatpush1.msra.mxu0 %v2176
    %2583 = vmatprep.subr.mxu0 %v2181
    %2584 = vmatpush1.msra.mxu0 %v2180
    %2585 = vmatprep.subr.mxu0 %v2185
    %2586 = vmatpush1.msra.mxu0 %v2184
    %2587 = vmatprep.subr.mxu0 %v2189
    %2588 = vmatpush1.msra.mxu0 %v2188
    %2589 = vmatprep.subr.mxu0 %v2193
    %2590 = vmatpush1.msra.mxu0 %v2192
    %2591 = vmatprep.subr.mxu0 %v2197
    %2592 = vmatpush1.msra.mxu0 %v2196
    %2593 = vmatprep.subr.mxu0 %v2201
    %2594 = vmatpush1.msra.mxu0 %v2200
    %2595 = vmatprep.subr.mxu0 %v2205
    %2596 = vmatpush1.msra.mxu0 %v2204
    %2597 = vmatprep.subr.mxu0 %v2209
    %2598 = vmatpush1.msra.mxu0 %v2208
    %2599 = vmatprep.subr.mxu0 %v2213
    %2600 = vmatpush1.msra.mxu0 %v2212
    %2601 = vmatprep.subr.mxu0 %v2217
    %2602 = vmatpush1.msra.mxu0 %v2216
    %2603 = vmatprep.subr.mxu0 %v2221
    %2604 = vmatpush1.msra.mxu0 %v2220
    %2605 = vmatprep.subr.mxu0 %v2225
    %2606 = vmatpush1.msra.mxu0 %v2224
    %2607 = vmatprep.subr.mxu0 %v2229
    %2608 = vmatpush1.msra.mxu0 %v2228
    %2609 = vmatprep.subr.mxu0 %v2233
    %2610 = vmatpush1.msra.mxu0 %v2232
    %2611 = vmatprep.subr.mxu0 %v2237
    %2612 = vmatpush1.msra.mxu0 %v2236
    %2613 = vmatprep.subr.mxu0 %v2241
    %2614 = vmatpush1.msra.mxu0 %v2240
    %2615 = vmatprep.subr.mxu0 %v2245
    %2616 = vmatpush1.msra.mxu0 %v2244
    %2617 = vmatprep.subr.mxu0 %v2249
    %2618 = vmatpush1.msra.mxu0 %v2248
    %2619 = vmatprep.subr.mxu0 %v2253
    %2620 = vmatpush1.msra.mxu0 %v2252
    %2621 = vmatprep.subr.mxu0 %v2257
    %2622 = vmatpush1.msra.mxu0 %v2256
    %2623 = vmatprep.subr.mxu0 %v2261
    %2624 = vmatpush1.msra.mxu0 %v2260
    %2625 = vmatprep.subr.mxu0 %v2265
    %2626 = vmatpush1.msra.mxu0 %v2264
    %2627 = vmatprep.subr.mxu0 %v2269
    %2628 = vmatpush1.msra.mxu0 %v2268
    %2629 = vmatprep.subr.mxu0 %v2273
    %2630 = vmatpush1.msra.mxu0 %v2272
    %2631 = vmatprep.subr.mxu0 %v2277
    %2632 = vmatpush1.msra.mxu0 %v2276
    %2633 = vmatprep.subr.mxu0 %v2281
    %2634 = vmatpush1.msra.mxu0 %v2280
    %2635 = vmatprep.subr.mxu0 %v2285
    %2636 = vmatpush1.msra.mxu0 %v2284
    %2637 = vmatprep.subr.mxu0 %v2289
    %2638 = vmatpush1.msra.mxu0 %v2288
    %2639 = vmatprep.subr.mxu0 %v2293
    %2640 = vmatpush1.msra.mxu0 %v2292
    %2641 = vmatprep.subr.mxu0 %v2297
    %2642 = vmatpush1.msra.mxu0 %v2296
    %2643 = vmatprep.subr.mxu0 %v2301
    %2644 = vmatpush1.msra.mxu0 %v2300
    %2645 = vmatprep.mubr.f32.mxu0 %v2111
    %2646 = vmatmul.mubr.f32.gmra.mrb[0].mxu0 %v1918
    %v2647 = vpop.f32.mrb[0].mxu0
    %v2648 = vadd.f32 %v2315, %v2647
    %v2649 = vpop.f32.mrb[0].mxu0
    %v2650 = vadd.f32 %v2319, %v2649
    %2651 = vmatprep.mubr.f32.mxu0 %v2113
    %2652 = vmatmul.mubr.f32.gmra.mrb[0].mxu0 %v1919
    %v2653 = vpop.f32.mrb[0].mxu0
    %v2654 = vadd.f32 %v2315, %v2653
    %v2655 = vpop.f32.mrb[0].mxu0
    %v2656 = vadd.f32 %v2319, %v2655
    %2657 = vmatprep.mubr.f32.mxu0 %v2115
    %2658 = vmatmul.mubr.f32.gmra.mrb[0].mxu0 %v1920
    %v2659 = vpop.f32.mrb[0].mxu0
    %v2660 = vadd.f32 %v2315, %v2659
    %v2661 = vpop.f32.mrb[0].mxu0
    %v2662 = vadd.f32 %v2319, %v2661
    %2663 = vmatprep.mubr.f32.mxu0 %v2117
    %2664 = vmatmul.mubr.f32.gmra.mrb[0].mxu0 %v1921
    %v2665 = vpop.f32.mrb[0].mxu0
    %v2666 = vadd.f32 %v2315, %v2665
    %v2667 = vpop.f32.mrb[0].mxu0
    %v2668 = vadd.f32 %v2319, %v2667
    %2669 = vmatprep.mubr.f32.mxu0 %v2119
    %2670 = vmatmul.mubr.f32.gmra.mrb[0].mxu0 %v1922
    %v2671 = vpop.f32.mrb[0].mxu0
    %v2672 = vadd.f32 %v2315, %v2671
    %v2673 = vpop.f32.mrb[0].mxu0
    %v2674 = vadd.f32 %v2319, %v2673
    %2675 = vmatprep.mubr.f32.mxu0 %v2121
    %2676 = vmatmul.mubr.f32.gmra.mrb[0].mxu0 %v1923
    %v2677 = vpop.f32.mrb[0].mxu0
    %v2678 = vadd.f32 %v2315, %v2677
    %v2679 = vpop.f32.mrb[0].mxu0
    %v2680 = vadd.f32 %v2319, %v2679
    %2681 = vmatprep.mubr.f32.mxu0 %v2123
    %2682 = vmatmul.mubr.f32.gmra.mrb[0].mxu0 %v1924
    %v2683 = vpop.f32.mrb[0].mxu0
    %v2684 = vadd.f32 %v2315, %v2683
    %v2685 = vpop.f32.mrb[0].mxu0
    %v2686 = vadd.f32 %v2319, %v2685
    %2687 = vmatprep.mubr.f32.mxu0 %v2125
    %2688 = vmatmul.mubr.f32.gmra.mrb[0].mxu0 %v1925
    %v2689 = vpop.f32.mrb[0].mxu0
    %v2690 = vadd.f32 %v2315, %v2689
    %v2691 = vpop.f32.mrb[0].mxu0
    %v2692 = vadd.f32 %v2319, %v2691
    %2693 = vmatprep.mubr.f32.mxu0 %v2127
    %2694 = vmatmul.mubr.f32.gmra.mrb[0].mxu0 %v1926
    %v2695 = vpop.f32.mrb[0].mxu0
    %v2696 = vadd.f32 %v2315, %v2695
    %v2697 = vpop.f32.mrb[0].mxu0
    %v2698 = vadd.f32 %v2319, %v2697
    %2699 = vmatprep.mubr.f32.mxu0 %v2129
    %2700 = vmatmul.mubr.f32.gmra.mrb[0].mxu0 %v1927
    %v2701 = vpop.f32.mrb[0].mxu0
    %v2702 = vadd.f32 %v2315, %v2701
    %v2703 = vpop.f32.mrb[0].mxu0
    %v2704 = vadd.f32 %v2319, %v2703
    %2705 = vmatprep.mubr.f32.mxu0 %v2131
    %2706 = vmatmul.mubr.f32.gmra.mrb[0].mxu0 %v1928
    %v2707 = vpop.f32.mrb[0].mxu0
    %v2708 = vadd.f32 %v2315, %v2707
    %v2709 = vpop.f32.mrb[0].mxu0
    %v2710 = vadd.f32 %v2319, %v2709
    %2711 = vmatprep.mubr.f32.mxu0 %v2133
    %2712 = vmatmul.mubr.f32.gmra.mrb[0].mxu0 %v1929
    %v2713 = vpop.f32.mrb[0].mxu0
    %v2714 = vadd.f32 %v2315, %v2713
    %v2715 = vpop.f32.mrb[0].mxu0
    %v2716 = vadd.f32 %v2319, %v2715
    %2717 = vmatprep.mubr.f32.mxu0 %v2135
    %2718 = vmatmul.mubr.f32.gmra.mrb[0].mxu0 %v1930
    %v2719 = vpop.f32.mrb[0].mxu0
    %v2720 = vadd.f32 %v2315, %v2719
    %v2721 = vpop.f32.mrb[0].mxu0
    %v2722 = vadd.f32 %v2319, %v2721
    %2723 = vmatprep.mubr.f32.mxu0 %v2137
    %2724 = vmatmul.mubr.f32.gmra.mrb[0].mxu0 %v1931
    %v2725 = vpop.f32.mrb[0].mxu0
    %v2726 = vadd.f32 %v2315, %v2725
    %v2727 = vpop.f32.mrb[0].mxu0
    %v2728 = vadd.f32 %v2319, %v2727
    %2729 = vmatprep.mubr.f32.mxu0 %v2139
    %2730 = vmatmul.mubr.f32.gmra.mrb[0].mxu0 %v1932
    %v2731 = vpop.f32.mrb[0].mxu0
    %v2732 = vadd.f32 %v2315, %v2731
    %v2733 = vpop.f32.mrb[0].mxu0
    %v2734 = vadd.f32 %v2319, %v2733
    %2735 = vmatprep.mubr.f32.mxu0 %v2141
    %2736 = vmatmul.mubr.f32.gmra.mrb[0].mxu0 %v1933
    %v2737 = vpop.f32.mrb[0].mxu0
    %v2738 = vadd.f32 %v2315, %v2737
    %v2739 = vpop.f32.mrb[0].mxu0
    %v2740 = vadd.f32 %v2319, %v2739
    %2741 = vmatprep.mubr.f32.mxu0 %v2143
    %2742 = vmatmul.mubr.f32.gmra.mrb[0].mxu0 %v1934
    %v2743 = vpop.f32.mrb[0].mxu0
    %v2744 = vadd.f32 %v2315, %v2743
    %v2745 = vpop.f32.mrb[0].mxu0
    %v2746 = vadd.f32 %v2319, %v2745
    %2747 = vmatprep.mubr.f32.mxu0 %v2145
    %2748 = vmatmul.mubr.f32.gmra.mrb[0].mxu0 %v1935
    %v2749 = vpop.f32.mrb[0].mxu0
    %v2750 = vadd.f32 %v2315, %v2749
    %v2751 = vpop.f32.mrb[0].mxu0
    %v2752 = vadd.f32 %v2319, %v2751
    %2753 = vmatprep.mubr.f32.mxu0 %v2147
    %2754 = vmatmul.mubr.f32.gmra.mrb[0].mxu0 %v1936
    %v2755 = vpop.f32.mrb[0].mxu0
    %v2756 = vadd.f32 %v2315, %v2755
    %v2757 = vpop.f32.mrb[0].mxu0
    %v2758 = vadd.f32 %v2319, %v2757
    %2759 = vmatprep.mubr.f32.mxu0 %v2149
    %2760 = vmatmul.mubr.f32.gmra.mrb[0].mxu0 %v1937
    %v2761 = vpop.f32.mrb[0].mxu0
    %v2762 = vadd.f32 %v2315, %v2761
    %v2763 = vpop.f32.mrb[0].mxu0
    %v2764 = vadd.f32 %v2319, %v2763
    %2765 = vmatprep.mubr.f32.mxu0 %v2151
    %2766 = vmatmul.mubr.f32.gmra.mrb[0].mxu0 %v1938
    %v2767 = vpop.f32.mrb[0].mxu0
    %v2768 = vadd.f32 %v2315, %v2767
    %v2769 = vpop.f32.mrb[0].mxu0
    %v2770 = vadd.f32 %v2319, %v2769
    %2771 = vmatprep.mubr.f32.mxu0 %v2153
    %2772 = vmatmul.mubr.f32.gmra.mrb[0].mxu0 %v1939
    %v2773 = vpop.f32.mrb[0].mxu0
    %v2774 = vadd.f32 %v2315, %v2773
    %v2775 = vpop.f32.mrb[0].mxu0
    %v2776 = vadd.f32 %v2319, %v2775
    %2777 = vmatprep.mubr.f32.mxu0 %v2155
    %2778 = vmatmul.mubr.f32.gmra.mrb[0].mxu0 %v1940
    %v2779 = vpop.f32.mrb[0].mxu0
    %v2780 = vadd.f32 %v2315, %v2779
    %v2781 = vpop.f32.mrb[0].mxu0
    %v2782 = vadd.f32 %v2319, %v2781
    %2783 = vmatprep.mubr.f32.mxu0 %v2157
    %2784 = vmatmul.mubr.f32.gmra.mrb[0].mxu0 %v1941
    %v2785 = vpop.f32.mrb[0].mxu0
    %v2786 = vadd.f32 %v2315, %v2785
    %v2787 = vpop.f32.mrb[0].mxu0
    %v2788 = vadd.f32 %v2319, %v2787
    %2789 = vmatprep.mubr.f32.mxu0 %v2159
    %2790 = vmatmul.mubr.f32.gmra.mrb[0].mxu0 %v1942
    %v2791 = vpop.f32.mrb[0].mxu0
    %v2792 = vadd.f32 %v2315, %v2791
    %v2793 = vpop.f32.mrb[0].mxu0
    %v2794 = vadd.f32 %v2319, %v2793
    %2795 = vmatprep.mubr.f32.mxu0 %v2161
    %2796 = vmatmul.mubr.f32.gmra.mrb[0].mxu0 %v1943
    %v2797 = vpop.f32.mrb[0].mxu0
    %v2798 = vadd.f32 %v2315, %v2797
    %v2799 = vpop.f32.mrb[0].mxu0
    %v2800 = vadd.f32 %v2319, %v2799
    %2801 = vmatprep.mubr.f32.mxu0 %v2163
    %2802 = vmatmul.mubr.f32.gmra.mrb[0].mxu0 %v1944
    %v2803 = vpop.f32.mrb[0].mxu0
    %v2804 = vadd.f32 %v2315, %v2803
    %v2805 = vpop.f32.mrb[0].mxu0
    %v2806 = vadd.f32 %v2319, %v2805
    %2807 = vmatprep.mubr.f32.mxu0 %v2165
    %2808 = vmatmul.mubr.f32.gmra.mrb[0].mxu0 %v1945
    %v2809 = vpop.f32.mrb[0].mxu0
    %v2810 = vadd.f32 %v2315, %v2809
    %v2811 = vpop.f32.mrb[0].mxu0
    %v2812 = vadd.f32 %v2319, %v2811
    %2813 = vmatprep.mubr.f32.mxu0 %v2167
    %2814 = vmatmul.mubr.f32.gmra.mrb[0].mxu0 %v1946
    %v2815 = vpop.f32.mrb[0].mxu0
    %v2816 = vadd.f32 %v2315, %v2815
    %v2817 = vpop.f32.mrb[0].mxu0
    %v2818 = vadd.f32 %v2319, %v2817
    %2819 = vmatprep.mubr.f32.mxu0 %v2169
    %2820 = vmatmul.mubr.f32.gmra.mrb[0].mxu0 %v1947
    %v2821 = vpop.f32.mrb[0].mxu0
    %v2822 = vadd.f32 %v2315, %v2821
    %v2823 = vpop.f32.mrb[0].mxu0
    %v2824 = vadd.f32 %v2319, %v2823
    %2825 = vmatprep.mubr.f32.mxu0 %v2171
    %2826 = vmatmul.mubr.f32.gmra.mrb[0].mxu0 %v1948
    %v2827 = vpop.f32.mrb[0].mxu0
    %v2828 = vadd.f32 %v2315, %v2827
    %v2829 = vpop.f32.mrb[0].mxu0
    %v2830 = vadd.f32 %v2319, %v2829
    %2831 = vmatprep.mubr.f32.mxu0 %v2173
    %2832 = vmatmul.mubr.f32.gmra.mrb[0].mxu0 %v1949
    %v2833 = vpop.f32.mrb[0].mxu0
    %v2834 = vadd.f32 %v2315, %v2833
    %v2835 = vpop.f32.mrb[0].mxu0
    %v2836 = vadd.f32 %v2319, %v2835
    %2837 = vdwg.mxu0
    %v2838 = vxor.u32 %v2391, 2147483648
    %v2839 = vxor.u32 %v2393, 2147483648
    %v2840 = vxor.u32 %v2397, 2147483648
    %v2841 = vxor.u32 %v2399, 2147483648
    %v2842 = vxor.u32 %v2403, 2147483648
    %v2843 = vxor.u32 %v2405, 2147483648
    %v2844 = vxor.u32 %v2409, 2147483648
    %v2845 = vxor.u32 %v2411, 2147483648
    %v2846 = vxor.u32 %v2415, 2147483648
    %v2847 = vxor.u32 %v2417, 2147483648
    %v2848 = vxor.u32 %v2421, 2147483648
    %v2849 = vxor.u32 %v2423, 2147483648
    %v2850 = vxor.u32 %v2427, 2147483648
    %v2851 = vxor.u32 %v2429, 2147483648
    %v2852 = vxor.u32 %v2433, 2147483648
    %v2853 = vxor.u32 %v2435, 2147483648
    %v2854 = vxor.u32 %v2439, 2147483648
    %v2855 = vxor.u32 %v2441, 2147483648
    %v2856 = vxor.u32 %v2445, 2147483648
    %v2857 = vxor.u32 %v2447, 2147483648
    %v2858 = vxor.u32 %v2451, 2147483648
    %v2859 = vxor.u32 %v2453, 2147483648
    %v2860 = vxor.u32 %v2457, 2147483648
    %v2861 = vxor.u32 %v2459, 2147483648
    %v2862 = vxor.u32 %v2463, 2147483648
    %v2863 = vxor.u32 %v2465, 2147483648
    %v2864 = vxor.u32 %v2469, 2147483648
    %v2865 = vxor.u32 %v2471, 2147483648
    %v2866 = vxor.u32 %v2475, 2147483648
    %v2867 = vxor.u32 %v2477, 2147483648
    %v2868 = vxor.u32 %v2481, 2147483648
    %v2869 = vxor.u32 %v2483, 2147483648
    %v2870 = vxor.u32 %v2487, 2147483648
    %v2871 = vxor.u32 %v2489, 2147483648
    %v2872 = vxor.u32 %v2493, 2147483648
    %v2873 = vxor.u32 %v2495, 2147483648
    %v2874 = vxor.u32 %v2499, 2147483648
    %v2875 = vxor.u32 %v2501, 2147483648
    %v2876 = vxor.u32 %v2505, 2147483648
    %v2877 = vxor.u32 %v2507, 2147483648
    %v2878 = vxor.u32 %v2511, 2147483648
    %v2879 = vxor.u32 %v2513, 2147483648
    %v2880 = vxor.u32 %v2517, 2147483648
    %v2881 = vxor.u32 %v2519, 2147483648
    %v2882 = vxor.u32 %v2523, 2147483648
    %v2883 = vxor.u32 %v2525, 2147483648
    %v2884 = vxor.u32 %v2529, 2147483648
    %v2885 = vxor.u32 %v2531, 2147483648
    %v2886 = vxor.u32 %v2535, 2147483648
    %v2887 = vxor.u32 %v2537, 2147483648
    %v2888 = vxor.u32 %v2541, 2147483648
    %v2889 = vxor.u32 %v2543, 2147483648
    %v2890 = vxor.u32 %v2547, 2147483648
    %v2891 = vxor.u32 %v2549, 2147483648
    %v2892 = vxor.u32 %v2553, 2147483648
    %v2893 = vxor.u32 %v2555, 2147483648
    %v2894 = vxor.u32 %v2559, 2147483648
    %v2895 = vxor.u32 %v2561, 2147483648
    %v2896 = vxor.u32 %v2565, 2147483648
    %v2897 = vxor.u32 %v2567, 2147483648
    %v2898 = vxor.u32 %v2571, 2147483648
    %v2899 = vxor.u32 %v2573, 2147483648
    %v2900 = vxor.u32 %v2577, 2147483648
    %v2901 = vxor.u32 %v2579, 2147483648
    %v2902 = vmul.f32 %v2838, 1.442695
    %v2903 = vpow.pop %v2902
    %v2904 = vmul.f32 %v2839, 1.442695
    %v2905 = vpow.pop %v2904
    %v2906 = vmul.f32 %v2840, 1.442695
    %v2907 = vpow.pop %v2906
    %v2908 = vmul.f32 %v2841, 1.442695
    %v2909 = vpow.pop %v2908
    %v2910 = vmul.f32 %v2842, 1.442695
    %v2911 = vpow.pop %v2910
    %v2912 = vmul.f32 %v2843, 1.442695
    %v2913 = vpow.pop %v2912
    %v2914 = vmul.f32 %v2844, 1.442695
    %v2915 = vpow.pop %v2914
    %v2916 = vmul.f32 %v2845, 1.442695
    %v2917 = vpow.pop %v2916
    %v2918 = vmul.f32 %v2846, 1.442695
    %v2919 = vpow.pop %v2918
    %v2920 = vmul.f32 %v2847, 1.442695
    %v2921 = vpow.pop %v2920
    %v2922 = vmul.f32 %v2848, 1.442695
    %v2923 = vpow.pop %v2922
    %v2924 = vmul.f32 %v2849, 1.442695
    %v2925 = vpow.pop %v2924
    %v2926 = vmul.f32 %v2850, 1.442695
    %v2927 = vpow.pop %v2926
    %v2928 = vmul.f32 %v2851, 1.442695
    %v2929 = vpow.pop %v2928
    %v2930 = vmul.f32 %v2852, 1.442695
    %v2931 = vpow.pop %v2930
    %v2932 = vmul.f32 %v2853, 1.442695
    %v2933 = vpow.pop %v2932
    %v2934 = vmul.f32 %v2854, 1.442695
    %v2935 = vpow.pop %v2934
    %v2936 = vmul.f32 %v2855, 1.442695
    %v2937 = vpow.pop %v2936
    %v2938 = vmul.f32 %v2856, 1.442695
    %v2939 = vpow.pop %v2938
    %v2940 = vmul.f32 %v2857, 1.442695
    %v2941 = vpow.pop %v2940
    %v2942 = vmul.f32 %v2858, 1.442695
    %v2943 = vpow.pop %v2942
    %v2944 = vmul.f32 %v2859, 1.442695
    %v2945 = vpow.pop %v2944
    %v2946 = vmul.f32 %v2860, 1.442695
    %v2947 = vpow.pop %v2946
    %v2948 = vmul.f32 %v2861, 1.442695
    %v2949 = vpow.pop %v2948
    %v2950 = vmul.f32 %v2862, 1.442695
    %v2951 = vpow.pop %v2950
    %v2952 = vmul.f32 %v2863, 1.442695
    %v2953 = vpow.pop %v2952
    %v2954 = vmul.f32 %v2864, 1.442695
    %v2955 = vpow.pop %v2954
    %v2956 = vmul.f32 %v2865, 1.442695
    %v2957 = vpow.pop %v2956
    %v2958 = vmul.f32 %v2866, 1.442695
    %v2959 = vpow.pop %v2958
    %v2960 = vmul.f32 %v2867, 1.442695
    %v2961 = vpow.pop %v2960
    %v2962 = vmul.f32 %v2868, 1.442695
    %v2963 = vpow.pop %v2962
    %v2964 = vmul.f32 %v2869, 1.442695
    %v2965 = vpow.pop %v2964
    %v2966 = vmul.f32 %v2870, 1.442695
    %v2967 = vpow.pop %v2966
    %v2968 = vmul.f32 %v2871, 1.442695
    %v2969 = vpow.pop %v2968
    %v2970 = vmul.f32 %v2872, 1.442695
    %v2971 = vpow.pop %v2970
    %v2972 = vmul.f32 %v2873, 1.442695
    %v2973 = vpow.pop %v2972
    %v2974 = vmul.f32 %v2874, 1.442695
    %v2975 = vpow.pop %v2974
    %v2976 = vmul.f32 %v2875, 1.442695
    %v2977 = vpow.pop %v2976
    %v2978 = vmul.f32 %v2876, 1.442695
    %v2979 = vpow.pop %v2978
    %v2980 = vmul.f32 %v2877, 1.442695
    %v2981 = vpow.pop %v2980
    %v2982 = vmul.f32 %v2878, 1.442695
    %v2983 = vpow.pop %v2982
    %v2984 = vmul.f32 %v2879, 1.442695
    %v2985 = vpow.pop %v2984
    %v2986 = vmul.f32 %v2880, 1.442695
    %v2987 = vpow.pop %v2986
    %v2988 = vmul.f32 %v2881, 1.442695
    %v2989 = vpow.pop %v2988
    %v2990 = vmul.f32 %v2882, 1.442695
    %v2991 = vpow.pop %v2990
    %v2992 = vmul.f32 %v2883, 1.442695
    %v2993 = vpow.pop %v2992
    %v2994 = vmul.f32 %v2884, 1.442695
    %v2995 = vpow.pop %v2994
    %v2996 = vmul.f32 %v2885, 1.442695
    %v2997 = vpow.pop %v2996
    %v2998 = vmul.f32 %v2886, 1.442695
    %v2999 = vpow.pop %v2998
    %v3000 = vmul.f32 %v2887, 1.442695
    %v3001 = vpow.pop %v3000
    %v3002 = vmul.f32 %v2888, 1.442695
    %v3003 = vpow.pop %v3002
    %v3004 = vmul.f32 %v2889, 1.442695
    %v3005 = vpow.pop %v3004
    %v3006 = vmul.f32 %v2890, 1.442695
    %v3007 = vpow.pop %v3006
    %v3008 = vmul.f32 %v2891, 1.442695
    %v3009 = vpow.pop %v3008
    %v3010 = vmul.f32 %v2892, 1.442695
    %v3011 = vpow.pop %v3010
    %v3012 = vmul.f32 %v2893, 1.442695
    %v3013 = vpow.pop %v3012
    %v3014 = vmul.f32 %v2894, 1.442695
    %v3015 = vpow.pop %v3014
    %v3016 = vmul.f32 %v2895, 1.442695
    %v3017 = vpow.pop %v3016
    %v3018 = vmul.f32 %v2896, 1.442695
    %v3019 = vpow.pop %v3018
    %v3020 = vmul.f32 %v2897, 1.442695
    %v3021 = vpow.pop %v3020
    %v3022 = vmul.f32 %v2898, 1.442695
    %v3023 = vpow.pop %v3022
    %v3024 = vmul.f32 %v2899, 1.442695
    %v3025 = vpow.pop %v3024
    %v3026 = vmul.f32 %v2900, 1.442695
    %v3027 = vpow.pop %v3026
    %v3028 = vmul.f32 %v2901, 1.442695
    %v3029 = vpow.pop %v3028
    %v3030 = vadd.f32 %v2903, 1.0
    %v3031 = vadd.f32 %v2905, 1.0
    %v3032 = vadd.f32 %v2907, 1.0
    %v3033 = vadd.f32 %v2909, 1.0
    %v3034 = vadd.f32 %v2911, 1.0
    %v3035 = vadd.f32 %v2913, 1.0
    %v3036 = vadd.f32 %v2915, 1.0
    %v3037 = vadd.f32 %v2917, 1.0
    %v3038 = vadd.f32 %v2919, 1.0
    %v3039 = vadd.f32 %v2921, 1.0
    %v3040 = vadd.f32 %v2923, 1.0
    %v3041 = vadd.f32 %v2925, 1.0
    %v3042 = vadd.f32 %v2927, 1.0
    %v3043 = vadd.f32 %v2929, 1.0
    %v3044 = vadd.f32 %v2931, 1.0
    %v3045 = vadd.f32 %v2933, 1.0
    %v3046 = vadd.f32 %v2935, 1.0
    %v3047 = vadd.f32 %v2937, 1.0
    %v3048 = vadd.f32 %v2939, 1.0
    %v3049 = vadd.f32 %v2941, 1.0
    %v3050 = vadd.f32 %v2943, 1.0
    %v3051 = vadd.f32 %v2945, 1.0
    %v3052 = vadd.f32 %v2947, 1.0
    %v3053 = vadd.f32 %v2949, 1.0
    %v3054 = vadd.f32 %v2951, 1.0
    %v3055 = vadd.f32 %v2953, 1.0
    %v3056 = vadd.f32 %v2955, 1.0
    %v3057 = vadd.f32 %v2957, 1.0
    %v3058 = vadd.f32 %v2959, 1.0
    %v3059 = vadd.f32 %v2961, 1.0
    %v3060 = vadd.f32 %v2963, 1.0
    %v3061 = vadd.f32 %v2965, 1.0
    %v3062 = vadd.f32 %v2967, 1.0
    %v3063 = vadd.f32 %v2969, 1.0
    %v3064 = vadd.f32 %v2971, 1.0
    %v3065 = vadd.f32 %v2973, 1.0
    %v3066 = vadd.f32 %v2975, 1.0
    %v3067 = vadd.f32 %v2977, 1.0
    %v3068 = vadd.f32 %v2979, 1.0
    %v3069 = vadd.f32 %v2981, 1.0
    %v3070 = vadd.f32 %v2983, 1.0
    %v3071 = vadd.f32 %v2985, 1.0
    %v3072 = vadd.f32 %v2987, 1.0
    %v3073 = vadd.f32 %v2989, 1.0
    %v3074 = vadd.f32 %v2991, 1.0
    %v3075 = vadd.f32 %v2993, 1.0
    %v3076 = vadd.f32 %v2995, 1.0
    %v3077 = vadd.f32 %v2997, 1.0
    %v3078 = vadd.f32 %v2999, 1.0
    %v3079 = vadd.f32 %v3001, 1.0
    %v3080 = vadd.f32 %v3003, 1.0
    %v3081 = vadd.f32 %v3005, 1.0
    %v3082 = vadd.f32 %v3007, 1.0
    %v3083 = vadd.f32 %v3009, 1.0
    %v3084 = vadd.f32 %v3011, 1.0
    %v3085 = vadd.f32 %v3013, 1.0
    %v3086 = vadd.f32 %v3015, 1.0
    %v3087 = vadd.f32 %v3017, 1.0
    %v3088 = vadd.f32 %v3019, 1.0
    %v3089 = vadd.f32 %v3021, 1.0
    %v3090 = vadd.f32 %v3023, 1.0
    %v3091 = vadd.f32 %v3025, 1.0
    %v3092 = vadd.f32 %v3027, 1.0
    %v3093 = vadd.f32 %v3029, 1.0
    %v3094 = vrcp.pop %v3030
    %v3095 = vmul.f32 1.0, %v3094
    %v3096 = vrcp.pop %v3031
    %v3097 = vmul.f32 1.0, %v3096
    %v3098 = vrcp.pop %v3032
    %v3099 = vmul.f32 1.0, %v3098
    %v3100 = vrcp.pop %v3033
    %v3101 = vmul.f32 1.0, %v3100
    %v3102 = vrcp.pop %v3034
    %v3103 = vmul.f32 1.0, %v3102
    %v3104 = vrcp.pop %v3035
    %v3105 = vmul.f32 1.0, %v3104
    %v3106 = vrcp.pop %v3036
    %v3107 = vmul.f32 1.0, %v3106
    %v3108 = vrcp.pop %v3037
    %v3109 = vmul.f32 1.0, %v3108
    %v3110 = vrcp.pop %v3038
    %v3111 = vmul.f32 1.0, %v3110
    %v3112 = vrcp.pop %v3039
    %v3113 = vmul.f32 1.0, %v3112
    %v3114 = vrcp.pop %v3040
    %v3115 = vmul.f32 1.0, %v3114
    %v3116 = vrcp.pop %v3041
    %v3117 = vmul.f32 1.0, %v3116
    %v3118 = vrcp.pop %v3042
    %v3119 = vmul.f32 1.0, %v3118
    %v3120 = vrcp.pop %v3043
    %v3121 = vmul.f32 1.0, %v3120
    %v3122 = vrcp.pop %v3044
    %v3123 = vmul.f32 1.0, %v3122
    %v3124 = vrcp.pop %v3045
    %v3125 = vmul.f32 1.0, %v3124
    %v3126 = vrcp.pop %v3046
    %v3127 = vmul.f32 1.0, %v3126
    %v3128 = vrcp.pop %v3047
    %v3129 = vmul.f32 1.0, %v3128
    %v3130 = vrcp.pop %v3048
    %v3131 = vmul.f32 1.0, %v3130
    %v3132 = vrcp.pop %v3049
    %v3133 = vmul.f32 1.0, %v3132
    %v3134 = vrcp.pop %v3050
    %v3135 = vmul.f32 1.0, %v3134
    %v3136 = vrcp.pop %v3051
    %v3137 = vmul.f32 1.0, %v3136
    %v3138 = vrcp.pop %v3052
    %v3139 = vmul.f32 1.0, %v3138
    %v3140 = vrcp.pop %v3053
    %v3141 = vmul.f32 1.0, %v3140
    %v3142 = vrcp.pop %v3054
    %v3143 = vmul.f32 1.0, %v3142
    %v3144 = vrcp.pop %v3055
    %v3145 = vmul.f32 1.0, %v3144
    %v3146 = vrcp.pop %v3056
    %v3147 = vmul.f32 1.0, %v3146
    %v3148 = vrcp.pop %v3057
    %v3149 = vmul.f32 1.0, %v3148
    %v3150 = vrcp.pop %v3058
    %v3151 = vmul.f32 1.0, %v3150
    %v3152 = vrcp.pop %v3059
    %v3153 = vmul.f32 1.0, %v3152
    %v3154 = vrcp.pop %v3060
    %v3155 = vmul.f32 1.0, %v3154
    %v3156 = vrcp.pop %v3061
    %v3157 = vmul.f32 1.0, %v3156
    %v3158 = vrcp.pop %v3062
    %v3159 = vmul.f32 1.0, %v3158
    %v3160 = vrcp.pop %v3063
    %v3161 = vmul.f32 1.0, %v3160
    %v3162 = vrcp.pop %v3064
    %v3163 = vmul.f32 1.0, %v3162
    %v3164 = vrcp.pop %v3065
    %v3165 = vmul.f32 1.0, %v3164
    %v3166 = vrcp.pop %v3066
    %v3167 = vmul.f32 1.0, %v3166
    %v3168 = vrcp.pop %v3067
    %v3169 = vmul.f32 1.0, %v3168
    %v3170 = vrcp.pop %v3068
    %v3171 = vmul.f32 1.0, %v3170
    %v3172 = vrcp.pop %v3069
    %v3173 = vmul.f32 1.0, %v3172
    %v3174 = vrcp.pop %v3070
    %v3175 = vmul.f32 1.0, %v3174
    %v3176 = vrcp.pop %v3071
    %v3177 = vmul.f32 1.0, %v3176
    %v3178 = vrcp.pop %v3072
    %v3179 = vmul.f32 1.0, %v3178
    %v3180 = vrcp.pop %v3073
    %v3181 = vmul.f32 1.0, %v3180
    %v3182 = vrcp.pop %v3074
    %v3183 = vmul.f32 1.0, %v3182
    %v3184 = vrcp.pop %v3075
    %v3185 = vmul.f32 1.0, %v3184
    %v3186 = vrcp.pop %v3076
    %v3187 = vmul.f32 1.0, %v3186
    %v3188 = vrcp.pop %v3077
    %v3189 = vmul.f32 1.0, %v3188
    %v3190 = vrcp.pop %v3078
    %v3191 = vmul.f32 1.0, %v3190
    %v3192 = vrcp.pop %v3079
    %v3193 = vmul.f32 1.0, %v3192
    %v3194 = vrcp.pop %v3080
    %v3195 = vmul.f32 1.0, %v3194
    %v3196 = vrcp.pop %v3081
    %v3197 = vmul.f32 1.0, %v3196
    %v3198 = vrcp.pop %v3082
    %v3199 = vmul.f32 1.0, %v3198
    %v3200 = vrcp.pop %v3083
    %v3201 = vmul.f32 1.0, %v3200
    %v3202 = vrcp.pop %v3084
    %v3203 = vmul.f32 1.0, %v3202
    %v3204 = vrcp.pop %v3085
    %v3205 = vmul.f32 1.0, %v3204
    %v3206 = vrcp.pop %v3086
    %v3207 = vmul.f32 1.0, %v3206
    %v3208 = vrcp.pop %v3087
    %v3209 = vmul.f32 1.0, %v3208
    %v3210 = vrcp.pop %v3088
    %v3211 = vmul.f32 1.0, %v3210
    %v3212 = vrcp.pop %v3089
    %v3213 = vmul.f32 1.0, %v3212
    %v3214 = vrcp.pop %v3090
    %v3215 = vmul.f32 1.0, %v3214
    %v3216 = vrcp.pop %v3091
    %v3217 = vmul.f32 1.0, %v3216
    %v3218 = vrcp.pop %v3092
    %v3219 = vmul.f32 1.0, %v3218
    %v3220 = vrcp.pop %v3093
    %v3221 = vmul.f32 1.0, %v3220
    %v3222 = vadd.f32 %v2648, %v402
    %v3223 = vadd.f32 %v2650, %v657
    %v3224 = vadd.f32 %v2654, %v408
    %v3225 = vadd.f32 %v2656, %v663
    %v3226 = vadd.f32 %v2660, %v414
    %v3227 = vadd.f32 %v2662, %v669
    %v3228 = vadd.f32 %v2666, %v420
    %v3229 = vadd.f32 %v2668, %v675
    %v3230 = vadd.f32 %v2672, %v426
    %v3231 = vadd.f32 %v2674, %v681
    %v3232 = vadd.f32 %v2678, %v432
    %v3233 = vadd.f32 %v2680, %v687
    %v3234 = vadd.f32 %v2684, %v438
    %v3235 = vadd.f32 %v2686, %v693
    %v3236 = vadd.f32 %v2690, %v444
    %v3237 = vadd.f32 %v2692, %v699
    %v3238 = vadd.f32 %v2696, %v450
    %v3239 = vadd.f32 %v2698, %v705
    %v3240 = vadd.f32 %v2702, %v456
    %v3241 = vadd.f32 %v2704, %v711
    %v3242 = vadd.f32 %v2708, %v462
    %v3243 = vadd.f32 %v2710, %v717
    %v3244 = vadd.f32 %v2714, %v468
    %v3245 = vadd.f32 %v2716, %v723
    %v3246 = vadd.f32 %v2720, %v474
    %v3247 = vadd.f32 %v2722, %v729
    %v3248 = vadd.f32 %v2726, %v480
    %v3249 = vadd.f32 %v2728, %v735
    %v3250 = vadd.f32 %v2732, %v486
    %v3251 = vadd.f32 %v2734, %v741
    %v3252 = vadd.f32 %v2738, %v492
    %v3253 = vadd.f32 %v2740, %v747
    %v3254 = vadd.f32 %v2744, %v498
    %v3255 = vadd.f32 %v2746, %v753
    %v3256 = vadd.f32 %v2750, %v504
    %v3257 = vadd.f32 %v2752, %v759
    %v3258 = vadd.f32 %v2756, %v510
    %v3259 = vadd.f32 %v2758, %v765
    %v3260 = vadd.f32 %v2762, %v516
    %v3261 = vadd.f32 %v2764, %v771
    %v3262 = vadd.f32 %v2768, %v522
    %v3263 = vadd.f32 %v2770, %v777
    %v3264 = vadd.f32 %v2774, %v528
    %v3265 = vadd.f32 %v2776, %v783
    %v3266 = vadd.f32 %v2780, %v534
    %v3267 = vadd.f32 %v2782, %v789
    %v3268 = vadd.f32 %v2786, %v540
    %v3269 = vadd.f32 %v2788, %v795
    %v3270 = vadd.f32 %v2792, %v546
    %v3271 = vadd.f32 %v2794, %v801
    %v3272 = vadd.f32 %v2798, %v552
    %v3273 = vadd.f32 %v2800, %v807
    %v3274 = vadd.f32 %v2804, %v558
    %v3275 = vadd.f32 %v2806, %v813
    %v3276 = vadd.f32 %v2810, %v564
    %v3277 = vadd.f32 %v2812, %v819
    %v3278 = vadd.f32 %v2816, %v570
    %v3279 = vadd.f32 %v2818, %v825
    %v3280 = vadd.f32 %v2822, %v576
    %v3281 = vadd.f32 %v2824, %v831
    %v3282 = vadd.f32 %v2828, %v582
    %v3283 = vadd.f32 %v2830, %v837
    %v3284 = vadd.f32 %v2834, %v588
    %v3285 = vadd.f32 %v2836, %v843
    %v3286 = vmul.f32 %v3222, 0.5
    %v3287 = vmul.f32 %v3223, 0.5
    %v3288 = vmul.f32 %v3224, 0.5
    %v3289 = vmul.f32 %v3225, 0.5
    %v3290 = vmul.f32 %v3226, 0.5
    %v3291 = vmul.f32 %v3227, 0.5
    %v3292 = vmul.f32 %v3228, 0.5
    %v3293 = vmul.f32 %v3229, 0.5
    %v3294 = vmul.f32 %v3230, 0.5
    %v3295 = vmul.f32 %v3231, 0.5
    %v3296 = vmul.f32 %v3232, 0.5
    %v3297 = vmul.f32 %v3233, 0.5
    %v3298 = vmul.f32 %v3234, 0.5
    %v3299 = vmul.f32 %v3235, 0.5
    %v3300 = vmul.f32 %v3236, 0.5
    %v3301 = vmul.f32 %v3237, 0.5
    %v3302 = vmul.f32 %v3238, 0.5
    %v3303 = vmul.f32 %v3239, 0.5
    %v3304 = vmul.f32 %v3240, 0.5
    %v3305 = vmul.f32 %v3241, 0.5
    %v3306 = vmul.f32 %v3242, 0.5
    %v3307 = vmul.f32 %v3243, 0.5
    %v3308 = vmul.f32 %v3244, 0.5
    %v3309 = vmul.f32 %v3245, 0.5
    %v3310 = vmul.f32 %v3246, 0.5
    %v3311 = vmul.f32 %v3247, 0.5
    %v3312 = vmul.f32 %v3248, 0.5
    %v3313 = vmul.f32 %v3249, 0.5
    %v3314 = vmul.f32 %v3250, 0.5
    %v3315 = vmul.f32 %v3251, 0.5
    %v3316 = vmul.f32 %v3252, 0.5
    %v3317 = vmul.f32 %v3253, 0.5
    %v3318 = vmul.f32 %v3254, 0.5
    %v3319 = vmul.f32 %v3255, 0.5
    %v3320 = vmul.f32 %v3256, 0.5
    %v3321 = vmul.f32 %v3257, 0.5
    %v3322 = vmul.f32 %v3258, 0.5
    %v3323 = vmul.f32 %v3259, 0.5
    %v3324 = vmul.f32 %v3260, 0.5
    %v3325 = vmul.f32 %v3261, 0.5
    %v3326 = vmul.f32 %v3262, 0.5
    %v3327 = vmul.f32 %v3263, 0.5
    %v3328 = vmul.f32 %v3264, 0.5
    %v3329 = vmul.f32 %v3265, 0.5
    %v3330 = vmul.f32 %v3266, 0.5
    %v3331 = vmul.f32 %v3267, 0.5
    %v3332 = vmul.f32 %v3268, 0.5
    %v3333 = vmul.f32 %v3269, 0.5
    %v3334 = vmul.f32 %v3270, 0.5
    %v3335 = vmul.f32 %v3271, 0.5
    %v3336 = vmul.f32 %v3272, 0.5
    %v3337 = vmul.f32 %v3273, 0.5
    %v3338 = vmul.f32 %v3274, 0.5
    %v3339 = vmul.f32 %v3275, 0.5
    %v3340 = vmul.f32 %v3276, 0.5
    %v3341 = vmul.f32 %v3277, 0.5
    %v3342 = vmul.f32 %v3278, 0.5
    %v3343 = vmul.f32 %v3279, 0.5
    %v3344 = vmul.f32 %v3280, 0.5
    %v3345 = vmul.f32 %v3281, 0.5
    %v3346 = vmul.f32 %v3282, 0.5
    %v3347 = vmul.f32 %v3283, 0.5
    %v3348 = vmul.f32 %v3284, 0.5
    %v3349 = vmul.f32 %v3285, 0.5
    %v3350 = vmul.f32 %v3095, 0.5
    %v3351 = vmul.f32 %v3097, 0.5
    %v3352 = vmul.f32 %v3099, 0.5
    %v3353 = vmul.f32 %v3101, 0.5
    %v3354 = vmul.f32 %v3103, 0.5
    %v3355 = vmul.f32 %v3105, 0.5
    %v3356 = vmul.f32 %v3107, 0.5
    %v3357 = vmul.f32 %v3109, 0.5
    %v3358 = vmul.f32 %v3111, 0.5
    %v3359 = vmul.f32 %v3113, 0.5
    %v3360 = vmul.f32 %v3115, 0.5
    %v3361 = vmul.f32 %v3117, 0.5
    %v3362 = vmul.f32 %v3119, 0.5
    %v3363 = vmul.f32 %v3121, 0.5
    %v3364 = vmul.f32 %v3123, 0.5
    %v3365 = vmul.f32 %v3125, 0.5
    %v3366 = vmul.f32 %v3127, 0.5
    %v3367 = vmul.f32 %v3129, 0.5
    %v3368 = vmul.f32 %v3131, 0.5
    %v3369 = vmul.f32 %v3133, 0.5
    %v3370 = vmul.f32 %v3135, 0.5
    %v3371 = vmul.f32 %v3137, 0.5
    %v3372 = vmul.f32 %v3139, 0.5
    %v3373 = vmul.f32 %v3141, 0.5
    %v3374 = vmul.f32 %v3143, 0.5
    %v3375 = vmul.f32 %v3145, 0.5
    %v3376 = vmul.f32 %v3147, 0.5
    %v3377 = vmul.f32 %v3149, 0.5
    %v3378 = vmul.f32 %v3151, 0.5
    %v3379 = vmul.f32 %v3153, 0.5
    %v3380 = vmul.f32 %v3155, 0.5
    %v3381 = vmul.f32 %v3157, 0.5
    %v3382 = vmul.f32 %v3159, 0.5
    %v3383 = vmul.f32 %v3161, 0.5
    %v3384 = vmul.f32 %v3163, 0.5
    %v3385 = vmul.f32 %v3165, 0.5
    %v3386 = vmul.f32 %v3167, 0.5
    %v3387 = vmul.f32 %v3169, 0.5
    %v3388 = vmul.f32 %v3171, 0.5
    %v3389 = vmul.f32 %v3173, 0.5
    %v3390 = vmul.f32 %v3175, 0.5
    %v3391 = vmul.f32 %v3177, 0.5
    %v3392 = vmul.f32 %v3179, 0.5
    %v3393 = vmul.f32 %v3181, 0.5
    %v3394 = vmul.f32 %v3183, 0.5
    %v3395 = vmul.f32 %v3185, 0.5
    %v3396 = vmul.f32 %v3187, 0.5
    %v3397 = vmul.f32 %v3189, 0.5
    %v3398 = vmul.f32 %v3191, 0.5
    %v3399 = vmul.f32 %v3193, 0.5
    %v3400 = vmul.f32 %v3195, 0.5
    %v3401 = vmul.f32 %v3197, 0.5
    %v3402 = vmul.f32 %v3199, 0.5
    %v3403 = vmul.f32 %v3201, 0.5
    %v3404 = vmul.f32 %v3203, 0.5
    %v3405 = vmul.f32 %v3205, 0.5
    %v3406 = vmul.f32 %v3207, 0.5
    %v3407 = vmul.f32 %v3209, 0.5
    %v3408 = vmul.f32 %v3211, 0.5
    %v3409 = vmul.f32 %v3213, 0.5
    %v3410 = vmul.f32 %v3215, 0.5
    %v3411 = vmul.f32 %v3217, 0.5
    %v3412 = vmul.f32 %v3219, 0.5
    %v3413 = vmul.f32 %v3221, 0.5
    %v3414 = vadd.f32 %v3286, %v3350
    %v3415 = vadd.f32 %v3287, %v3351
    %v3416 = vadd.f32 %v3288, %v3352
    %v3417 = vadd.f32 %v3289, %v3353
    %v3418 = vadd.f32 %v3290, %v3354
    %v3419 = vadd.f32 %v3291, %v3355
    %v3420 = vadd.f32 %v3292, %v3356
    %v3421 = vadd.f32 %v3293, %v3357
    %v3422 = vadd.f32 %v3294, %v3358
    %v3423 = vadd.f32 %v3295, %v3359
    %v3424 = vadd.f32 %v3296, %v3360
    %v3425 = vadd.f32 %v3297, %v3361
    %v3426 = vadd.f32 %v3298, %v3362
    %v3427 = vadd.f32 %v3299, %v3363
    %v3428 = vadd.f32 %v3300, %v3364
    %v3429 = vadd.f32 %v3301, %v3365
    %v3430 = vadd.f32 %v3302, %v3366
    %v3431 = vadd.f32 %v3303, %v3367
    %v3432 = vadd.f32 %v3304, %v3368
    %v3433 = vadd.f32 %v3305, %v3369
    %v3434 = vadd.f32 %v3306, %v3370
    %v3435 = vadd.f32 %v3307, %v3371
    %v3436 = vadd.f32 %v3308, %v3372
    %v3437 = vadd.f32 %v3309, %v3373
    %v3438 = vadd.f32 %v3310, %v3374
    %v3439 = vadd.f32 %v3311, %v3375
    %v3440 = vadd.f32 %v3312, %v3376
    %v3441 = vadd.f32 %v3313, %v3377
    %v3442 = vadd.f32 %v3314, %v3378
    %v3443 = vadd.f32 %v3315, %v3379
    %v3444 = vadd.f32 %v3316, %v3380
    %v3445 = vadd.f32 %v3317, %v3381
    %v3446 = vadd.f32 %v3318, %v3382
    %v3447 = vadd.f32 %v3319, %v3383
    %v3448 = vadd.f32 %v3320, %v3384
    %v3449 = vadd.f32 %v3321, %v3385
    %v3450 = vadd.f32 %v3322, %v3386
    %v3451 = vadd.f32 %v3323, %v3387
    %v3452 = vadd.f32 %v3324, %v3388
    %v3453 = vadd.f32 %v3325, %v3389
    %v3454 = vadd.f32 %v3326, %v3390
    %v3455 = vadd.f32 %v3327, %v3391
    %v3456 = vadd.f32 %v3328, %v3392
    %v3457 = vadd.f32 %v3329, %v3393
    %v3458 = vadd.f32 %v3330, %v3394
    %v3459 = vadd.f32 %v3331, %v3395
    %v3460 = vadd.f32 %v3332, %v3396
    %v3461 = vadd.f32 %v3333, %v3397
    %v3462 = vadd.f32 %v3334, %v3398
    %v3463 = vadd.f32 %v3335, %v3399
    %v3464 = vadd.f32 %v3336, %v3400
    %v3465 = vadd.f32 %v3337, %v3401
    %v3466 = vadd.f32 %v3338, %v3402
    %v3467 = vadd.f32 %v3339, %v3403
    %v3468 = vadd.f32 %v3340, %v3404
    %v3469 = vadd.f32 %v3341, %v3405
    %v3470 = vadd.f32 %v3342, %v3406
    %v3471 = vadd.f32 %v3343, %v3407
    %v3472 = vadd.f32 %v3344, %v3408
    %v3473 = vadd.f32 %v3345, %v3409
    %v3474 = vadd.f32 %v3346, %v3410
    %v3475 = vadd.f32 %v3347, %v3411
    %v3476 = vadd.f32 %v3348, %v3412
    %v3477 = vadd.f32 %v3349, %v3413
    %v3478 = vxor.u32 %v3414, 2147483648
    %v3479 = vxor.u32 %v3415, 2147483648
    %v3480 = vxor.u32 %v3416, 2147483648
    %v3481 = vxor.u32 %v3417, 2147483648
    %v3482 = vxor.u32 %v3418, 2147483648
    %v3483 = vxor.u32 %v3419, 2147483648
    %v3484 = vxor.u32 %v3420, 2147483648
    %v3485 = vxor.u32 %v3421, 2147483648
    %v3486 = vxor.u32 %v3422, 2147483648
    %v3487 = vxor.u32 %v3423, 2147483648
    %v3488 = vxor.u32 %v3424, 2147483648
    %v3489 = vxor.u32 %v3425, 2147483648
    %v3490 = vxor.u32 %v3426, 2147483648
    %v3491 = vxor.u32 %v3427, 2147483648
    %v3492 = vxor.u32 %v3428, 2147483648
    %v3493 = vxor.u32 %v3429, 2147483648
    %v3494 = vxor.u32 %v3430, 2147483648
    %v3495 = vxor.u32 %v3431, 2147483648
    %v3496 = vxor.u32 %v3432, 2147483648
    %v3497 = vxor.u32 %v3433, 2147483648
    %v3498 = vxor.u32 %v3434, 2147483648
    %v3499 = vxor.u32 %v3435, 2147483648
    %v3500 = vxor.u32 %v3436, 2147483648
    %v3501 = vxor.u32 %v3437, 2147483648
    %v3502 = vxor.u32 %v3438, 2147483648
    %v3503 = vxor.u32 %v3439, 2147483648
    %v3504 = vxor.u32 %v3440, 2147483648
    %v3505 = vxor.u32 %v3441, 2147483648
    %v3506 = vxor.u32 %v3442, 2147483648
    %v3507 = vxor.u32 %v3443, 2147483648
    %v3508 = vxor.u32 %v3444, 2147483648
    %v3509 = vxor.u32 %v3445, 2147483648
    %v3510 = vxor.u32 %v3446, 2147483648
    %v3511 = vxor.u32 %v3447, 2147483648
    %v3512 = vxor.u32 %v3448, 2147483648
    %v3513 = vxor.u32 %v3449, 2147483648
    %v3514 = vxor.u32 %v3450, 2147483648
    %v3515 = vxor.u32 %v3451, 2147483648
    %v3516 = vxor.u32 %v3452, 2147483648
    %v3517 = vxor.u32 %v3453, 2147483648
    %v3518 = vxor.u32 %v3454, 2147483648
    %v3519 = vxor.u32 %v3455, 2147483648
    %v3520 = vxor.u32 %v3456, 2147483648
    %v3521 = vxor.u32 %v3457, 2147483648
    %v3522 = vxor.u32 %v3458, 2147483648
    %v3523 = vxor.u32 %v3459, 2147483648
    %v3524 = vxor.u32 %v3460, 2147483648
    %v3525 = vxor.u32 %v3461, 2147483648
    %v3526 = vxor.u32 %v3462, 2147483648
    %v3527 = vxor.u32 %v3463, 2147483648
    %v3528 = vxor.u32 %v3464, 2147483648
    %v3529 = vxor.u32 %v3465, 2147483648
    %v3530 = vxor.u32 %v3466, 2147483648
    %v3531 = vxor.u32 %v3467, 2147483648
    %v3532 = vxor.u32 %v3468, 2147483648
    %v3533 = vxor.u32 %v3469, 2147483648
    %v3534 = vxor.u32 %v3470, 2147483648
    %v3535 = vxor.u32 %v3471, 2147483648
    %v3536 = vxor.u32 %v3472, 2147483648
    %v3537 = vxor.u32 %v3473, 2147483648
    %v3538 = vxor.u32 %v3474, 2147483648
    %v3539 = vxor.u32 %v3475, 2147483648
    %v3540 = vxor.u32 %v3476, 2147483648
    %v3541 = vxor.u32 %v3477, 2147483648
    %v3542 = vmul.f32 %v3478, 1.442695
    %v3543 = vpow.pop %v3542
    %v3544 = vmul.f32 %v3479, 1.442695
    %v3545 = vpow.pop %v3544
    %v3546 = vmul.f32 %v3480, 1.442695
    %v3547 = vpow.pop %v3546
    %v3548 = vmul.f32 %v3481, 1.442695
    %v3549 = vpow.pop %v3548
    %v3550 = vmul.f32 %v3482, 1.442695
    %v3551 = vpow.pop %v3550
    %v3552 = vmul.f32 %v3483, 1.442695
    %v3553 = vpow.pop %v3552
    %v3554 = vmul.f32 %v3484, 1.442695
    %v3555 = vpow.pop %v3554
    %v3556 = vmul.f32 %v3485, 1.442695
    %v3557 = vpow.pop %v3556
    %v3558 = vmul.f32 %v3486, 1.442695
    %v3559 = vpow.pop %v3558
    %v3560 = vmul.f32 %v3487, 1.442695
    %v3561 = vpow.pop %v3560
    %v3562 = vmul.f32 %v3488, 1.442695
    %v3563 = vpow.pop %v3562
    %v3564 = vmul.f32 %v3489, 1.442695
    %v3565 = vpow.pop %v3564
    %v3566 = vmul.f32 %v3490, 1.442695
    %v3567 = vpow.pop %v3566
    %v3568 = vmul.f32 %v3491, 1.442695
    %v3569 = vpow.pop %v3568
    %v3570 = vmul.f32 %v3492, 1.442695
    %v3571 = vpow.pop %v3570
    %v3572 = vmul.f32 %v3493, 1.442695
    %v3573 = vpow.pop %v3572
    %v3574 = vmul.f32 %v3494, 1.442695
    %v3575 = vpow.pop %v3574
    %v3576 = vmul.f32 %v3495, 1.442695
    %v3577 = vpow.pop %v3576
    %v3578 = vmul.f32 %v3496, 1.442695
    %v3579 = vpow.pop %v3578
    %v3580 = vmul.f32 %v3497, 1.442695
    %v3581 = vpow.pop %v3580
    %v3582 = vmul.f32 %v3498, 1.442695
    %v3583 = vpow.pop %v3582
    %v3584 = vmul.f32 %v3499, 1.442695
    %v3585 = vpow.pop %v3584
    %v3586 = vmul.f32 %v3500, 1.442695
    %v3587 = vpow.pop %v3586
    %v3588 = vmul.f32 %v3501, 1.442695
    %v3589 = vpow.pop %v3588
    %v3590 = vmul.f32 %v3502, 1.442695
    %v3591 = vpow.pop %v3590
    %v3592 = vmul.f32 %v3503, 1.442695
    %v3593 = vpow.pop %v3592
    %v3594 = vmul.f32 %v3504, 1.442695
    %v3595 = vpow.pop %v3594
    %v3596 = vmul.f32 %v3505, 1.442695
    %v3597 = vpow.pop %v3596
    %v3598 = vmul.f32 %v3506, 1.442695
    %v3599 = vpow.pop %v3598
    %v3600 = vmul.f32 %v3507, 1.442695
    %v3601 = vpow.pop %v3600
    %v3602 = vmul.f32 %v3508, 1.442695
    %v3603 = vpow.pop %v3602
    %v3604 = vmul.f32 %v3509, 1.442695
    %v3605 = vpow.pop %v3604
    %v3606 = vmul.f32 %v3510, 1.442695
    %v3607 = vpow.pop %v3606
    %v3608 = vmul.f32 %v3511, 1.442695
    %v3609 = vpow.pop %v3608
    %v3610 = vmul.f32 %v3512, 1.442695
    %v3611 = vpow.pop %v3610
    %v3612 = vmul.f32 %v3513, 1.442695
    %v3613 = vpow.pop %v3612
    %v3614 = vmul.f32 %v3514, 1.442695
    %v3615 = vpow.pop %v3614
    %v3616 = vmul.f32 %v3515, 1.442695
    %v3617 = vpow.pop %v3616
    %v3618 = vmul.f32 %v3516, 1.442695
    %v3619 = vpow.pop %v3618
    %v3620 = vmul.f32 %v3517, 1.442695
    %v3621 = vpow.pop %v3620
    %v3622 = vmul.f32 %v3518, 1.442695
    %v3623 = vpow.pop %v3622
    %v3624 = vmul.f32 %v3519, 1.442695
    %v3625 = vpow.pop %v3624
    %v3626 = vmul.f32 %v3520, 1.442695
    %v3627 = vpow.pop %v3626
    %v3628 = vmul.f32 %v3521, 1.442695
    %v3629 = vpow.pop %v3628
    %v3630 = vmul.f32 %v3522, 1.442695
    %v3631 = vpow.pop %v3630
    %v3632 = vmul.f32 %v3523, 1.442695
    %v3633 = vpow.pop %v3632
    %v3634 = vmul.f32 %v3524, 1.442695
    %v3635 = vpow.pop %v3634
    %v3636 = vmul.f32 %v3525, 1.442695
    %v3637 = vpow.pop %v3636
    %v3638 = vmul.f32 %v3526, 1.442695
    %v3639 = vpow.pop %v3638
    %v3640 = vmul.f32 %v3527, 1.442695
    %v3641 = vpow.pop %v3640
    %v3642 = vmul.f32 %v3528, 1.442695
    %v3643 = vpow.pop %v3642
    %v3644 = vmul.f32 %v3529, 1.442695
    %v3645 = vpow.pop %v3644
    %v3646 = vmul.f32 %v3530, 1.442695
    %v3647 = vpow.pop %v3646
    %v3648 = vmul.f32 %v3531, 1.442695
    %v3649 = vpow.pop %v3648
    %v3650 = vmul.f32 %v3532, 1.442695
    %v3651 = vpow.pop %v3650
    %v3652 = vmul.f32 %v3533, 1.442695
    %v3653 = vpow.pop %v3652
    %v3654 = vmul.f32 %v3534, 1.442695
    %v3655 = vpow.pop %v3654
    %v3656 = vmul.f32 %v3535, 1.442695
    %v3657 = vpow.pop %v3656
    %v3658 = vmul.f32 %v3536, 1.442695
    %v3659 = vpow.pop %v3658
    %v3660 = vmul.f32 %v3537, 1.442695
    %v3661 = vpow.pop %v3660
    %v3662 = vmul.f32 %v3538, 1.442695
    %v3663 = vpow.pop %v3662
    %v3664 = vmul.f32 %v3539, 1.442695
    %v3665 = vpow.pop %v3664
    %v3666 = vmul.f32 %v3540, 1.442695
    %v3667 = vpow.pop %v3666
    %v3668 = vmul.f32 %v3541, 1.442695
    %v3669 = vpow.pop %v3668
    %v3670 = vadd.f32 %v3543, 1.0
    %v3671 = vadd.f32 %v3545, 1.0
    %v3672 = vadd.f32 %v3547, 1.0
    %v3673 = vadd.f32 %v3549, 1.0
    %v3674 = vadd.f32 %v3551, 1.0
    %v3675 = vadd.f32 %v3553, 1.0
    %v3676 = vadd.f32 %v3555, 1.0
    %v3677 = vadd.f32 %v3557, 1.0
    %v3678 = vadd.f32 %v3559, 1.0
    %v3679 = vadd.f32 %v3561, 1.0
    %v3680 = vadd.f32 %v3563, 1.0
    %v3681 = vadd.f32 %v3565, 1.0
    %v3682 = vadd.f32 %v3567, 1.0
    %v3683 = vadd.f32 %v3569, 1.0
    %v3684 = vadd.f32 %v3571, 1.0
    %v3685 = vadd.f32 %v3573, 1.0
    %v3686 = vadd.f32 %v3575, 1.0
    %v3687 = vadd.f32 %v3577, 1.0
    %v3688 = vadd.f32 %v3579, 1.0
    %v3689 = vadd.f32 %v3581, 1.0
    %v3690 = vadd.f32 %v3583, 1.0
    %v3691 = vadd.f32 %v3585, 1.0
    %v3692 = vadd.f32 %v3587, 1.0
    %v3693 = vadd.f32 %v3589, 1.0
    %v3694 = vadd.f32 %v3591, 1.0
    %v3695 = vadd.f32 %v3593, 1.0
    %v3696 = vadd.f32 %v3595, 1.0
    %v3697 = vadd.f32 %v3597, 1.0
    %v3698 = vadd.f32 %v3599, 1.0
    %v3699 = vadd.f32 %v3601, 1.0
    %v3700 = vadd.f32 %v3603, 1.0
    %v3701 = vadd.f32 %v3605, 1.0
    %v3702 = vadd.f32 %v3607, 1.0
    %v3703 = vadd.f32 %v3609, 1.0
    %v3704 = vadd.f32 %v3611, 1.0
    %v3705 = vadd.f32 %v3613, 1.0
    %v3706 = vadd.f32 %v3615, 1.0
    %v3707 = vadd.f32 %v3617, 1.0
    %v3708 = vadd.f32 %v3619, 1.0
    %v3709 = vadd.f32 %v3621, 1.0
    %v3710 = vadd.f32 %v3623, 1.0
    %v3711 = vadd.f32 %v3625, 1.0
    %v3712 = vadd.f32 %v3627, 1.0
    %v3713 = vadd.f32 %v3629, 1.0
    %v3714 = vadd.f32 %v3631, 1.0
    %v3715 = vadd.f32 %v3633, 1.0
    %v3716 = vadd.f32 %v3635, 1.0
    %v3717 = vadd.f32 %v3637, 1.0
    %v3718 = vadd.f32 %v3639, 1.0
    %v3719 = vadd.f32 %v3641, 1.0
    %v3720 = vadd.f32 %v3643, 1.0
    %v3721 = vadd.f32 %v3645, 1.0
    %v3722 = vadd.f32 %v3647, 1.0
    %v3723 = vadd.f32 %v3649, 1.0
    %v3724 = vadd.f32 %v3651, 1.0
    %v3725 = vadd.f32 %v3653, 1.0
    %v3726 = vadd.f32 %v3655, 1.0
    %v3727 = vadd.f32 %v3657, 1.0
    %v3728 = vadd.f32 %v3659, 1.0
    %v3729 = vadd.f32 %v3661, 1.0
    %v3730 = vadd.f32 %v3663, 1.0
    %v3731 = vadd.f32 %v3665, 1.0
    %v3732 = vadd.f32 %v3667, 1.0
    %v3733 = vadd.f32 %v3669, 1.0
    %v3734 = vrcp.pop %v3670
    %v3735 = vmul.f32 1.0, %v3734
    %v3736 = vrcp.pop %v3671
    %v3737 = vmul.f32 1.0, %v3736
    %v3738 = vrcp.pop %v3672
    %v3739 = vmul.f32 1.0, %v3738
    %v3740 = vrcp.pop %v3673
    %v3741 = vmul.f32 1.0, %v3740
    %v3742 = vrcp.pop %v3674
    %v3743 = vmul.f32 1.0, %v3742
    %v3744 = vrcp.pop %v3675
    %v3745 = vmul.f32 1.0, %v3744
    %v3746 = vrcp.pop %v3676
    %v3747 = vmul.f32 1.0, %v3746
    %v3748 = vrcp.pop %v3677
    %v3749 = vmul.f32 1.0, %v3748
    %v3750 = vrcp.pop %v3678
    %v3751 = vmul.f32 1.0, %v3750
    %v3752 = vrcp.pop %v3679
    %v3753 = vmul.f32 1.0, %v3752
    %v3754 = vrcp.pop %v3680
    %v3755 = vmul.f32 1.0, %v3754
    %v3756 = vrcp.pop %v3681
    %v3757 = vmul.f32 1.0, %v3756
    %v3758 = vrcp.pop %v3682
    %v3759 = vmul.f32 1.0, %v3758
    %v3760 = vrcp.pop %v3683
    %v3761 = vmul.f32 1.0, %v3760
    %v3762 = vrcp.pop %v3684
    %v3763 = vmul.f32 1.0, %v3762
    %v3764 = vrcp.pop %v3685
    %v3765 = vmul.f32 1.0, %v3764
    %v3766 = vrcp.pop %v3686
    %v3767 = vmul.f32 1.0, %v3766
    %v3768 = vrcp.pop %v3687
    %v3769 = vmul.f32 1.0, %v3768
    %v3770 = vrcp.pop %v3688
    %v3771 = vmul.f32 1.0, %v3770
    %v3772 = vrcp.pop %v3689
    %v3773 = vmul.f32 1.0, %v3772
    %v3774 = vrcp.pop %v3690
    %v3775 = vmul.f32 1.0, %v3774
    %v3776 = vrcp.pop %v3691
    %v3777 = vmul.f32 1.0, %v3776
    %v3778 = vrcp.pop %v3692
    %v3779 = vmul.f32 1.0, %v3778
    %v3780 = vrcp.pop %v3693
    %v3781 = vmul.f32 1.0, %v3780
    %v3782 = vrcp.pop %v3694
    %v3783 = vmul.f32 1.0, %v3782
    %v3784 = vrcp.pop %v3695
    %v3785 = vmul.f32 1.0, %v3784
    %v3786 = vrcp.pop %v3696
    %v3787 = vmul.f32 1.0, %v3786
    %v3788 = vrcp.pop %v3697
    %v3789 = vmul.f32 1.0, %v3788
    %v3790 = vrcp.pop %v3698
    %v3791 = vmul.f32 1.0, %v3790
    %v3792 = vrcp.pop %v3699
    %v3793 = vmul.f32 1.0, %v3792
    %v3794 = vrcp.pop %v3700
    %v3795 = vmul.f32 1.0, %v3794
    %v3796 = vrcp.pop %v3701
    %v3797 = vmul.f32 1.0, %v3796
    %v3798 = vrcp.pop %v3702
    %v3799 = vmul.f32 1.0, %v3798
    %v3800 = vrcp.pop %v3703
    %v3801 = vmul.f32 1.0, %v3800
    %v3802 = vrcp.pop %v3704
    %v3803 = vmul.f32 1.0, %v3802
    %v3804 = vrcp.pop %v3705
    %v3805 = vmul.f32 1.0, %v3804
    %v3806 = vrcp.pop %v3706
    %v3807 = vmul.f32 1.0, %v3806
    %v3808 = vrcp.pop %v3707
    %v3809 = vmul.f32 1.0, %v3808
    %v3810 = vrcp.pop %v3708
    %v3811 = vmul.f32 1.0, %v3810
    %v3812 = vrcp.pop %v3709
    %v3813 = vmul.f32 1.0, %v3812
    %v3814 = vrcp.pop %v3710
    %v3815 = vmul.f32 1.0, %v3814
    %v3816 = vrcp.pop %v3711
    %v3817 = vmul.f32 1.0, %v3816
    %v3818 = vrcp.pop %v3712
    %v3819 = vmul.f32 1.0, %v3818
    %v3820 = vrcp.pop %v3713
    %v3821 = vmul.f32 1.0, %v3820
    %v3822 = vrcp.pop %v3714
    %v3823 = vmul.f32 1.0, %v3822
    %v3824 = vrcp.pop %v3715
    %v3825 = vmul.f32 1.0, %v3824
    %v3826 = vrcp.pop %v3716
    %v3827 = vmul.f32 1.0, %v3826
    %v3828 = vrcp.pop %v3717
    %v3829 = vmul.f32 1.0, %v3828
    %v3830 = vrcp.pop %v3718
    %v3831 = vmul.f32 1.0, %v3830
    %v3832 = vrcp.pop %v3719
    %v3833 = vmul.f32 1.0, %v3832
    %v3834 = vrcp.pop %v3720
    %v3835 = vmul.f32 1.0, %v3834
    %v3836 = vrcp.pop %v3721
    %v3837 = vmul.f32 1.0, %v3836
    %v3838 = vrcp.pop %v3722
    %v3839 = vmul.f32 1.0, %v3838
    %v3840 = vrcp.pop %v3723
    %v3841 = vmul.f32 1.0, %v3840
    %v3842 = vrcp.pop %v3724
    %v3843 = vmul.f32 1.0, %v3842
    %v3844 = vrcp.pop %v3725
    %v3845 = vmul.f32 1.0, %v3844
    %v3846 = vrcp.pop %v3726
    %v3847 = vmul.f32 1.0, %v3846
    %v3848 = vrcp.pop %v3727
    %v3849 = vmul.f32 1.0, %v3848
    %v3850 = vrcp.pop %v3728
    %v3851 = vmul.f32 1.0, %v3850
    %v3852 = vrcp.pop %v3729
    %v3853 = vmul.f32 1.0, %v3852
    %v3854 = vrcp.pop %v3730
    %v3855 = vmul.f32 1.0, %v3854
    %v3856 = vrcp.pop %v3731
    %v3857 = vmul.f32 1.0, %v3856
    %v3858 = vrcp.pop %v3732
    %v3859 = vmul.f32 1.0, %v3858
    %v3860 = vrcp.pop %v3733
    %v3861 = vmul.f32 1.0, %v3860
    %3862 = vst [vmem:[#allocation10] sm:$0xff] %v3735
    %3863 = vst [vmem:[#allocation10 + $0x8] sm:$0xff] %v3737
    %3864 = vst [vmem:[#allocation10 + $0x10] sm:$0xff] %v3739
    %3865 = vst [vmem:[#allocation10 + $0x18] sm:$0xff] %v3741
    %3866 = vst [vmem:[#allocation10 + $0x20] sm:$0xff] %v3743
    %3867 = vst [vmem:[#allocation10 + $0x28] sm:$0xff] %v3745
    %3868 = vst [vmem:[#allocation10 + $0x30] sm:$0xff] %v3747
    %3869 = vst [vmem:[#allocation10 + $0x38] sm:$0xff] %v3749
    %3870 = vst [vmem:[#allocation10 + $0x40] sm:$0xff] %v3751
    %3871 = vst [vmem:[#allocation10 + $0x48] sm:$0xff] %v3753
    %3872 = vst [vmem:[#allocation10 + $0x50] sm:$0xff] %v3755
    %3873 = vst [vmem:[#allocation10 + $0x58] sm:$0xff] %v3757
    %3874 = vst [vmem:[#allocation10 + $0x60] sm:$0xff] %v3759
    %3875 = vst [vmem:[#allocation10 + $0x68] sm:$0xff] %v3761
    %3876 = vst [vmem:[#allocation10 + $0x70] sm:$0xff] %v3763
    %3877 = vst [vmem:[#allocation10 + $0x78] sm:$0xff] %v3765
    %3878 = vst [vmem:[#allocation10 + $0x80] sm:$0xff] %v3767
    %3879 = vst [vmem:[#allocation10 + $0x88] sm:$0xff] %v3769
    %3880 = vst [vmem:[#allocation10 + $0x90] sm:$0xff] %v3771
    %3881 = vst [vmem:[#allocation10 + $0x98] sm:$0xff] %v3773
    %3882 = vst [vmem:[#allocation10 + $0xa0] sm:$0xff] %v3775
    %3883 = vst [vmem:[#allocation10 + $0xa8] sm:$0xff] %v3777
    %3884 = vst [vmem:[#allocation10 + $0xb0] sm:$0xff] %v3779
    %3885 = vst [vmem:[#allocation10 + $0xb8] sm:$0xff] %v3781
    %3886 = vst [vmem:[#allocation10 + $0xc0] sm:$0xff] %v3783
    %3887 = vst [vmem:[#allocation10 + $0xc8] sm:$0xff] %v3785
    %3888 = vst [vmem:[#allocation10 + $0xd0] sm:$0xff] %v3787
    %3889 = vst [vmem:[#allocation10 + $0xd8] sm:$0xff] %v3789
    %3890 = vst [vmem:[#allocation10 + $0xe0] sm:$0xff] %v3791
    %3891 = vst [vmem:[#allocation10 + $0xe8] sm:$0xff] %v3793
    %3892 = vst [vmem:[#allocation10 + $0xf0] sm:$0xff] %v3795
    %3893 = vst [vmem:[#allocation10 + $0xf8] sm:$0xff] %v3797
    %3894 = vst [vmem:[#allocation10 + $0x100] sm:$0xff] %v3799
    %3895 = vst [vmem:[#allocation10 + $0x108] sm:$0xff] %v3801
    %3896 = vst [vmem:[#allocation10 + $0x110] sm:$0xff] %v3803
    %3897 = vst [vmem:[#allocation10 + $0x118] sm:$0xff] %v3805
    %3898 = vst [vmem:[#allocation10 + $0x120] sm:$0xff] %v3807
    %3899 = vst [vmem:[#allocation10 + $0x128] sm:$0xff] %v3809
    %3900 = vst [vmem:[#allocation10 + $0x130] sm:$0xff] %v3811
    %3901 = vst [vmem:[#allocation10 + $0x138] sm:$0xff] %v3813
    %3902 = vst [vmem:[#allocation10 + $0x140] sm:$0xff] %v3815
    %3903 = vst [vmem:[#allocation10 + $0x148] sm:$0xff] %v3817
    %3904 = vst [vmem:[#allocation10 + $0x150] sm:$0xff] %v3819
    %3905 = vst [vmem:[#allocation10 + $0x158] sm:$0xff] %v3821
    %3906 = vst [vmem:[#allocation10 + $0x160] sm:$0xff] %v3823
    %3907 = vst [vmem:[#allocation10 + $0x168] sm:$0xff] %v3825
    %3908 = vst [vmem:[#allocation10 + $0x170] sm:$0xff] %v3827
    %3909 = vst [vmem:[#allocation10 + $0x178] sm:$0xff] %v3829
    %3910 = vst [vmem:[#allocation10 + $0x180] sm:$0xff] %v3831
    %3911 = vst [vmem:[#allocation10 + $0x188] sm:$0xff] %v3833
    %3912 = vst [vmem:[#allocation10 + $0x190] sm:$0xff] %v3835
    %3913 = vst [vmem:[#allocation10 + $0x198] sm:$0xff] %v3837
    %3914 = vst [vmem:[#allocation10 + $0x1a0] sm:$0xff] %v3839
    %3915 = vst [vmem:[#allocation10 + $0x1a8] sm:$0xff] %v3841
    %3916 = vst [vmem:[#allocation10 + $0x1b0] sm:$0xff] %v3843
    %3917 = vst [vmem:[#allocation10 + $0x1b8] sm:$0xff] %v3845
    %3918 = vst [vmem:[#allocation10 + $0x1c0] sm:$0xff] %v3847
    %3919 = vst [vmem:[#allocation10 + $0x1c8] sm:$0xff] %v3849
    %3920 = vst [vmem:[#allocation10 + $0x1d0] sm:$0xff] %v3851
    %3921 = vst [vmem:[#allocation10 + $0x1d8] sm:$0xff] %v3853
    %3922 = vst [vmem:[#allocation10 + $0x1e0] sm:$0xff] %v3855
    %3923 = vst [vmem:[#allocation10 + $0x1e8] sm:$0xff] %v3857
    %3924 = vst [vmem:[#allocation10 + $0x1f0] sm:$0xff] %v3859
    %3925 = vst [vmem:[#allocation10 + $0x1f8] sm:$0xff] %v3861
    // Predicated region
    $region46: #{tpu_custom_call.1} parent=1 // pred_check
      _
    $region47: #{tpu_custom_call.1} parent=1 // pred_check_branch
      %3927 = sbr.rel (0) target = $region49
    $region48: #{tpu_custom_call.1} parent=1 // pred_region
      %s3929 = ssub.s32 8192, 8192
      %3930 = vsyncadd [#allocation4], %s3929
      %s3931 = sshll.u32 [#allocation10], 4
      %s3932 = int_to_ptr.vmem [resolvable:$true] %s3931
      %3937 = dma.vmem_to_hbm [thread:$0]  %s3932, 8192, %s7, [#allocation4], 256, 256, 16
    $region49: #{tpu_custom_call.1} parent=1 // pred_fallthru
      _
    // Predicated region
    $region50: #{tpu_custom_call.1} parent=1 // pred_check
      _
    $region51: #{tpu_custom_call.1} parent=1 // pred_check_branch
      %3939 = sbr.rel (0) target = $region53
    $region52: #{tpu_custom_call.1} parent=1 // pred_region
      %3940 = dma.done [#allocation4], 8192
    $region53: #{tpu_custom_call.1} parent=1 // pred_fallthru
      _
    %3941 = vsyncpa [#allocation3], 1
    %3942 = vsyncpa [#allocation6], 1
    %3943 = vsyncpa [#allocation9], 1
    %3944 = vsyncpa [#allocation4], 1

</llo_original>
